<compile_context>
chip_gen: v7x
topology: tpu7x:2x2x1
jax: 0.10.0
libtpu: 0.0.40
codegen_flags: <defaults>
</compile_context>

<pallas_src>
import functools
import math

import numpy as np
import jax
import jax.numpy as jnp
from jax.experimental import pallas as pl
from jax.experimental.pallas import tpu as pltpu

EPS = 1e-5


def to_order(d):
    return 2 * d + 1


def _round_up(x, m):
    return ((x + m - 1) // m) * m


def _gelu(x):
    # TODO(synk): PyTorch nn.GELU defaults to exact erf; tanh approximation used
    # here (matches the included reference).
    return jax.nn.gelu(x, approximate=True)


def _layernorm_axis(x, axis):
    mu = jnp.mean(x, axis=axis, keepdims=True)
    xc = x - mu
    var = jnp.mean(xc * xc, axis=axis, keepdims=True)
    return xc * jax.lax.rsqrt(var + EPS)


# ----------------------------------------------------------------------------
# Fused Pallas kernel
# ----------------------------------------------------------------------------
def fused_conv_kernel(*refs, fiber_in, fiber_out, mid, te, mi_pads, w3offs):
    n_in = len(fiber_in)
    n_pairs = len(fiber_in) * len(fiber_out)

    idx = 0
    edges_ref = refs[idx]; idx += 1
    feats_refs = refs[idx:idx + n_in]; idx += n_in
    basis_refs = refs[idx:idx + n_pairs]; idx += n_pairs
    wrow_ref = refs[idx]; idx += 1
    sel_ref = refs[idx]; idx += 1
    (w1t_ref, b1_ref, g1_ref, be1_ref,
     w2t_ref, b2_ref, g2_ref, be2_ref, w3t_ref) = refs[idx:idx + 9]
    out_ref = refs[idx + 9]

    # ---- radial MLP layer 1: all pairs at once (dense stacking, no zeros) ----
    e = edges_ref[...]                                                       # (edge_dim, TE)
    h1 = jnp.dot(w1t_ref[...], e, preferred_element_type=jnp.float32)       # (PW, TE)
    h1 = h1.reshape(n_pairs, mid, te) + b1_ref[...]
    h1 = _layernorm_axis(h1, axis=1) * g1_ref[...] + be1_ref[...]
    # NOTE: zero-padded edge columns hit LayerNorm with var~0 (rsqrt(EPS) amplification);
    # benign because padded feats/basis/mask kill their contribution.
    h1 = _gelu(h1)                                                           # (n_pairs, mid, TE)

    pair = 0
    out_blocks = []
    for do, mo in fiber_out:
        dout = to_order(do)
        acc = [None] * mo
        for ii, (di, mi) in enumerate(fiber_in):
            din = to_order(di)
            nf = to_order(min(di, do))
            mip = mi_pads[di]
            p = pair
            pair += 1

            # ---- radial MLP layers 2/3: per pair (no block-diagonal zeros),
            #      rw produced where consumed, never (SUM_OUT, TE) live ----
            h2 = jnp.dot(w2t_ref[p], h1[p],
                         preferred_element_type=jnp.float32) + b2_ref[p]     # (mid, TE)
            h2 = _gelu(_layernorm_axis(h2, axis=0) * g2_ref[p] + be2_ref[p])
            ro = w3offs[(di, do)]
            outp = mo * nf * mip
            rw = jnp.dot(w3t_ref[ro:ro + outp, :], h2,
                         preferred_element_type=jnp.float32)                 # (outp, TE)

            # ---- contraction 1: tmp[t*nf+f, m, e] = sum_d basis[d,t*nf+f,e]*feats[d,m,e]
            #      multiplicity m on 8-aligned sublanes -> full-vreg multiplies ----
            fv = feats_refs[ii][...]                                         # (din, mip, TE)
            bv = basis_refs[p][...]                                          # (din, dout*nf, TE)
            tmp = None
            for d in range(din):
                contrib = bv[d][:, None, :] * fv[d][None, :, :]              # (dout*nf, mip, TE)
                tmp = contrib if tmp is None else tmp + contrib
            tmp = tmp.reshape(dout, nf * mip, te)                            # (f, m) -> sublanes

            # ---- contraction 2: out[o,t,e] = sum_{f,m} rw[o,f,m,e] * tmp[t,f,m,e]
            #      reduction index (f, m) on sublanes -> full-vreg multiply + XLU reduce ----
            cpo = nf * mip
            for o in range(mo):
                rw_o = rw[o * cpo:(o + 1) * cpo, :]                          # (nf*mip, TE)
                c = jnp.sum(tmp * rw_o[None, :, :], axis=1)                  # (dout, TE)
                acc[o] = c if acc[o] is None else acc[o] + c
        out_blocks.extend(acc)

    out_cat = (jnp.concatenate(out_blocks, axis=0)
               if len(out_blocks) > 1 else out_blocks[0])                    # (c_out, TE)

    # ---- fused masked-mean pooling: per-edge weights = mask/count precomputed,
    #      constant block selector hoisted out of the body, one MXU matmul ----
    masked = out_cat * wrow_ref[...]                                         # (c_out, TE)
    out_ref[...] = jnp.dot(masked, sel_ref[...],
                           preferred_element_type=jnp.float32)               # single store


# ----------------------------------------------------------------------------
# Parameter packing
# ----------------------------------------------------------------------------
def pack_radial_params(params, fiber_in, fiber_out, mi_pads):
    """Pair order (degree_out major, degree_in minor) matches the kernel loops."""
    w1t, b1, g1, be1 = [], [], [], []
    w2t, b2, g2, be2 = [], [], [], []
    w3t = []
    w3offs, off = {}, 0
    for do, mo in fiber_out:
        for di, mi in fiber_in:
            p = params[f'({di},{do})']
            nf = to_order(min(di, do))
            mip = mi_pads[di]
            mid = p['w1'].shape[1]
            w1t.append(p['w1'].T)                                  # (mid, edge_dim)
            b1.append(p['b1'].reshape(mid, 1))
            g1.append(p['g1'].reshape(mid, 1))
            be1.append(p['be1'].reshape(mid, 1))
            w2t.append(p['w2'].T)                                  # (mid, mid)
            b2.append(p['b2'].reshape(mid, 1))
            g2.append(p['g2'].reshape(mid, 1))
            be2.append(p['be2'].reshape(mid, 1))
            # permute columns (o, m, f) -> (o, f, m) and pad m to mip so every
            # in-kernel rw slice is 8-row aligned and m lands on sublanes.
            w3 = p['w3'].reshape(mid, mo, mi, nf)
            w3 = jnp.transpose(w3, (0, 1, 3, 2))                   # (mid, mo, nf, mi)
            if mip > mi:
                w3 = jnp.pad(w3, ((0, 0), (0, 0), (0, 0), (0, mip - mi)))
            w3t.append(w3.reshape(mid, mo * nf * mip).T)           # (outp, mid)
            w3offs[(di, do)] = off
            off += mo * nf * mip
    packed = dict(
        w1t=jnp.concatenate(w1t, axis=0),                          # (PW, edge_dim)
        b1=jnp.stack(b1), g1=jnp.stack(g1), be1=jnp.stack(be1),    # (n_pairs, mid, 1)
        w2t=jnp.stack(w2t),                                        # (n_pairs, mid, mid)
        b2=jnp.stack(b2), g2=jnp.stack(g2), be2=jnp.stack(be2),
        w3t=jnp.concatenate(w3t, axis=0),                          # (SUM_OUT_pad, mid)
    )
    return packed, w3offs, off


# ----------------------------------------------------------------------------
# Forward pass wrapper
# ----------------------------------------------------------------------------
def batched_index_select(x, idx):
    # x: (B, N, ...), idx: (B, N, K) -> (B, N, K, ...)
    return jax.vmap(lambda xb, ib: xb[ib])(x, idx)


def _vmem_budget_and_cap():
    phys = 128 * 1024 * 1024
    try:
        kind = jax.devices()[0].device_kind.lower()
        if 'v7' in kind:
            phys = 64 * 1024 * 1024
    except Exception:
        pass
    return int(phys * 0.40), int(phys * 0.75)


def conv_se3_forward_pallas(features, edge_feats, nbr_idx, nbr_mask, basis, params,
                            fiber_in, fiber_out):
    fiber_in = tuple(fiber_in)
    fiber_out = tuple(fiber_out)
    B, N, knbr = nbr_idx.shape
    R = B * N
    E = R * knbr
    edge_dim = edge_feats.shape[-1]
    mid = params[f'({fiber_in[0][0]},{fiber_out[0][0]})']['w1'].shape[1]
    n_pairs = len(fiber_in) * len(fiber_out)
    mi_pads = {di: _round_up(mi, 8) for di, mi in fiber_in}
    c_out = sum(mo * to_order(do) for do, mo in fiber_out)

    # ---- per-tile VMEM footprint estimate (f32 rows of width TE) ----
    in_rows = edge_dim + 1
    for di, _ in fiber_in:
        in_rows += to_order(di) * mi_pads[di]
    for do, mo in fiber_out:
        for di, mi in fiber_in:
            in_rows += to_order(di) * to_order(min(di, do)) * to_order(do)
    peak_pair = 0
    for do, mo in fiber_out:
        for di, mi in fiber_in:
            nf = to_order(min(di, do))
            peak_pair = max(peak_pair,
                            (2 * to_order(do) + mo) * nf * mi_pads[di] + 2 * mid)
    live_rows = n_pairs * mid + 2 * c_out + peak_pair
    per_col_bytes = 4 * (2 * in_rows + live_rows)   # double-buffered inputs + live values

    budget, cap = _vmem_budget_and_cap()

    # ---- tile sizing: tr rows (tr*knbr edges) per grid step; tr is a multiple of
    # 128 (lane-dense output stores) or the whole row count.  Keep >=2 grid steps
    # when possible so both v7x TensorCores get work. ----
    if R <= 128:
        tr = R
    else:
        tr = 128   # minimum for lane-dense out stores; budget may only grow it.
        while (2 * tr * knbr * per_col_bytes <= budget
               and math.ceil(R / (2 * tr)) >= 2):
            tr *= 2
    r_pad = _round_up(R, tr)
    e_pad = r_pad * knbr
    te = tr * knbr
    pad_e = e_pad - E

    vmem_limit = int(min(cap, max(32 * 1024 * 1024, 2 * te * per_col_bytes)))

    # ---- per-edge arrays, laid out (channels, E): E on the 128-lane axis.
    # Passed per degree / per pair (no concatenation pass over HBM). ----
    edges_t = jnp.transpose(edge_feats.reshape(E, edge_dim), (1, 0))
    edges_t = jnp.pad(edges_t, ((0, 0), (0, pad_e)))

    feats_list = []
    for di, mi in fiber_in:
        din = to_order(di)
        mip = mi_pads[di]
        x = batched_index_select(features[str(di)], nbr_idx)        # (B, N, K, mi, din)
        x = jnp.transpose(x.reshape(E, mi, din), (2, 1, 0))         # (din, mi, E)
        x = jnp.pad(x, ((0, 0), (0, mip - mi), (0, pad_e)))
        feats_list.append(x)

    basis_list = []
    for do, mo in fiber_out:
        dout = to_order(do)
        for di, mi in fiber_in:
            din = to_order(di)
            nf = to_order(min(di, do))
            b = basis[f'{di},{do}'].reshape(E, din, nf, dout)
            b = jnp.transpose(b, (1, 3, 2, 0)).reshape(din, dout * nf, E)
            b = jnp.pad(b, ((0, 0), (0, 0), (0, pad_e)))
            basis_list.append(b)

    # per-edge pooling weight = mask / clamp(valid-neighbour count, 1); lane-major.
    maskf = nbr_mask.astype(jnp.float32).reshape(R, knbr)
    cnt = jnp.maximum(jnp.sum(maskf, axis=1, keepdims=True), 1.0)
    wrow = jnp.pad((maskf / cnt).reshape(1, E), ((0, 0), (0, pad_e)))

    # constant 0/1 block-structure selector for the pooling matmul (hoisted).
    sel = jnp.asarray(
        (np.arange(te)[:, None] // knbr == np.arange(tr)[None, :]).astype(np.float32))

    packed, w3offs, sum_out = pack_radial_params(params, fiber_in, fiber_out, mi_pads)
    pw = n_pairs * mid

    kernel = functools.partial(
        fused_conv_kernel,
        fiber_in=fiber_in, fiber_out=fiber_out, mid=mid, te=te,
        mi_pads=mi_pads, w3offs=w3offs)

    in_specs = [pl.BlockSpec((edge_dim, te), lambda i: (0, i))]
    for di, mi in fiber_in:
        in_specs.append(pl.BlockSpec((to_order(di), mi_pads[di], te),
                                     lambda i: (0, 0, i)))
    for do, mo in fiber_out:
        for di, mi in fiber_in:
            in_specs.append(pl.BlockSpec(
                (to_order(di), to_order(do) * to_order(min(di, do)), te),
                lambda i: (0, 0, i)))
    in_specs.append(pl.BlockSpec((1, te), lambda i: (0, i)))        # mask/count weights
    in_specs.append(pl.BlockSpec((te, tr), lambda i: (0, 0)))       # pooling selector
    in_specs += [
        pl.BlockSpec((pw, edge_dim), lambda i: (0, 0)),             # w1t
        pl.BlockSpec((n_pairs, mid, 1), lambda i: (0, 0, 0)),       # b1
        pl.BlockSpec((n_pairs, mid, 1), lambda i: (0, 0, 0)),       # g1
        pl.BlockSpec((n_pairs, mid, 1), lambda i: (0, 0, 0)),       # be1
        pl.BlockSpec((n_pairs, mid, mid), lambda i: (0, 0, 0)),     # w2t
        pl.BlockSpec((n_pairs, mid, 1), lambda i: (0, 0, 0)),       # b2
        pl.BlockSpec((n_pairs, mid, 1), lambda i: (0, 0, 0)),       # g2
        pl.BlockSpec((n_pairs, mid, 1), lambda i: (0, 0, 0)),       # be2
        pl.BlockSpec((sum_out, mid), lambda i: (0, 0)),             # w3t
    ]

    out = pl.pallas_call(
        kernel,
        out_shape=jax.ShapeDtypeStruct((c_out, r_pad), jnp.float32),
        grid=(r_pad // tr,),
        in_specs=in_specs,
        out_specs=pl.BlockSpec((c_out, tr), lambda i: (0, i)),
        compiler_params=pltpu.CompilerParams(
            dimension_semantics=("parallel",),
            vmem_limit_bytes=vmem_limit),
    )(edges_t, *feats_list, *basis_list, wrow, sel,
      packed['w1t'], packed['b1'], packed['g1'], packed['be1'],
      packed['w2t'], packed['b2'], packed['g2'], packed['be2'],
      packed['w3t'])

    pooled = jnp.transpose(out[:, :R], (1, 0))                       # (R, c_out)
    outputs, col = {}, 0
    for do, mo in fiber_out:
        dout = to_order(do)
        w = mo * dout
        outputs[str(do)] = pooled[:, col:col + w].reshape(B, N, mo, dout)
        col += w
    return outputs


# ----------------------------------------------------------------------------
# Plain-JAX reference (mirrors the PyTorch module, for correctness check)
# ----------------------------------------------------------------------------
def _layernorm(x, g, b):
    mu = jnp.mean(x, axis=-1, keepdims=True)
    var = jnp.mean((x - mu) ** 2, axis=-1, keepdims=True)
    return (x - mu) * jax.lax.rsqrt(var + EPS) * g + b


def radial_ref(edges2d, p):
    h = edges2d @ p['w1'] + p['b1']
    h = _gelu(_layernorm(h, p['g1'], p['be1']))
    h = h @ p['w2'] + p['b2']
    h = _gelu(_layernorm(h, p['g2'], p['be2']))
    return h @ p['w3']


def pairwise_ref(edges2d, feats2d, basis2d, p, mi, mo, din, dout, nf):
    E = edges2d.shape[0]
    rw = radial_ref(edges2d, p).reshape(E, mo, mi * nf)
    f = feats2d.reshape(E, mi, din)
    b = basis2d.reshape(E, din, nf * dout)
    tmp = jnp.einsum('emd,edk->emk', f, b).reshape(E, mi * nf, dout)
    return jnp.einsum('eoc,ecd->eod', rw, tmp).reshape(E, mo * dout)


def conv_se3_forward_reference(features, edge_feats, nbr_idx, nbr_mask, basis, params,
                               fiber_in, fiber_out):
    B, N, knbr = nbr_idx.shape
    E = B * N * knbr
    selected = {str(d): batched_index_select(features[str(d)], nbr_idx) for d, _ in fiber_in}
    edges2d = edge_feats.reshape(E, -1)
    mask3d = nbr_mask.astype(jnp.float32).reshape(B * N, knbr, 1)
    outputs = {}
    for do, mo in fiber_out:
        dout = to_order(do)
        acc = jnp.zeros((E, mo * dout), jnp.float32)
        for di, mi in fiber_in:
            din = to_order(di)
            nf = to_order(min(di, do))
            feats2d = selected[str(di)].reshape(E, mi * din)
            basis2d = basis[f'{di},{do}'].reshape(E, din * nf * dout)
            acc = acc + pairwise_ref(edges2d, feats2d, basis2d, params[f'({di},{do})'],
                                     mi, mo, din, dout, nf)
        x = acc.reshape(B * N, knbr, mo * dout)
        pooled = jnp.sum(x * mask3d, axis=1) / jnp.maximum(jnp.sum(mask3d, axis=1), 1.0)
        outputs[str(do)] = pooled.reshape(B, N, mo, dout)
    return outputs


# ----------------------------------------------------------------------------
if __name__ == "__main__":
    B, N, KNBR, EDGE_DIM = 2, 16, 8, 8
    RADIAL_MULT = 2
    MID = int(EDGE_DIM * RADIAL_MULT)
    fiber_in = ((0, 4), (1, 4))     # (degree, multiplicity)
    fiber_out = ((0, 4), (1, 4))

    keys = iter(jax.random.split(jax.random.PRNGKey(0), 64))

    features = {str(d): jax.random.normal(next(keys), (B, N, m, to_order(d)), jnp.float32)
                for d, m in fiber_in}
    nbr_idx = jax.random.randint(next(keys), (B, N, KNBR), 0, N)
    nbr_mask = jax.random.uniform(next(keys), (B, N, KNBR)) > 0.2
    edge_feats = jax.random.normal(next(keys), (B, N, KNBR, EDGE_DIM), jnp.float32)

    basis = {}
    for di, _ in fiber_in:
        for do, _ in fiber_out:
            nf = to_order(min(di, do))
            basis[f'{di},{do}'] = jax.random.normal(
                next(keys), (B, N, KNBR, to_order(di), nf * to_order(do)), jnp.float32)

    params = {}
    for di, mi in fiber_in:
        for do, mo in fiber_out:
            nf = to_order(min(di, do))
            out_dim = nf * mi * mo
            k1, k2, k3, k4, k5 = jax.random.split(next(keys), 5)
            params[f'({di},{do})'] = dict(
                w1=jax.random.normal(k1, (EDGE_DIM, MID), jnp.float32) / np.sqrt(EDGE_DIM),
                b1=0.1 * jax.random.normal(k2, (1, MID), jnp.float32),
                g1=jnp.ones((1, MID), jnp.float32),
                be1=jnp.zeros((1, MID), jnp.float32),
                w2=jax.random.normal(k3, (MID, MID), jnp.float32) / np.sqrt(MID),
                b2=0.1 * jax.random.normal(k4, (1, MID), jnp.float32),
                g2=jnp.ones((1, MID), jnp.float32),
                be2=jnp.zeros((1, MID), jnp.float32),
                w3=jax.random.normal(k5, (MID, out_dim), jnp.float32) / np.sqrt(MID),
            )

    out = conv_se3_forward_pallas(features, edge_feats, nbr_idx, nbr_mask, basis, params,
                                  fiber_in, fiber_out)
    jax.block_until_ready(out)

    ref = conv_se3_forward_reference(features, edge_feats, nbr_idx, nbr_mask, basis, params,
                                     fiber_in, fiber_out)
    for k in out:
        np.testing.assert_allclose(np.asarray(out[k]), np.asarray(ref[k]),
                                   rtol=3e-3, atol=3e-3)
    print("KERNEL_OK")
</pallas_src>

<mosaic_0001>
module attributes {stable_mosaic.version = 11 : i64} {
  func.func @fused_conv_kernel(%arg0: i32, %arg1: memref<8x256xf32, #tpu.memory_space<vmem>>, %arg2: memref<1x8x256xf32, #tpu.memory_space<vmem>>, %arg3: memref<3x8x256xf32, #tpu.memory_space<vmem>>, %arg4: memref<1x1x256xf32, #tpu.memory_space<vmem>>, %arg5: memref<3x1x256xf32, #tpu.memory_space<vmem>>, %arg6: memref<1x3x256xf32, #tpu.memory_space<vmem>>, %arg7: memref<3x9x256xf32, #tpu.memory_space<vmem>>, %arg8: memref<1x256xf32, #tpu.memory_space<vmem>>, %arg9: memref<256x32xf32, #tpu.memory_space<vmem>>, %arg10: memref<64x8xf32, #tpu.memory_space<vmem>>, %arg11: memref<4x16x1xf32, #tpu.memory_space<vmem>>, %arg12: memref<4x16x1xf32, #tpu.memory_space<vmem>>, %arg13: memref<4x16x1xf32, #tpu.memory_space<vmem>>, %arg14: memref<4x16x16xf32, #tpu.memory_space<vmem>>, %arg15: memref<4x16x1xf32, #tpu.memory_space<vmem>>, %arg16: memref<4x16x1xf32, #tpu.memory_space<vmem>>, %arg17: memref<4x16x1xf32, #tpu.memory_space<vmem>>, %arg18: memref<192x16xf32, #tpu.memory_space<vmem>>, %arg19: memref<16x32xf32, #tpu.memory_space<vmem>>) attributes {dimension_semantics = [#tpu.dimension_semantics<parallel>], iteration_bounds = array<i64: 1>, scalar_prefetch = 0 : i64, scratch_operands = 0 : i64, tpu.core_type = #tpu.core_type<tc>, window_params = [{transform_indices = @transform_0, window_bounds = array<i64: 8, 256>}, {transform_indices = @transform_1, window_bounds = array<i64: 1, 8, 256>}, {transform_indices = @transform_2, window_bounds = array<i64: 3, 8, 256>}, {transform_indices = @transform_3, window_bounds = array<i64: 1, 1, 256>}, {transform_indices = @transform_4, window_bounds = array<i64: 3, 1, 256>}, {transform_indices = @transform_5, window_bounds = array<i64: 1, 3, 256>}, {transform_indices = @transform_6, window_bounds = array<i64: 3, 9, 256>}, {transform_indices = @transform_7, window_bounds = array<i64: 1, 256>}, {pipeline_mode = #tpu.pipeline_mode<synchronous>, transform_indices = @transform_8, window_bounds = array<i64: 256, 32>}, {pipeline_mode = #tpu.pipeline_mode<synchronous>, transform_indices = @transform_9, window_bounds = array<i64: 64, 8>}, {pipeline_mode = #tpu.pipeline_mode<synchronous>, transform_indices = @transform_10, window_bounds = array<i64: 4, 16, 1>}, {pipeline_mode = #tpu.pipeline_mode<synchronous>, transform_indices = @transform_11, window_bounds = array<i64: 4, 16, 1>}, {pipeline_mode = #tpu.pipeline_mode<synchronous>, transform_indices = @transform_12, window_bounds = array<i64: 4, 16, 1>}, {pipeline_mode = #tpu.pipeline_mode<synchronous>, transform_indices = @transform_13, window_bounds = array<i64: 4, 16, 16>}, {pipeline_mode = #tpu.pipeline_mode<synchronous>, transform_indices = @transform_14, window_bounds = array<i64: 4, 16, 1>}, {pipeline_mode = #tpu.pipeline_mode<synchronous>, transform_indices = @transform_15, window_bounds = array<i64: 4, 16, 1>}, {pipeline_mode = #tpu.pipeline_mode<synchronous>, transform_indices = @transform_16, window_bounds = array<i64: 4, 16, 1>}, {pipeline_mode = #tpu.pipeline_mode<synchronous>, transform_indices = @transform_17, window_bounds = array<i64: 192, 16>}, {transform_indices = @transform_18, window_bounds = array<i64: 16, 32>}]} {
    %c0 = arith.constant 0 : index
    %c0_0 = arith.constant 0 : index
    %0 = vector.load %arg1[%c0, %c0_0] : memref<8x256xf32, #tpu.memory_space<vmem>>, vector<8x256xf32>
    %c0_1 = arith.constant 0 : index
    %c0_2 = arith.constant 0 : index
    %1 = vector.load %arg10[%c0_1, %c0_2] : memref<64x8xf32, #tpu.memory_space<vmem>>, vector<64x8xf32>
    %cst = arith.constant dense<0.000000e+00> : vector<64x256xf32>
    %2 = tpu.matmul %1, %0, %cst {dimension_numbers = #tpu.dot_dimension_numbers<[1], [0], [0], [1], [0, 0, 1, 1], [], []>} : vector<64x8xf32>, vector<8x256xf32>, vector<64x256xf32> -> vector<64x256xf32>
    %3 = vector.shape_cast %2 : vector<64x256xf32> to vector<4x16x256xf32>
    %c0_3 = arith.constant 0 : index
    %c0_4 = arith.constant 0 : index
    %c0_5 = arith.constant 0 : index
    %4 = vector.load %arg11[%c0_3, %c0_4, %c0_5] : memref<4x16x1xf32, #tpu.memory_space<vmem>>, vector<4x16x1xf32>
    %5 = vector.broadcast %4 : vector<4x16x1xf32> to vector<4x16x256xf32>
    %6 = arith.addf %3, %5 : vector<4x16x256xf32>
    %cst_6 = arith.constant dense<0.000000e+00> : vector<4x256xf32>
    %7 = vector.multi_reduction <add>, %6, %cst_6 [1] : vector<4x16x256xf32> to vector<4x256xf32>
    %8 = vector.shape_cast %7 : vector<4x256xf32> to vector<4x1x256xf32>
    %cst_7 = arith.constant 1.600000e+01 : f32
    %9 = vector.broadcast %cst_7 : f32 to vector<4x1x256xf32>
    %10 = arith.divf %8, %9 : vector<4x1x256xf32>
    %11 = vector.broadcast %10 : vector<4x1x256xf32> to vector<4x16x256xf32>
    %12 = arith.subf %6, %11 : vector<4x16x256xf32>
    %13 = arith.mulf %12, %12 : vector<4x16x256xf32>
    %cst_8 = arith.constant dense<0.000000e+00> : vector<4x256xf32>
    %14 = vector.multi_reduction <add>, %13, %cst_8 [1] : vector<4x16x256xf32> to vector<4x256xf32>
    %15 = vector.shape_cast %14 : vector<4x256xf32> to vector<4x1x256xf32>
    %cst_9 = arith.constant 1.600000e+01 : f32
    %16 = vector.broadcast %cst_9 : f32 to vector<4x1x256xf32>
    %17 = arith.divf %15, %16 : vector<4x1x256xf32>
    %cst_10 = arith.constant 9.99999974E-6 : f32
    %18 = vector.broadcast %cst_10 : f32 to vector<4x1x256xf32>
    %19 = arith.addf %17, %18 : vector<4x1x256xf32>
    %20 = math.rsqrt %19 : vector<4x1x256xf32>
    %21 = vector.broadcast %20 : vector<4x1x256xf32> to vector<4x16x256xf32>
    %22 = arith.mulf %12, %21 : vector<4x16x256xf32>
    %c0_11 = arith.constant 0 : index
    %c0_12 = arith.constant 0 : index
    %c0_13 = arith.constant 0 : index
    %23 = vector.load %arg12[%c0_11, %c0_12, %c0_13] : memref<4x16x1xf32, #tpu.memory_space<vmem>>, vector<4x16x1xf32>
    %24 = vector.broadcast %23 : vector<4x16x1xf32> to vector<4x16x256xf32>
    %25 = arith.mulf %22, %24 : vector<4x16x256xf32>
    %c0_14 = arith.constant 0 : index
    %c0_15 = arith.constant 0 : index
    %c0_16 = arith.constant 0 : index
    %26 = vector.load %arg13[%c0_14, %c0_15, %c0_16] : memref<4x16x1xf32, #tpu.memory_space<vmem>>, vector<4x16x1xf32>
    %27 = vector.broadcast %26 : vector<4x16x1xf32> to vector<4x16x256xf32>
    %28 = arith.addf %25, %27 : vector<4x16x256xf32>
    %29 = arith.mulf %28, %28 : vector<4x16x256xf32>
    %30 = arith.mulf %28, %29 : vector<4x16x256xf32>
    %cst_17 = arith.constant 4.471500e-02 : f32
    %31 = vector.broadcast %cst_17 : f32 to vector<4x16x256xf32>
    %32 = arith.mulf %31, %30 : vector<4x16x256xf32>
    %33 = arith.addf %28, %32 : vector<4x16x256xf32>
    %cst_18 = arith.constant 0.797884583 : f32
    %34 = vector.broadcast %cst_18 : f32 to vector<4x16x256xf32>
    %35 = arith.mulf %34, %33 : vector<4x16x256xf32>
    %36 = math.tanh %35 : vector<4x16x256xf32>
    %cst_19 = arith.constant 1.000000e+00 : f32
    %37 = vector.broadcast %cst_19 : f32 to vector<4x16x256xf32>
    %38 = arith.addf %37, %36 : vector<4x16x256xf32>
    %cst_20 = arith.constant 5.000000e-01 : f32
    %39 = vector.broadcast %cst_20 : f32 to vector<4x16x256xf32>
    %40 = arith.mulf %39, %38 : vector<4x16x256xf32>
    %41 = arith.mulf %28, %40 : vector<4x16x256xf32>
    %c0_21 = arith.constant 0 : index
    %c0_22 = arith.constant 0 : index
    %c0_23 = arith.constant 0 : index
    %42 = vector.load %arg14[%c0_21, %c0_22, %c0_23] : memref<4x16x16xf32, #tpu.memory_space<vmem>>, vector<1x16x16xf32>
    %43 = vector.shape_cast %42 : vector<1x16x16xf32> to vector<16x16xf32>
    %44 = vector.extract_strided_slice %41 {offsets = [0, 0, 0], sizes = [1, 16, 256], strides = [1, 1, 1]} : vector<4x16x256xf32> to vector<1x16x256xf32>
    %45 = vector.shape_cast %44 : vector<1x16x256xf32> to vector<16x256xf32>
    %cst_24 = arith.constant dense<0.000000e+00> : vector<16x256xf32>
    %46 = tpu.matmul %43, %45, %cst_24 {dimension_numbers = #tpu.dot_dimension_numbers<[1], [0], [0], [1], [0, 0, 1, 1], [], []>} : vector<16x16xf32>, vector<16x256xf32>, vector<16x256xf32> -> vector<16x256xf32>
    %c0_25 = arith.constant 0 : index
    %c0_26 = arith.constant 0 : index
    %c0_27 = arith.constant 0 : index
    %47 = vector.load %arg15[%c0_25, %c0_26, %c0_27] : memref<4x16x1xf32, #tpu.memory_space<vmem>>, vector<1x16x1xf32>
    %48 = vector.shape_cast %47 : vector<1x16x1xf32> to vector<16x1xf32>
    %49 = vector.broadcast %48 : vector<16x1xf32> to vector<16x256xf32>
    %50 = arith.addf %46, %49 : vector<16x256xf32>
    %cst_28 = arith.constant dense<0.000000e+00> : vector<256xf32>
    %51 = vector.multi_reduction <add>, %50, %cst_28 [0] : vector<16x256xf32> to vector<256xf32>
    %52 = vector.shape_cast %51 : vector<256xf32> to vector<1x256xf32>
    %cst_29 = arith.constant 1.600000e+01 : f32
    %53 = vector.broadcast %cst_29 : f32 to vector<1x256xf32>
    %54 = arith.divf %52, %53 : vector<1x256xf32>
    %55 = vector.broadcast %54 : vector<1x256xf32> to vector<16x256xf32>
    %56 = arith.subf %50, %55 : vector<16x256xf32>
    %57 = arith.mulf %56, %56 : vector<16x256xf32>
    %cst_30 = arith.constant dense<0.000000e+00> : vector<256xf32>
    %58 = vector.multi_reduction <add>, %57, %cst_30 [0] : vector<16x256xf32> to vector<256xf32>
    %59 = vector.shape_cast %58 : vector<256xf32> to vector<1x256xf32>
    %cst_31 = arith.constant 1.600000e+01 : f32
    %60 = vector.broadcast %cst_31 : f32 to vector<1x256xf32>
    %61 = arith.divf %59, %60 : vector<1x256xf32>
    %cst_32 = arith.constant 9.99999974E-6 : f32
    %62 = vector.broadcast %cst_32 : f32 to vector<1x256xf32>
    %63 = arith.addf %61, %62 : vector<1x256xf32>
    %64 = math.rsqrt %63 : vector<1x256xf32>
    %65 = vector.broadcast %64 : vector<1x256xf32> to vector<16x256xf32>
    %66 = arith.mulf %56, %65 : vector<16x256xf32>
    %c0_33 = arith.constant 0 : index
    %c0_34 = arith.constant 0 : index
    %c0_35 = arith.constant 0 : index
    %67 = vector.load %arg16[%c0_33, %c0_34, %c0_35] : memref<4x16x1xf32, #tpu.memory_space<vmem>>, vector<1x16x1xf32>
    %68 = vector.shape_cast %67 : vector<1x16x1xf32> to vector<16x1xf32>
    %69 = vector.broadcast %68 : vector<16x1xf32> to vector<16x256xf32>
    %70 = arith.mulf %66, %69 : vector<16x256xf32>
    %c0_36 = arith.constant 0 : index
    %c0_37 = arith.constant 0 : index
    %c0_38 = arith.constant 0 : index
    %71 = vector.load %arg17[%c0_36, %c0_37, %c0_38] : memref<4x16x1xf32, #tpu.memory_space<vmem>>, vector<1x16x1xf32>
    %72 = vector.shape_cast %71 : vector<1x16x1xf32> to vector<16x1xf32>
    %73 = vector.broadcast %72 : vector<16x1xf32> to vector<16x256xf32>
    %74 = arith.addf %70, %73 : vector<16x256xf32>
    %75 = arith.mulf %74, %74 : vector<16x256xf32>
    %76 = arith.mulf %74, %75 : vector<16x256xf32>
    %cst_39 = arith.constant 4.471500e-02 : f32
    %77 = vector.broadcast %cst_39 : f32 to vector<16x256xf32>
    %78 = arith.mulf %77, %76 : vector<16x256xf32>
    %79 = arith.addf %74, %78 : vector<16x256xf32>
    %cst_40 = arith.constant 0.797884583 : f32
    %80 = vector.broadcast %cst_40 : f32 to vector<16x256xf32>
    %81 = arith.mulf %80, %79 : vector<16x256xf32>
    %82 = math.tanh %81 : vector<16x256xf32>
    %cst_41 = arith.constant 1.000000e+00 : f32
    %83 = vector.broadcast %cst_41 : f32 to vector<16x256xf32>
    %84 = arith.addf %83, %82 : vector<16x256xf32>
    %cst_42 = arith.constant 5.000000e-01 : f32
    %85 = vector.broadcast %cst_42 : f32 to vector<16x256xf32>
    %86 = arith.mulf %85, %84 : vector<16x256xf32>
    %87 = arith.mulf %74, %86 : vector<16x256xf32>
    %c0_43 = arith.constant 0 : index
    %c0_44 = arith.constant 0 : index
    %88 = vector.load %arg18[%c0_43, %c0_44] : memref<192x16xf32, #tpu.memory_space<vmem>>, vector<32x16xf32>
    %cst_45 = arith.constant dense<0.000000e+00> : vector<32x256xf32>
    %89 = tpu.matmul %88, %87, %cst_45 {dimension_numbers = #tpu.dot_dimension_numbers<[1], [0], [0], [1], [0, 0, 1, 1], [], []>} : vector<32x16xf32>, vector<16x256xf32>, vector<32x256xf32> -> vector<32x256xf32>
    %c0_46 = arith.constant 0 : index
    %c0_47 = arith.constant 0 : index
    %c0_48 = arith.constant 0 : index
    %90 = vector.load %arg2[%c0_46, %c0_47, %c0_48] : memref<1x8x256xf32, #tpu.memory_space<vmem>>, vector<1x8x256xf32>
    %c0_49 = arith.constant 0 : index
    %c0_50 = arith.constant 0 : index
    %c0_51 = arith.constant 0 : index
    %91 = vector.load %arg4[%c0_49, %c0_50, %c0_51] : memref<1x1x256xf32, #tpu.memory_space<vmem>>, vector<1x1x256xf32>
    %92 = vector.shape_cast %91 : vector<1x1x256xf32> to vector<1x256xf32>
    %93 = vector.shape_cast %92 : vector<1x256xf32> to vector<1x1x256xf32>
    %94 = vector.shape_cast %90 : vector<1x8x256xf32> to vector<8x256xf32>
    %95 = vector.shape_cast %94 : vector<8x256xf32> to vector<1x8x256xf32>
    %96 = vector.broadcast %93 : vector<1x1x256xf32> to vector<1x8x256xf32>
    %97 = arith.mulf %96, %95 : vector<1x8x256xf32>
    %98 = vector.extract_strided_slice %89 {offsets = [0, 0], sizes = [8, 256], strides = [1, 1]} : vector<32x256xf32> to vector<8x256xf32>
    %99 = vector.shape_cast %98 : vector<8x256xf32> to vector<1x8x256xf32>
    %100 = arith.mulf %97, %99 : vector<1x8x256xf32>
    %cst_52 = arith.constant dense<0.000000e+00> : vector<1x256xf32>
    %101 = vector.multi_reduction <add>, %100, %cst_52 [1] : vector<1x8x256xf32> to vector<1x256xf32>
    %102 = vector.extract_strided_slice %89 {offsets = [8, 0], sizes = [8, 256], strides = [1, 1]} : vector<32x256xf32> to vector<8x256xf32>
    %103 = vector.shape_cast %102 : vector<8x256xf32> to vector<1x8x256xf32>
    %104 = arith.mulf %97, %103 : vector<1x8x256xf32>
    %cst_53 = arith.constant dense<0.000000e+00> : vector<1x256xf32>
    %105 = vector.multi_reduction <add>, %104, %cst_53 [1] : vector<1x8x256xf32> to vector<1x256xf32>
    %106 = vector.extract_strided_slice %89 {offsets = [16, 0], sizes = [8, 256], strides = [1, 1]} : vector<32x256xf32> to vector<8x256xf32>
    %107 = vector.shape_cast %106 : vector<8x256xf32> to vector<1x8x256xf32>
    %108 = arith.mulf %97, %107 : vector<1x8x256xf32>
    %cst_54 = arith.constant dense<0.000000e+00> : vector<1x256xf32>
    %109 = vector.multi_reduction <add>, %108, %cst_54 [1] : vector<1x8x256xf32> to vector<1x256xf32>
    %110 = vector.extract_strided_slice %89 {offsets = [24, 0], sizes = [8, 256], strides = [1, 1]} : vector<32x256xf32> to vector<8x256xf32>
    %111 = vector.shape_cast %110 : vector<8x256xf32> to vector<1x8x256xf32>
    %112 = arith.mulf %97, %111 : vector<1x8x256xf32>
    %cst_55 = arith.constant dense<0.000000e+00> : vector<1x256xf32>
    %113 = vector.multi_reduction <add>, %112, %cst_55 [1] : vector<1x8x256xf32> to vector<1x256xf32>
    %c1 = arith.constant 1 : index
    %c0_56 = arith.constant 0 : index
    %c0_57 = arith.constant 0 : index
    %114 = vector.load %arg14[%c1, %c0_56, %c0_57] : memref<4x16x16xf32, #tpu.memory_space<vmem>>, vector<1x16x16xf32>
    %115 = vector.shape_cast %114 : vector<1x16x16xf32> to vector<16x16xf32>
    %116 = vector.extract_strided_slice %41 {offsets = [1, 0, 0], sizes = [1, 16, 256], strides = [1, 1, 1]} : vector<4x16x256xf32> to vector<1x16x256xf32>
    %117 = vector.shape_cast %116 : vector<1x16x256xf32> to vector<16x256xf32>
    %cst_58 = arith.constant dense<0.000000e+00> : vector<16x256xf32>
    %118 = tpu.matmul %115, %117, %cst_58 {dimension_numbers = #tpu.dot_dimension_numbers<[1], [0], [0], [1], [0, 0, 1, 1], [], []>} : vector<16x16xf32>, vector<16x256xf32>, vector<16x256xf32> -> vector<16x256xf32>
    %c1_59 = arith.constant 1 : index
    %c0_60 = arith.constant 0 : index
    %c0_61 = arith.constant 0 : index
    %119 = vector.load %arg15[%c1_59, %c0_60, %c0_61] : memref<4x16x1xf32, #tpu.memory_space<vmem>>, vector<1x16x1xf32>
    %120 = vector.shape_cast %119 : vector<1x16x1xf32> to vector<16x1xf32>
    %121 = vector.broadcast %120 : vector<16x1xf32> to vector<16x256xf32>
    %122 = arith.addf %118, %121 : vector<16x256xf32>
    %cst_62 = arith.constant dense<0.000000e+00> : vector<256xf32>
    %123 = vector.multi_reduction <add>, %122, %cst_62 [0] : vector<16x256xf32> to vector<256xf32>
    %124 = vector.shape_cast %123 : vector<256xf32> to vector<1x256xf32>
    %cst_63 = arith.constant 1.600000e+01 : f32
    %125 = vector.broadcast %cst_63 : f32 to vector<1x256xf32>
    %126 = arith.divf %124, %125 : vector<1x256xf32>
    %127 = vector.broadcast %126 : vector<1x256xf32> to vector<16x256xf32>
    %128 = arith.subf %122, %127 : vector<16x256xf32>
    %129 = arith.mulf %128, %128 : vector<16x256xf32>
    %cst_64 = arith.constant dense<0.000000e+00> : vector<256xf32>
    %130 = vector.multi_reduction <add>, %129, %cst_64 [0] : vector<16x256xf32> to vector<256xf32>
    %131 = vector.shape_cast %130 : vector<256xf32> to vector<1x256xf32>
    %cst_65 = arith.constant 1.600000e+01 : f32
    %132 = vector.broadcast %cst_65 : f32 to vector<1x256xf32>
    %133 = arith.divf %131, %132 : vector<1x256xf32>
    %cst_66 = arith.constant 9.99999974E-6 : f32
    %134 = vector.broadcast %cst_66 : f32 to vector<1x256xf32>
    %135 = arith.addf %133, %134 : vector<1x256xf32>
    %136 = math.rsqrt %135 : vector<1x256xf32>
    %137 = vector.broadcast %136 : vector<1x256xf32> to vector<16x256xf32>
    %138 = arith.mulf %128, %137 : vector<16x256xf32>
    %c1_67 = arith.constant 1 : index
    %c0_68 = arith.constant 0 : index
    %c0_69 = arith.constant 0 : index
    %139 = vector.load %arg16[%c1_67, %c0_68, %c0_69] : memref<4x16x1xf32, #tpu.memory_space<vmem>>, vector<1x16x1xf32>
    %140 = vector.shape_cast %139 : vector<1x16x1xf32> to vector<16x1xf32>
    %141 = vector.broadcast %140 : vector<16x1xf32> to vector<16x256xf32>
    %142 = arith.mulf %138, %141 : vector<16x256xf32>
    %c1_70 = arith.constant 1 : index
    %c0_71 = arith.constant 0 : index
    %c0_72 = arith.constant 0 : index
    %143 = vector.load %arg17[%c1_70, %c0_71, %c0_72] : memref<4x16x1xf32, #tpu.memory_space<vmem>>, vector<1x16x1xf32>
    %144 = vector.shape_cast %143 : vector<1x16x1xf32> to vector<16x1xf32>
    %145 = vector.broadcast %144 : vector<16x1xf32> to vector<16x256xf32>
    %146 = arith.addf %142, %145 : vector<16x256xf32>
    %147 = arith.mulf %146, %146 : vector<16x256xf32>
    %148 = arith.mulf %146, %147 : vector<16x256xf32>
    %cst_73 = arith.constant 4.471500e-02 : f32
    %149 = vector.broadcast %cst_73 : f32 to vector<16x256xf32>
    %150 = arith.mulf %149, %148 : vector<16x256xf32>
    %151 = arith.addf %146, %150 : vector<16x256xf32>
    %cst_74 = arith.constant 0.797884583 : f32
    %152 = vector.broadcast %cst_74 : f32 to vector<16x256xf32>
    %153 = arith.mulf %152, %151 : vector<16x256xf32>
    %154 = math.tanh %153 : vector<16x256xf32>
    %cst_75 = arith.constant 1.000000e+00 : f32
    %155 = vector.broadcast %cst_75 : f32 to vector<16x256xf32>
    %156 = arith.addf %155, %154 : vector<16x256xf32>
    %cst_76 = arith.constant 5.000000e-01 : f32
    %157 = vector.broadcast %cst_76 : f32 to vector<16x256xf32>
    %158 = arith.mulf %157, %156 : vector<16x256xf32>
    %159 = arith.mulf %146, %158 : vector<16x256xf32>
    %c32 = arith.constant 32 : index
    %c0_77 = arith.constant 0 : index
    %160 = vector.load %arg18[%c32, %c0_77] : memref<192x16xf32, #tpu.memory_space<vmem>>, vector<32x16xf32>
    %cst_78 = arith.constant dense<0.000000e+00> : vector<32x256xf32>
    %161 = tpu.matmul %160, %159, %cst_78 {dimension_numbers = #tpu.dot_dimension_numbers<[1], [0], [0], [1], [0, 0, 1, 1], [], []>} : vector<32x16xf32>, vector<16x256xf32>, vector<32x256xf32> -> vector<32x256xf32>
    %c0_79 = arith.constant 0 : index
    %c0_80 = arith.constant 0 : index
    %c0_81 = arith.constant 0 : index
    %162 = vector.load %arg3[%c0_79, %c0_80, %c0_81] : memref<3x8x256xf32, #tpu.memory_space<vmem>>, vector<3x8x256xf32>
    %c0_82 = arith.constant 0 : index
    %c0_83 = arith.constant 0 : index
    %c0_84 = arith.constant 0 : index
    %163 = vector.load %arg5[%c0_82, %c0_83, %c0_84] : memref<3x1x256xf32, #tpu.memory_space<vmem>>, vector<3x1x256xf32>
    %164 = vector.extract_strided_slice %163 {offsets = [0, 0, 0], sizes = [1, 1, 256], strides = [1, 1, 1]} : vector<3x1x256xf32> to vector<1x1x256xf32>
    %165 = vector.shape_cast %164 : vector<1x1x256xf32> to vector<1x256xf32>
    %166 = vector.shape_cast %165 : vector<1x256xf32> to vector<1x1x256xf32>
    %167 = vector.extract_strided_slice %162 {offsets = [0, 0, 0], sizes = [1, 8, 256], strides = [1, 1, 1]} : vector<3x8x256xf32> to vector<1x8x256xf32>
    %168 = vector.shape_cast %167 : vector<1x8x256xf32> to vector<8x256xf32>
    %169 = vector.shape_cast %168 : vector<8x256xf32> to vector<1x8x256xf32>
    %170 = vector.broadcast %166 : vector<1x1x256xf32> to vector<1x8x256xf32>
    %171 = arith.mulf %170, %169 : vector<1x8x256xf32>
    %172 = vector.extract_strided_slice %163 {offsets = [1, 0, 0], sizes = [1, 1, 256], strides = [1, 1, 1]} : vector<3x1x256xf32> to vector<1x1x256xf32>
    %173 = vector.shape_cast %172 : vector<1x1x256xf32> to vector<1x256xf32>
    %174 = vector.shape_cast %173 : vector<1x256xf32> to vector<1x1x256xf32>
    %175 = vector.extract_strided_slice %162 {offsets = [1, 0, 0], sizes = [1, 8, 256], strides = [1, 1, 1]} : vector<3x8x256xf32> to vector<1x8x256xf32>
    %176 = vector.shape_cast %175 : vector<1x8x256xf32> to vector<8x256xf32>
    %177 = vector.shape_cast %176 : vector<8x256xf32> to vector<1x8x256xf32>
    %178 = vector.broadcast %174 : vector<1x1x256xf32> to vector<1x8x256xf32>
    %179 = arith.mulf %178, %177 : vector<1x8x256xf32>
    %180 = arith.addf %171, %179 : vector<1x8x256xf32>
    %181 = vector.extract_strided_slice %163 {offsets = [2, 0, 0], sizes = [1, 1, 256], strides = [1, 1, 1]} : vector<3x1x256xf32> to vector<1x1x256xf32>
    %182 = vector.shape_cast %181 : vector<1x1x256xf32> to vector<1x256xf32>
    %183 = vector.shape_cast %182 : vector<1x256xf32> to vector<1x1x256xf32>
    %184 = vector.extract_strided_slice %162 {offsets = [2, 0, 0], sizes = [1, 8, 256], strides = [1, 1, 1]} : vector<3x8x256xf32> to vector<1x8x256xf32>
    %185 = vector.shape_cast %184 : vector<1x8x256xf32> to vector<8x256xf32>
    %186 = vector.shape_cast %185 : vector<8x256xf32> to vector<1x8x256xf32>
    %187 = vector.broadcast %183 : vector<1x1x256xf32> to vector<1x8x256xf32>
    %188 = arith.mulf %187, %186 : vector<1x8x256xf32>
    %189 = arith.addf %180, %188 : vector<1x8x256xf32>
    %190 = vector.extract_strided_slice %161 {offsets = [0, 0], sizes = [8, 256], strides = [1, 1]} : vector<32x256xf32> to vector<8x256xf32>
    %191 = vector.shape_cast %190 : vector<8x256xf32> to vector<1x8x256xf32>
    %192 = arith.mulf %189, %191 : vector<1x8x256xf32>
    %cst_85 = arith.constant dense<0.000000e+00> : vector<1x256xf32>
    %193 = vector.multi_reduction <add>, %192, %cst_85 [1] : vector<1x8x256xf32> to vector<1x256xf32>
    %194 = arith.addf %101, %193 : vector<1x256xf32>
    %195 = vector.extract_strided_slice %161 {offsets = [8, 0], sizes = [8, 256], strides = [1, 1]} : vector<32x256xf32> to vector<8x256xf32>
    %196 = vector.shape_cast %195 : vector<8x256xf32> to vector<1x8x256xf32>
    %197 = arith.mulf %189, %196 : vector<1x8x256xf32>
    %cst_86 = arith.constant dense<0.000000e+00> : vector<1x256xf32>
    %198 = vector.multi_reduction <add>, %197, %cst_86 [1] : vector<1x8x256xf32> to vector<1x256xf32>
    %199 = arith.addf %105, %198 : vector<1x256xf32>
    %200 = vector.extract_strided_slice %161 {offsets = [16, 0], sizes = [8, 256], strides = [1, 1]} : vector<32x256xf32> to vector<8x256xf32>
    %201 = vector.shape_cast %200 : vector<8x256xf32> to vector<1x8x256xf32>
    %202 = arith.mulf %189, %201 : vector<1x8x256xf32>
    %cst_87 = arith.constant dense<0.000000e+00> : vector<1x256xf32>
    %203 = vector.multi_reduction <add>, %202, %cst_87 [1] : vector<1x8x256xf32> to vector<1x256xf32>
    %204 = arith.addf %109, %203 : vector<1x256xf32>
    %205 = vector.extract_strided_slice %161 {offsets = [24, 0], sizes = [8, 256], strides = [1, 1]} : vector<32x256xf32> to vector<8x256xf32>
    %206 = vector.shape_cast %205 : vector<8x256xf32> to vector<1x8x256xf32>
    %207 = arith.mulf %189, %206 : vector<1x8x256xf32>
    %cst_88 = arith.constant dense<0.000000e+00> : vector<1x256xf32>
    %208 = vector.multi_reduction <add>, %207, %cst_88 [1] : vector<1x8x256xf32> to vector<1x256xf32>
    %209 = arith.addf %113, %208 : vector<1x256xf32>
    %c2 = arith.constant 2 : index
    %c0_89 = arith.constant 0 : index
    %c0_90 = arith.constant 0 : index
    %210 = vector.load %arg14[%c2, %c0_89, %c0_90] : memref<4x16x16xf32, #tpu.memory_space<vmem>>, vector<1x16x16xf32>
    %211 = vector.shape_cast %210 : vector<1x16x16xf32> to vector<16x16xf32>
    %212 = vector.extract_strided_slice %41 {offsets = [2, 0, 0], sizes = [1, 16, 256], strides = [1, 1, 1]} : vector<4x16x256xf32> to vector<1x16x256xf32>
    %213 = vector.shape_cast %212 : vector<1x16x256xf32> to vector<16x256xf32>
    %cst_91 = arith.constant dense<0.000000e+00> : vector<16x256xf32>
    %214 = tpu.matmul %211, %213, %cst_91 {dimension_numbers = #tpu.dot_dimension_numbers<[1], [0], [0], [1], [0, 0, 1, 1], [], []>} : vector<16x16xf32>, vector<16x256xf32>, vector<16x256xf32> -> vector<16x256xf32>
    %c2_92 = arith.constant 2 : index
    %c0_93 = arith.constant 0 : index
    %c0_94 = arith.constant 0 : index
    %215 = vector.load %arg15[%c2_92, %c0_93, %c0_94] : memref<4x16x1xf32, #tpu.memory_space<vmem>>, vector<1x16x1xf32>
    %216 = vector.shape_cast %215 : vector<1x16x1xf32> to vector<16x1xf32>
    %217 = vector.broadcast %216 : vector<16x1xf32> to vector<16x256xf32>
    %218 = arith.addf %214, %217 : vector<16x256xf32>
    %cst_95 = arith.constant dense<0.000000e+00> : vector<256xf32>
    %219 = vector.multi_reduction <add>, %218, %cst_95 [0] : vector<16x256xf32> to vector<256xf32>
    %220 = vector.shape_cast %219 : vector<256xf32> to vector<1x256xf32>
    %cst_96 = arith.constant 1.600000e+01 : f32
    %221 = vector.broadcast %cst_96 : f32 to vector<1x256xf32>
    %222 = arith.divf %220, %221 : vector<1x256xf32>
    %223 = vector.broadcast %222 : vector<1x256xf32> to vector<16x256xf32>
    %224 = arith.subf %218, %223 : vector<16x256xf32>
    %225 = arith.mulf %224, %224 : vector<16x256xf32>
    %cst_97 = arith.constant dense<0.000000e+00> : vector<256xf32>
    %226 = vector.multi_reduction <add>, %225, %cst_97 [0] : vector<16x256xf32> to vector<256xf32>
    %227 = vector.shape_cast %226 : vector<256xf32> to vector<1x256xf32>
    %cst_98 = arith.constant 1.600000e+01 : f32
    %228 = vector.broadcast %cst_98 : f32 to vector<1x256xf32>
    %229 = arith.divf %227, %228 : vector<1x256xf32>
    %cst_99 = arith.constant 9.99999974E-6 : f32
    %230 = vector.broadcast %cst_99 : f32 to vector<1x256xf32>
    %231 = arith.addf %229, %230 : vector<1x256xf32>
    %232 = math.rsqrt %231 : vector<1x256xf32>
    %233 = vector.broadcast %232 : vector<1x256xf32> to vector<16x256xf32>
    %234 = arith.mulf %224, %233 : vector<16x256xf32>
    %c2_100 = arith.constant 2 : index
    %c0_101 = arith.constant 0 : index
    %c0_102 = arith.constant 0 : index
    %235 = vector.load %arg16[%c2_100, %c0_101, %c0_102] : memref<4x16x1xf32, #tpu.memory_space<vmem>>, vector<1x16x1xf32>
    %236 = vector.shape_cast %235 : vector<1x16x1xf32> to vector<16x1xf32>
    %237 = vector.broadcast %236 : vector<16x1xf32> to vector<16x256xf32>
    %238 = arith.mulf %234, %237 : vector<16x256xf32>
    %c2_103 = arith.constant 2 : index
    %c0_104 = arith.constant 0 : index
    %c0_105 = arith.constant 0 : index
    %239 = vector.load %arg17[%c2_103, %c0_104, %c0_105] : memref<4x16x1xf32, #tpu.memory_space<vmem>>, vector<1x16x1xf32>
    %240 = vector.shape_cast %239 : vector<1x16x1xf32> to vector<16x1xf32>
    %241 = vector.broadcast %240 : vector<16x1xf32> to vector<16x256xf32>
    %242 = arith.addf %238, %241 : vector<16x256xf32>
    %243 = arith.mulf %242, %242 : vector<16x256xf32>
    %244 = arith.mulf %242, %243 : vector<16x256xf32>
    %cst_106 = arith.constant 4.471500e-02 : f32
    %245 = vector.broadcast %cst_106 : f32 to vector<16x256xf32>
    %246 = arith.mulf %245, %244 : vector<16x256xf32>
    %247 = arith.addf %242, %246 : vector<16x256xf32>
    %cst_107 = arith.constant 0.797884583 : f32
    %248 = vector.broadcast %cst_107 : f32 to vector<16x256xf32>
    %249 = arith.mulf %248, %247 : vector<16x256xf32>
    %250 = math.tanh %249 : vector<16x256xf32>
    %cst_108 = arith.constant 1.000000e+00 : f32
    %251 = vector.broadcast %cst_108 : f32 to vector<16x256xf32>
    %252 = arith.addf %251, %250 : vector<16x256xf32>
    %cst_109 = arith.constant 5.000000e-01 : f32
    %253 = vector.broadcast %cst_109 : f32 to vector<16x256xf32>
    %254 = arith.mulf %253, %252 : vector<16x256xf32>
    %255 = arith.mulf %242, %254 : vector<16x256xf32>
    %c64 = arith.constant 64 : index
    %c0_110 = arith.constant 0 : index
    %256 = vector.load %arg18[%c64, %c0_110] : memref<192x16xf32, #tpu.memory_space<vmem>>, vector<32x16xf32>
    %cst_111 = arith.constant dense<0.000000e+00> : vector<32x256xf32>
    %257 = tpu.matmul %256, %255, %cst_111 {dimension_numbers = #tpu.dot_dimension_numbers<[1], [0], [0], [1], [0, 0, 1, 1], [], []>} : vector<32x16xf32>, vector<16x256xf32>, vector<32x256xf32> -> vector<32x256xf32>
    %c0_112 = arith.constant 0 : index
    %c0_113 = arith.constant 0 : index
    %c0_114 = arith.constant 0 : index
    %258 = vector.load %arg2[%c0_112, %c0_113, %c0_114] : memref<1x8x256xf32, #tpu.memory_space<vmem>>, vector<1x8x256xf32>
    %c0_115 = arith.constant 0 : index
    %c0_116 = arith.constant 0 : index
    %c0_117 = arith.constant 0 : index
    %259 = vector.load %arg6[%c0_115, %c0_116, %c0_117] : memref<1x3x256xf32, #tpu.memory_space<vmem>>, vector<1x3x256xf32>
    %260 = vector.shape_cast %259 : vector<1x3x256xf32> to vector<3x256xf32>
    %261 = vector.shape_cast %260 : vector<3x256xf32> to vector<3x1x256xf32>
    %262 = vector.shape_cast %258 : vector<1x8x256xf32> to vector<8x256xf32>
    %263 = vector.shape_cast %262 : vector<8x256xf32> to vector<1x8x256xf32>
    %264 = vector.broadcast %261 : vector<3x1x256xf32> to vector<3x8x256xf32>
    %265 = vector.broadcast %263 : vector<1x8x256xf32> to vector<3x8x256xf32>
    %266 = arith.mulf %264, %265 : vector<3x8x256xf32>
    %267 = vector.extract_strided_slice %257 {offsets = [0, 0], sizes = [8, 256], strides = [1, 1]} : vector<32x256xf32> to vector<8x256xf32>
    %268 = vector.shape_cast %267 : vector<8x256xf32> to vector<1x8x256xf32>
    %269 = vector.broadcast %268 : vector<1x8x256xf32> to vector<3x8x256xf32>
    %270 = arith.mulf %266, %269 : vector<3x8x256xf32>
    %cst_118 = arith.constant dense<0.000000e+00> : vector<3x256xf32>
    %271 = vector.multi_reduction <add>, %270, %cst_118 [1] : vector<3x8x256xf32> to vector<3x256xf32>
    %272 = vector.extract_strided_slice %257 {offsets = [8, 0], sizes = [8, 256], strides = [1, 1]} : vector<32x256xf32> to vector<8x256xf32>
    %273 = vector.shape_cast %272 : vector<8x256xf32> to vector<1x8x256xf32>
    %274 = vector.broadcast %273 : vector<1x8x256xf32> to vector<3x8x256xf32>
    %275 = arith.mulf %266, %274 : vector<3x8x256xf32>
    %cst_119 = arith.constant dense<0.000000e+00> : vector<3x256xf32>
    %276 = vector.multi_reduction <add>, %275, %cst_119 [1] : vector<3x8x256xf32> to vector<3x256xf32>
    %277 = vector.extract_strided_slice %257 {offsets = [16, 0], sizes = [8, 256], strides = [1, 1]} : vector<32x256xf32> to vector<8x256xf32>
    %278 = vector.shape_cast %277 : vector<8x256xf32> to vector<1x8x256xf32>
    %279 = vector.broadcast %278 : vector<1x8x256xf32> to vector<3x8x256xf32>
    %280 = arith.mulf %266, %279 : vector<3x8x256xf32>
    %cst_120 = arith.constant dense<0.000000e+00> : vector<3x256xf32>
    %281 = vector.multi_reduction <add>, %280, %cst_120 [1] : vector<3x8x256xf32> to vector<3x256xf32>
    %282 = vector.extract_strided_slice %257 {offsets = [24, 0], sizes = [8, 256], strides = [1, 1]} : vector<32x256xf32> to vector<8x256xf32>
    %283 = vector.shape_cast %282 : vector<8x256xf32> to vector<1x8x256xf32>
    %284 = vector.broadcast %283 : vector<1x8x256xf32> to vector<3x8x256xf32>
    %285 = arith.mulf %266, %284 : vector<3x8x256xf32>
    %cst_121 = arith.constant dense<0.000000e+00> : vector<3x256xf32>
    %286 = vector.multi_reduction <add>, %285, %cst_121 [1] : vector<3x8x256xf32> to vector<3x256xf32>
    %c3 = arith.constant 3 : index
    %c0_122 = arith.constant 0 : index
    %c0_123 = arith.constant 0 : index
    %287 = vector.load %arg14[%c3, %c0_122, %c0_123] : memref<4x16x16xf32, #tpu.memory_space<vmem>>, vector<1x16x16xf32>
    %288 = vector.shape_cast %287 : vector<1x16x16xf32> to vector<16x16xf32>
    %289 = vector.extract_strided_slice %41 {offsets = [3, 0, 0], sizes = [1, 16, 256], strides = [1, 1, 1]} : vector<4x16x256xf32> to vector<1x16x256xf32>
    %290 = vector.shape_cast %289 : vector<1x16x256xf32> to vector<16x256xf32>
    %cst_124 = arith.constant dense<0.000000e+00> : vector<16x256xf32>
    %291 = tpu.matmul %288, %290, %cst_124 {dimension_numbers = #tpu.dot_dimension_numbers<[1], [0], [0], [1], [0, 0, 1, 1], [], []>} : vector<16x16xf32>, vector<16x256xf32>, vector<16x256xf32> -> vector<16x256xf32>
    %c3_125 = arith.constant 3 : index
    %c0_126 = arith.constant 0 : index
    %c0_127 = arith.constant 0 : index
    %292 = vector.load %arg15[%c3_125, %c0_126, %c0_127] : memref<4x16x1xf32, #tpu.memory_space<vmem>>, vector<1x16x1xf32>
    %293 = vector.shape_cast %292 : vector<1x16x1xf32> to vector<16x1xf32>
    %294 = vector.broadcast %293 : vector<16x1xf32> to vector<16x256xf32>
    %295 = arith.addf %291, %294 : vector<16x256xf32>
    %cst_128 = arith.constant dense<0.000000e+00> : vector<256xf32>
    %296 = vector.multi_reduction <add>, %295, %cst_128 [0] : vector<16x256xf32> to vector<256xf32>
    %297 = vector.shape_cast %296 : vector<256xf32> to vector<1x256xf32>
    %cst_129 = arith.constant 1.600000e+01 : f32
    %298 = vector.broadcast %cst_129 : f32 to vector<1x256xf32>
    %299 = arith.divf %297, %298 : vector<1x256xf32>
    %300 = vector.broadcast %299 : vector<1x256xf32> to vector<16x256xf32>
    %301 = arith.subf %295, %300 : vector<16x256xf32>
    %302 = arith.mulf %301, %301 : vector<16x256xf32>
    %cst_130 = arith.constant dense<0.000000e+00> : vector<256xf32>
    %303 = vector.multi_reduction <add>, %302, %cst_130 [0] : vector<16x256xf32> to vector<256xf32>
    %304 = vector.shape_cast %303 : vector<256xf32> to vector<1x256xf32>
    %cst_131 = arith.constant 1.600000e+01 : f32
    %305 = vector.broadcast %cst_131 : f32 to vector<1x256xf32>
    %306 = arith.divf %304, %305 : vector<1x256xf32>
    %cst_132 = arith.constant 9.99999974E-6 : f32
    %307 = vector.broadcast %cst_132 : f32 to vector<1x256xf32>
    %308 = arith.addf %306, %307 : vector<1x256xf32>
    %309 = math.rsqrt %308 : vector<1x256xf32>
    %310 = vector.broadcast %309 : vector<1x256xf32> to vector<16x256xf32>
    %311 = arith.mulf %301, %310 : vector<16x256xf32>
    %c3_133 = arith.constant 3 : index
    %c0_134 = arith.constant 0 : index
    %c0_135 = arith.constant 0 : index
    %312 = vector.load %arg16[%c3_133, %c0_134, %c0_135] : memref<4x16x1xf32, #tpu.memory_space<vmem>>, vector<1x16x1xf32>
    %313 = vector.shape_cast %312 : vector<1x16x1xf32> to vector<16x1xf32>
    %314 = vector.broadcast %313 : vector<16x1xf32> to vector<16x256xf32>
    %315 = arith.mulf %311, %314 : vector<16x256xf32>
    %c3_136 = arith.constant 3 : index
    %c0_137 = arith.constant 0 : index
    %c0_138 = arith.constant 0 : index
    %316 = vector.load %arg17[%c3_136, %c0_137, %c0_138] : memref<4x16x1xf32, #tpu.memory_space<vmem>>, vector<1x16x1xf32>
    %317 = vector.shape_cast %316 : vector<1x16x1xf32> to vector<16x1xf32>
    %318 = vector.broadcast %317 : vector<16x1xf32> to vector<16x256xf32>
    %319 = arith.addf %315, %318 : vector<16x256xf32>
    %320 = arith.mulf %319, %319 : vector<16x256xf32>
    %321 = arith.mulf %319, %320 : vector<16x256xf32>
    %cst_139 = arith.constant 4.471500e-02 : f32
    %322 = vector.broadcast %cst_139 : f32 to vector<16x256xf32>
    %323 = arith.mulf %322, %321 : vector<16x256xf32>
    %324 = arith.addf %319, %323 : vector<16x256xf32>
    %cst_140 = arith.constant 0.797884583 : f32
    %325 = vector.broadcast %cst_140 : f32 to vector<16x256xf32>
    %326 = arith.mulf %325, %324 : vector<16x256xf32>
    %327 = math.tanh %326 : vector<16x256xf32>
    %cst_141 = arith.constant 1.000000e+00 : f32
    %328 = vector.broadcast %cst_141 : f32 to vector<16x256xf32>
    %329 = arith.addf %328, %327 : vector<16x256xf32>
    %cst_142 = arith.constant 5.000000e-01 : f32
    %330 = vector.broadcast %cst_142 : f32 to vector<16x256xf32>
    %331 = arith.mulf %330, %329 : vector<16x256xf32>
    %332 = arith.mulf %319, %331 : vector<16x256xf32>
    %c96 = arith.constant 96 : index
    %c0_143 = arith.constant 0 : index
    %333 = vector.load %arg18[%c96, %c0_143] : memref<192x16xf32, #tpu.memory_space<vmem>>, vector<96x16xf32>
    %cst_144 = arith.constant dense<0.000000e+00> : vector<96x256xf32>
    %334 = tpu.matmul %333, %332, %cst_144 {dimension_numbers = #tpu.dot_dimension_numbers<[1], [0], [0], [1], [0, 0, 1, 1], [], []>} : vector<96x16xf32>, vector<16x256xf32>, vector<96x256xf32> -> vector<96x256xf32>
    %c0_145 = arith.constant 0 : index
    %c0_146 = arith.constant 0 : index
    %c0_147 = arith.constant 0 : index
    %335 = vector.load %arg3[%c0_145, %c0_146, %c0_147] : memref<3x8x256xf32, #tpu.memory_space<vmem>>, vector<3x8x256xf32>
    %c0_148 = arith.constant 0 : index
    %c0_149 = arith.constant 0 : index
    %c0_150 = arith.constant 0 : index
    %336 = vector.load %arg7[%c0_148, %c0_149, %c0_150] : memref<3x9x256xf32, #tpu.memory_space<vmem>>, vector<3x9x256xf32>
    %337 = vector.extract_strided_slice %336 {offsets = [0, 0, 0], sizes = [1, 9, 256], strides = [1, 1, 1]} : vector<3x9x256xf32> to vector<1x9x256xf32>
    %338 = vector.shape_cast %337 : vector<1x9x256xf32> to vector<9x256xf32>
    %339 = vector.shape_cast %338 : vector<9x256xf32> to vector<9x1x256xf32>
    %340 = vector.extract_strided_slice %335 {offsets = [0, 0, 0], sizes = [1, 8, 256], strides = [1, 1, 1]} : vector<3x8x256xf32> to vector<1x8x256xf32>
    %341 = vector.shape_cast %340 : vector<1x8x256xf32> to vector<8x256xf32>
    %342 = vector.shape_cast %341 : vector<8x256xf32> to vector<1x8x256xf32>
    %343 = vector.broadcast %339 : vector<9x1x256xf32> to vector<9x8x256xf32>
    %344 = vector.broadcast %342 : vector<1x8x256xf32> to vector<9x8x256xf32>
    %345 = arith.mulf %343, %344 : vector<9x8x256xf32>
    %346 = vector.extract_strided_slice %336 {offsets = [1, 0, 0], sizes = [1, 9, 256], strides = [1, 1, 1]} : vector<3x9x256xf32> to vector<1x9x256xf32>
    %347 = vector.shape_cast %346 : vector<1x9x256xf32> to vector<9x256xf32>
    %348 = vector.shape_cast %347 : vector<9x256xf32> to vector<9x1x256xf32>
    %349 = vector.extract_strided_slice %335 {offsets = [1, 0, 0], sizes = [1, 8, 256], strides = [1, 1, 1]} : vector<3x8x256xf32> to vector<1x8x256xf32>
    %350 = vector.shape_cast %349 : vector<1x8x256xf32> to vector<8x256xf32>
    %351 = vector.shape_cast %350 : vector<8x256xf32> to vector<1x8x256xf32>
    %352 = vector.broadcast %348 : vector<9x1x256xf32> to vector<9x8x256xf32>
    %353 = vector.broadcast %351 : vector<1x8x256xf32> to vector<9x8x256xf32>
    %354 = arith.mulf %352, %353 : vector<9x8x256xf32>
    %355 = arith.addf %345, %354 : vector<9x8x256xf32>
    %356 = vector.extract_strided_slice %336 {offsets = [2, 0, 0], sizes = [1, 9, 256], strides = [1, 1, 1]} : vector<3x9x256xf32> to vector<1x9x256xf32>
    %357 = vector.shape_cast %356 : vector<1x9x256xf32> to vector<9x256xf32>
    %358 = vector.shape_cast %357 : vector<9x256xf32> to vector<9x1x256xf32>
    %359 = vector.extract_strided_slice %335 {offsets = [2, 0, 0], sizes = [1, 8, 256], strides = [1, 1, 1]} : vector<3x8x256xf32> to vector<1x8x256xf32>
    %360 = vector.shape_cast %359 : vector<1x8x256xf32> to vector<8x256xf32>
    %361 = vector.shape_cast %360 : vector<8x256xf32> to vector<1x8x256xf32>
    %362 = vector.broadcast %358 : vector<9x1x256xf32> to vector<9x8x256xf32>
    %363 = vector.broadcast %361 : vector<1x8x256xf32> to vector<9x8x256xf32>
    %364 = arith.mulf %362, %363 : vector<9x8x256xf32>
    %365 = arith.addf %355, %364 : vector<9x8x256xf32>
    %366 = vector.shape_cast %365 : vector<9x8x256xf32> to vector<3x24x256xf32>
    %367 = vector.extract_strided_slice %334 {offsets = [0, 0], sizes = [24, 256], strides = [1, 1]} : vector<96x256xf32> to vector<24x256xf32>
    %368 = vector.shape_cast %367 : vector<24x256xf32> to vector<1x24x256xf32>
    %369 = vector.broadcast %368 : vector<1x24x256xf32> to vector<3x24x256xf32>
    %370 = arith.mulf %366, %369 : vector<3x24x256xf32>
    %cst_151 = arith.constant dense<0.000000e+00> : vector<3x256xf32>
    %371 = vector.multi_reduction <add>, %370, %cst_151 [1] : vector<3x24x256xf32> to vector<3x256xf32>
    %372 = arith.addf %271, %371 : vector<3x256xf32>
    %373 = vector.extract_strided_slice %334 {offsets = [24, 0], sizes = [24, 256], strides = [1, 1]} : vector<96x256xf32> to vector<24x256xf32>
    %374 = vector.shape_cast %373 : vector<24x256xf32> to vector<1x24x256xf32>
    %375 = vector.broadcast %374 : vector<1x24x256xf32> to vector<3x24x256xf32>
    %376 = arith.mulf %366, %375 : vector<3x24x256xf32>
    %cst_152 = arith.constant dense<0.000000e+00> : vector<3x256xf32>
    %377 = vector.multi_reduction <add>, %376, %cst_152 [1] : vector<3x24x256xf32> to vector<3x256xf32>
    %378 = arith.addf %276, %377 : vector<3x256xf32>
    %379 = vector.extract_strided_slice %334 {offsets = [48, 0], sizes = [24, 256], strides = [1, 1]} : vector<96x256xf32> to vector<24x256xf32>
    %380 = vector.shape_cast %379 : vector<24x256xf32> to vector<1x24x256xf32>
    %381 = vector.broadcast %380 : vector<1x24x256xf32> to vector<3x24x256xf32>
    %382 = arith.mulf %366, %381 : vector<3x24x256xf32>
    %cst_153 = arith.constant dense<0.000000e+00> : vector<3x256xf32>
    %383 = vector.multi_reduction <add>, %382, %cst_153 [1] : vector<3x24x256xf32> to vector<3x256xf32>
    %384 = arith.addf %281, %383 : vector<3x256xf32>
    %385 = vector.extract_strided_slice %334 {offsets = [72, 0], sizes = [24, 256], strides = [1, 1]} : vector<96x256xf32> to vector<24x256xf32>
    %386 = vector.shape_cast %385 : vector<24x256xf32> to vector<1x24x256xf32>
    %387 = vector.broadcast %386 : vector<1x24x256xf32> to vector<3x24x256xf32>
    %388 = arith.mulf %366, %387 : vector<3x24x256xf32>
    %cst_154 = arith.constant dense<0.000000e+00> : vector<3x256xf32>
    %389 = vector.multi_reduction <add>, %388, %cst_154 [1] : vector<3x24x256xf32> to vector<3x256xf32>
    %390 = arith.addf %286, %389 : vector<3x256xf32>
    %391 = tpu.concatenate %194, %199, %204, %209, %372, %378, %384, %390 in 0 : vector<1x256xf32>, vector<1x256xf32>, vector<1x256xf32>, vector<1x256xf32>, vector<3x256xf32>, vector<3x256xf32>, vector<3x256xf32>, vector<3x256xf32> -> vector<16x256xf32>
    %c0_155 = arith.constant 0 : index
    %c0_156 = arith.constant 0 : index
    %392 = vector.load %arg8[%c0_155, %c0_156] : memref<1x256xf32, #tpu.memory_space<vmem>>, vector<1x256xf32>
    %393 = vector.broadcast %392 : vector<1x256xf32> to vector<16x256xf32>
    %394 = arith.mulf %391, %393 : vector<16x256xf32>
    %c0_157 = arith.constant 0 : index
    %c0_158 = arith.constant 0 : index
    %395 = vector.load %arg9[%c0_157, %c0_158] : memref<256x32xf32, #tpu.memory_space<vmem>>, vector<256x32xf32>
    %cst_159 = arith.constant dense<0.000000e+00> : vector<16x32xf32>
    %396 = tpu.matmul %394, %395, %cst_159 {dimension_numbers = #tpu.dot_dimension_numbers<[1], [0], [0], [1], [0, 0, 1, 1], [], []>} : vector<16x256xf32>, vector<256x32xf32>, vector<16x32xf32> -> vector<16x32xf32>
    %c0_160 = arith.constant 0 : index
    %c0_161 = arith.constant 0 : index
    %397 = vector.load %arg19[%c0_160, %c0_161] : memref<16x32xf32, #tpu.memory_space<vmem>>, vector<16x32xf32>
    tpu.vector_store %arg19[%c0_160, %c0_161], %396 {strides = array<i32>} : memref<16x32xf32, #tpu.memory_space<vmem>>, vector<16x32xf32>,
    return
  }
  func.func @transform_0(%arg0: i32) -> (i32, i32) {
    %c0_i32 = arith.constant 0 : i32
    %c0_i32_0 = arith.constant 0 : i32
    return %c0_i32, %arg0 : i32, i32
  }
  func.func @transform_1(%arg0: i32) -> (i32, i32, i32) {
    %c0_i32 = arith.constant 0 : i32
    %c0_i32_0 = arith.constant 0 : i32
    %c0_i32_1 = arith.constant 0 : i32
    return %c0_i32, %c0_i32_0, %arg0 : i32, i32, i32
  }
  func.func @transform_2(%arg0: i32) -> (i32, i32, i32) {
    %c0_i32 = arith.constant 0 : i32
    %c0_i32_0 = arith.constant 0 : i32
    %c0_i32_1 = arith.constant 0 : i32
    return %c0_i32, %c0_i32_0, %arg0 : i32, i32, i32
  }
  func.func @transform_3(%arg0: i32) -> (i32, i32, i32) {
    %c0_i32 = arith.constant 0 : i32
    %c0_i32_0 = arith.constant 0 : i32
    %c0_i32_1 = arith.constant 0 : i32
    return %c0_i32, %c0_i32_0, %arg0 : i32, i32, i32
  }
  func.func @transform_4(%arg0: i32) -> (i32, i32, i32) {
    %c0_i32 = arith.constant 0 : i32
    %c0_i32_0 = arith.constant 0 : i32
    %c0_i32_1 = arith.constant 0 : i32
    return %c0_i32, %c0_i32_0, %arg0 : i32, i32, i32
  }
  func.func @transform_5(%arg0: i32) -> (i32, i32, i32) {
    %c0_i32 = arith.constant 0 : i32
    %c0_i32_0 = arith.constant 0 : i32
    %c0_i32_1 = arith.constant 0 : i32
    return %c0_i32, %c0_i32_0, %arg0 : i32, i32, i32
  }
  func.func @transform_6(%arg0: i32) -> (i32, i32, i32) {
    %c0_i32 = arith.constant 0 : i32
    %c0_i32_0 = arith.constant 0 : i32
    %c0_i32_1 = arith.constant 0 : i32
    return %c0_i32, %c0_i32_0, %arg0 : i32, i32, i32
  }
  func.func @transform_7(%arg0: i32) -> (i32, i32) {
    %c0_i32 = arith.constant 0 : i32
    %c0_i32_0 = arith.constant 0 : i32
    return %c0_i32, %arg0 : i32, i32
  }
  func.func @transform_8(%arg0: i32) -> (i32, i32) {
    %c0_i32 = arith.constant 0 : i32
    %c0_i32_0 = arith.constant 0 : i32
    %c0_i32_1 = arith.constant 0 : i32
    return %c0_i32, %c0_i32_0 : i32, i32
  }
  func.func @transform_9(%arg0: i32) -> (i32, i32) {
    %c0_i32 = arith.constant 0 : i32
    %c0_i32_0 = arith.constant 0 : i32
    %c0_i32_1 = arith.constant 0 : i32
    return %c0_i32, %c0_i32_0 : i32, i32
  }
  func.func @transform_10(%arg0: i32) -> (i32, i32, i32) {
    %c0_i32 = arith.constant 0 : i32
    %c0_i32_0 = arith.constant 0 : i32
    %c0_i32_1 = arith.constant 0 : i32
    %c0_i32_2 = arith.constant 0 : i32
    return %c0_i32, %c0_i32_0, %c0_i32_1 : i32, i32, i32
  }
  func.func @transform_11(%arg0: i32) -> (i32, i32, i32) {
    %c0_i32 = arith.constant 0 : i32
    %c0_i32_0 = arith.constant 0 : i32
    %c0_i32_1 = arith.constant 0 : i32
    %c0_i32_2 = arith.constant 0 : i32
    return %c0_i32, %c0_i32_0, %c0_i32_1 : i32, i32, i32
  }
  func.func @transform_12(%arg0: i32) -> (i32, i32, i32) {
    %c0_i32 = arith.constant 0 : i32
    %c0_i32_0 = arith.constant 0 : i32
    %c0_i32_1 = arith.constant 0 : i32
    %c0_i32_2 = arith.constant 0 : i32
    return %c0_i32, %c0_i32_0, %c0_i32_1 : i32, i32, i32
  }
  func.func @transform_13(%arg0: i32) -> (i32, i32, i32) {
    %c0_i32 = arith.constant 0 : i32
    %c0_i32_0 = arith.constant 0 : i32
    %c0_i32_1 = arith.constant 0 : i32
    %c0_i32_2 = arith.constant 0 : i32
    return %c0_i32, %c0_i32_0, %c0_i32_1 : i32, i32, i32
  }
  func.func @transform_14(%arg0: i32) -> (i32, i32, i32) {
    %c0_i32 = arith.constant 0 : i32
    %c0_i32_0 = arith.constant 0 : i32
    %c0_i32_1 = arith.constant 0 : i32
    %c0_i32_2 = arith.constant 0 : i32
    return %c0_i32, %c0_i32_0, %c0_i32_1 : i32, i32, i32
  }
  func.func @transform_15(%arg0: i32) -> (i32, i32, i32) {
    %c0_i32 = arith.constant 0 : i32
    %c0_i32_0 = arith.constant 0 : i32
    %c0_i32_1 = arith.constant 0 : i32
    %c0_i32_2 = arith.constant 0 : i32
    return %c0_i32, %c0_i32_0, %c0_i32_1 : i32, i32, i32
  }
  func.func @transform_16(%arg0: i32) -> (i32, i32, i32) {
    %c0_i32 = arith.constant 0 : i32
    %c0_i32_0 = arith.constant 0 : i32
    %c0_i32_1 = arith.constant 0 : i32
    %c0_i32_2 = arith.constant 0 : i32
    return %c0_i32, %c0_i32_0, %c0_i32_1 : i32, i32, i32
  }
  func.func @transform_17(%arg0: i32) -> (i32, i32) {
    %c0_i32 = arith.constant 0 : i32
    %c0_i32_0 = arith.constant 0 : i32
    %c0_i32_1 = arith.constant 0 : i32
    return %c0_i32, %c0_i32_0 : i32, i32
  }
  func.func @transform_18(%arg0: i32) -> (i32, i32) {
    %c0_i32 = arith.constant 0 : i32
    %c0_i32_0 = arith.constant 0 : i32
    return %c0_i32, %arg0 : i32, i32
  }
}

</mosaic_0001>

<llo_original>
// kernel: tpu_custom_call.1
$region0: #{tpu_custom_call.1}
  #allocation0 [shape = 'u32[]', space=smem, size = 0x4, offset = 0x4, fixed_abs, tag = 'smem constant byte address 0x4 - core index']
  #allocation1 [shape = 'u32[144,128]{1,0:T(1,128)}', space=vmem, size = 0x12000, scoped, tag = 'internal scratch']
  %s0 = inlined_call_operand.vmem [shape: f32[8,256], index: 0, kind: input, shape index: {}]
  %s1 = inlined_call_operand.vmem [shape: f32[1,8,256], index: 1, kind: input, shape index: {}]
  %s2 = inlined_call_operand.vmem [shape: f32[3,8,256], index: 2, kind: input, shape index: {}]
  %s3 = inlined_call_operand.vmem [shape: f32[1,1,256], index: 3, kind: input, shape index: {}]
  %s4 = inlined_call_operand.vmem [shape: f32[3,1,256], index: 4, kind: input, shape index: {}]
  %s5 = inlined_call_operand.vmem [shape: f32[1,3,256], index: 5, kind: input, shape index: {}]
  %s6 = inlined_call_operand.vmem [shape: f32[3,9,256], index: 6, kind: input, shape index: {}]
  %s7 = inlined_call_operand.vmem [shape: f32[1,256], index: 7, kind: input, shape index: {}]
  %s8 = inlined_call_operand.vmem [shape: f32[256,32], index: 8, kind: input, shape index: {}]
  %s9 = inlined_call_operand.vmem [shape: f32[64,8], index: 9, kind: input, shape index: {}]
  %s10 = inlined_call_operand.vmem [shape: f32[4,16,1], index: 10, kind: input, shape index: {}]
  %s11 = inlined_call_operand.vmem [shape: f32[4,16,1], index: 11, kind: input, shape index: {}]
  %s12 = inlined_call_operand.vmem [shape: f32[4,16,1], index: 12, kind: input, shape index: {}]
  %s13 = inlined_call_operand.vmem [shape: f32[4,16,16], index: 13, kind: input, shape index: {}]
  %s14 = inlined_call_operand.vmem [shape: f32[4,16,1], index: 14, kind: input, shape index: {}]
  %s15 = inlined_call_operand.vmem [shape: f32[4,16,1], index: 15, kind: input, shape index: {}]
  %s16 = inlined_call_operand.vmem [shape: f32[4,16,1], index: 16, kind: input, shape index: {}]
  %s17 = inlined_call_operand.vmem [shape: f32[192,16], index: 17, kind: input, shape index: {}]
  %s18 = inlined_call_operand.hbm [shape: f32[16,32], index: 18, kind: output, shape index: {}]
  %s19 = sld [smem:[#allocation0]]
  $region82: #{tpu_custom_call.1} parent=0
    _
  %s21 = ssub.s32 1, %s19
  %s22 = scalar_select 0, %s21, %s19
  $region1: #{tpu_custom_call.1} parent=0
    #allocation2 [shape = 'u8[8192]{0}', space=vmem, size = 0x2000, scoped, tag = 'output window, operand 0, single buffered']
    #allocation3 [shape = 's32[1]{0}', space=sflag, size = 0x4, scoped, tag = 'scoped memory for tpu_custom_call.1']
    %23 = vsyncpa [#allocation3], 0
    // Predicated region
    $region2: #{tpu_custom_call.1} parent=1 // pred_check
      _
    $region3: #{tpu_custom_call.1} parent=1 // pred_check_branch
      %25 = sbr.rel (0) target = $region5
    $region4: #{tpu_custom_call.1} parent=1 // pred_region
      _
    $region5: #{tpu_custom_call.1} parent=1 // pred_fallthru
      _
    // Predicated region
    $region6: #{tpu_custom_call.1} parent=1 // pred_check
      _
    $region7: #{tpu_custom_call.1} parent=1 // pred_check_branch
      %27 = sbr.rel (0) target = $region9
    $region8: #{tpu_custom_call.1} parent=1 // pred_region
      _
    $region9: #{tpu_custom_call.1} parent=1 // pred_fallthru
      _
    // Predicated region
    $region10: #{tpu_custom_call.1} parent=1 // pred_check
      _
    $region11: #{tpu_custom_call.1} parent=1 // pred_check_branch
      %29 = sbr.rel (0) target = $region13
    $region12: #{tpu_custom_call.1} parent=1 // pred_region
      _
    $region13: #{tpu_custom_call.1} parent=1 // pred_fallthru
      _
    // Predicated region
    $region14: #{tpu_custom_call.1} parent=1 // pred_check
      _
    $region15: #{tpu_custom_call.1} parent=1 // pred_check_branch
      %31 = sbr.rel (0) target = $region17
    $region16: #{tpu_custom_call.1} parent=1 // pred_region
      _
    $region17: #{tpu_custom_call.1} parent=1 // pred_fallthru
      _
    // Predicated region
    $region18: #{tpu_custom_call.1} parent=1 // pred_check
      _
    $region19: #{tpu_custom_call.1} parent=1 // pred_check_branch
      %33 = sbr.rel (0) target = $region21
    $region20: #{tpu_custom_call.1} parent=1 // pred_region
      _
    $region21: #{tpu_custom_call.1} parent=1 // pred_fallthru
      _
    // Predicated region
    $region22: #{tpu_custom_call.1} parent=1 // pred_check
      _
    $region23: #{tpu_custom_call.1} parent=1 // pred_check_branch
      %35 = sbr.rel (0) target = $region25
    $region24: #{tpu_custom_call.1} parent=1 // pred_region
      _
    $region25: #{tpu_custom_call.1} parent=1 // pred_fallthru
      _
    // Predicated region
    $region26: #{tpu_custom_call.1} parent=1 // pred_check
      _
    $region27: #{tpu_custom_call.1} parent=1 // pred_check_branch
      %37 = sbr.rel (0) target = $region29
    $region28: #{tpu_custom_call.1} parent=1 // pred_region
      _
    $region29: #{tpu_custom_call.1} parent=1 // pred_fallthru
      _
    // Predicated region
    $region30: #{tpu_custom_call.1} parent=1 // pred_check
      _
    $region31: #{tpu_custom_call.1} parent=1 // pred_check_branch
      %39 = sbr.rel (0) target = $region33
    $region32: #{tpu_custom_call.1} parent=1 // pred_region
      _
    $region33: #{tpu_custom_call.1} parent=1 // pred_fallthru
      _
    // Predicated region
    $region34: #{tpu_custom_call.1} parent=1 // pred_check
      _
    $region35: #{tpu_custom_call.1} parent=1 // pred_check_branch
      %41 = sbr.rel (0) target = $region37
    $region36: #{tpu_custom_call.1} parent=1 // pred_region
      _
    $region37: #{tpu_custom_call.1} parent=1 // pred_fallthru
      _
    // Predicated region
    $region38: #{tpu_custom_call.1} parent=1 // pred_check
      _
    $region39: #{tpu_custom_call.1} parent=1 // pred_check_branch
      %43 = sbr.rel (0) target = $region41
    $region40: #{tpu_custom_call.1} parent=1 // pred_region
      _
    $region41: #{tpu_custom_call.1} parent=1 // pred_fallthru
      _
    // Predicated region
    $region42: #{tpu_custom_call.1} parent=1 // pred_check
      _
    $region43: #{tpu_custom_call.1} parent=1 // pred_check_branch
      %45 = sbr.rel (0) target = $region45
    $region44: #{tpu_custom_call.1} parent=1 // pred_region
      _
    $region45: #{tpu_custom_call.1} parent=1 // pred_fallthru
      _
    // Predicated region
    $region46: #{tpu_custom_call.1} parent=1 // pred_check
      _
    $region47: #{tpu_custom_call.1} parent=1 // pred_check_branch
      %47 = sbr.rel (0) target = $region49
    $region48: #{tpu_custom_call.1} parent=1 // pred_region
      _
    $region49: #{tpu_custom_call.1} parent=1 // pred_fallthru
      _
    // Predicated region
    $region50: #{tpu_custom_call.1} parent=1 // pred_check
      _
    $region51: #{tpu_custom_call.1} parent=1 // pred_check_branch
      %49 = sbr.rel (0) target = $region53
    $region52: #{tpu_custom_call.1} parent=1 // pred_region
      _
    $region53: #{tpu_custom_call.1} parent=1 // pred_fallthru
      _
    // Predicated region
    $region54: #{tpu_custom_call.1} parent=1 // pred_check
      _
    $region55: #{tpu_custom_call.1} parent=1 // pred_check_branch
      %51 = sbr.rel (0) target = $region57
    $region56: #{tpu_custom_call.1} parent=1 // pred_region
      _
    $region57: #{tpu_custom_call.1} parent=1 // pred_fallthru
      _
    // Predicated region
    $region58: #{tpu_custom_call.1} parent=1 // pred_check
      _
    $region59: #{tpu_custom_call.1} parent=1 // pred_check_branch
      %53 = sbr.rel (0) target = $region61
    $region60: #{tpu_custom_call.1} parent=1 // pred_region
      _
    $region61: #{tpu_custom_call.1} parent=1 // pred_fallthru
      _
    // Predicated region
    $region62: #{tpu_custom_call.1} parent=1 // pred_check
      _
    $region63: #{tpu_custom_call.1} parent=1 // pred_check_branch
      %55 = sbr.rel (0) target = $region65
    $region64: #{tpu_custom_call.1} parent=1 // pred_region
      _
    $region65: #{tpu_custom_call.1} parent=1 // pred_fallthru
      _
    // Predicated region
    $region66: #{tpu_custom_call.1} parent=1 // pred_check
      _
    $region67: #{tpu_custom_call.1} parent=1 // pred_check_branch
      %57 = sbr.rel (0) target = $region69
    $region68: #{tpu_custom_call.1} parent=1 // pred_region
      _
    $region69: #{tpu_custom_call.1} parent=1 // pred_fallthru
      _
    // Predicated region
    $region70: #{tpu_custom_call.1} parent=1 // pred_check
      _
    $region71: #{tpu_custom_call.1} parent=1 // pred_check_branch
      %59 = sbr.rel (0) target = $region73
    $region72: #{tpu_custom_call.1} parent=1 // pred_region
      _
    $region73: #{tpu_custom_call.1} parent=1 // pred_fallthru
      _
    %v60 = vld [vmem:[%s0] sm:$0xff]
    %v61 = vld [vmem:[%s0 + $0x8] sm:$0xff]
    %v62 = vld [vmem:[%s9] sm:$0xff]
    %v63 = vld [vmem:[%s9 + $0x8] sm:$0xff]
    %v64 = vld [vmem:[%s9 + $0x10] sm:$0xff]
    %v65 = vld [vmem:[%s9 + $0x18] sm:$0xff]
    %v66 = vld [vmem:[%s9 + $0x20] sm:$0xff]
    %v67 = vld [vmem:[%s9 + $0x28] sm:$0xff]
    %v68 = vld [vmem:[%s9 + $0x30] sm:$0xff]
    %v69 = vld [vmem:[%s9 + $0x38] sm:$0xff]
    %vm70 = vcmask 64512
    %v72 = vsel %vm70, %v62, 0
    %v75 = vsel %vm70, %v63, 0
    %v78 = vsel %vm70, %v64, 0
    %v81 = vsel %vm70, %v65, 0
    %v84 = vsel %vm70, %v66, 0
    %v87 = vsel %vm70, %v67, 0
    %v90 = vsel %vm70, %v68, 0
    %v93 = vsel %vm70, %v69, 0
    %95 = vmatprep.subr.mxu0 %v61
    %96 = vmatpush1.msra.mxu0 %v60
    %97 = vmatprep.subr.mxu0 0.0
    %98 = vmatpush1.msra.mxu0 0.0
    %99 = vmatprep.subr.mxu0 0.0
    %100 = vmatpush1.msra.mxu0 0.0
    %101 = vmatprep.subr.mxu0 0.0
    %102 = vmatpush1.msra.mxu0 0.0
    %103 = vmatprep.subr.mxu0 0.0
    %104 = vmatpush1.msra.mxu0 0.0
    %105 = vmatprep.subr.mxu0 0.0
    %106 = vmatpush1.msra.mxu0 0.0
    %107 = vmatprep.subr.mxu0 0.0
    %108 = vmatpush1.msra.mxu0 0.0
    %109 = vmatprep.subr.mxu0 0.0
    %110 = vmatpush1.msra.mxu0 0.0
    %111 = vmatprep.subr.mxu0 0.0
    %112 = vmatpush1.msra.mxu0 0.0
    %113 = vmatprep.subr.mxu0 0.0
    %114 = vmatpush1.msra.mxu0 0.0
    %115 = vmatprep.subr.mxu0 0.0
    %116 = vmatpush1.msra.mxu0 0.0
    %117 = vmatprep.subr.mxu0 0.0
    %118 = vmatpush1.msra.mxu0 0.0
    %119 = vmatprep.subr.mxu0 0.0
    %120 = vmatpush1.msra.mxu0 0.0
    %121 = vmatprep.subr.mxu0 0.0
    %122 = vmatpush1.msra.mxu0 0.0
    %123 = vmatprep.subr.mxu0 0.0
    %124 = vmatpush1.msra.mxu0 0.0
    %125 = vmatprep.subr.mxu0 0.0
    %126 = vmatpush1.msra.mxu0 0.0
    %127 = vmatprep.subr.mxu0 0.0
    %128 = vmatpush1.msra.mxu0 0.0
    %129 = vmatprep.subr.mxu0 0.0
    %130 = vmatpush1.msra.mxu0 0.0
    %131 = vmatprep.subr.mxu0 0.0
    %132 = vmatpush1.msra.mxu0 0.0
    %133 = vmatprep.subr.mxu0 0.0
    %134 = vmatpush1.msra.mxu0 0.0
    %135 = vmatprep.subr.mxu0 0.0
    %136 = vmatpush1.msra.mxu0 0.0
    %137 = vmatprep.subr.mxu0 0.0
    %138 = vmatpush1.msra.mxu0 0.0
    %139 = vmatprep.subr.mxu0 0.0
    %140 = vmatpush1.msra.mxu0 0.0
    %141 = vmatprep.subr.mxu0 0.0
    %142 = vmatpush1.msra.mxu0 0.0
    %143 = vmatprep.subr.mxu0 0.0
    %144 = vmatpush1.msra.mxu0 0.0
    %145 = vmatprep.subr.mxu0 0.0
    %146 = vmatpush1.msra.mxu0 0.0
    %147 = vmatprep.subr.mxu0 0.0
    %148 = vmatpush1.msra.mxu0 0.0
    %149 = vmatprep.subr.mxu0 0.0
    %150 = vmatpush1.msra.mxu0 0.0
    %151 = vmatprep.subr.mxu0 0.0
    %152 = vmatpush1.msra.mxu0 0.0
    %153 = vmatprep.subr.mxu0 0.0
    %154 = vmatpush1.msra.mxu0 0.0
    %155 = vmatprep.subr.mxu0 0.0
    %156 = vmatpush1.msra.mxu0 0.0
    %157 = vmatprep.subr.mxu0 0.0
    %158 = vmatpush1.msra.mxu0 0.0
    %159 = vmatprep.mubr.f32.mxu0 0.0
    %160 = vmatmul.mubr.f32.gmra.mrb[0].mxu0 %v72
    %v161 = vpop.f32.mrb[0].mxu0
    %v162 = vadd.f32 0.0, %v161
    %v163 = vpop.f32.mrb[0].mxu0
    %v164 = vadd.f32 0.0, %v163
    %165 = vmatprep.mubr.f32.mxu0 0.0
    %166 = vmatmul.mubr.f32.gmra.mrb[0].mxu0 %v75
    %v167 = vpop.f32.mrb[0].mxu0
    %v168 = vadd.f32 0.0, %v167
    %v169 = vpop.f32.mrb[0].mxu0
    %v170 = vadd.f32 0.0, %v169
    %171 = vmatprep.mubr.f32.mxu0 0.0
    %172 = vmatmul.mubr.f32.gmra.mrb[0].mxu0 %v78
    %v173 = vpop.f32.mrb[0].mxu0
    %v174 = vadd.f32 0.0, %v173
    %v175 = vpop.f32.mrb[0].mxu0
    %v176 = vadd.f32 0.0, %v175
    %177 = vmatprep.mubr.f32.mxu0 0.0
    %178 = vmatmul.mubr.f32.gmra.mrb[0].mxu0 %v81
    %v179 = vpop.f32.mrb[0].mxu0
    %v180 = vadd.f32 0.0, %v179
    %v181 = vpop.f32.mrb[0].mxu0
    %v182 = vadd.f32 0.0, %v181
    %183 = vmatprep.mubr.f32.mxu0 0.0
    %184 = vmatmul.mubr.f32.gmra.mrb[0].mxu0 %v84
    %v185 = vpop.f32.mrb[0].mxu0
    %v186 = vadd.f32 0.0, %v185
    %v187 = vpop.f32.mrb[0].mxu0
    %v188 = vadd.f32 0.0, %v187
    %189 = vmatprep.mubr.f32.mxu0 0.0
    %190 = vmatmul.mubr.f32.gmra.mrb[0].mxu0 %v87
    %v191 = vpop.f32.mrb[0].mxu0
    %v192 = vadd.f32 0.0, %v191
    %v193 = vpop.f32.mrb[0].mxu0
    %v194 = vadd.f32 0.0, %v193
    %195 = vmatprep.mubr.f32.mxu0 0.0
    %196 = vmatmul.mubr.f32.gmra.mrb[0].mxu0 %v90
    %v197 = vpop.f32.mrb[0].mxu0
    %v198 = vadd.f32 0.0, %v197
    %v199 = vpop.f32.mrb[0].mxu0
    %v200 = vadd.f32 0.0, %v199
    %201 = vmatprep.mubr.f32.mxu0 0.0
    %202 = vmatmul.mubr.f32.gmra.mrb[0].mxu0 %v93
    %v203 = vpop.f32.mrb[0].mxu0
    %v204 = vadd.f32 0.0, %v203
    %v205 = vpop.f32.mrb[0].mxu0
    %v206 = vadd.f32 0.0, %v205
    %207 = vdwg.mxu0
    %v208 = vld [vmem:[%s10] sm:$0xff]
    %v209 = vld [vmem:[%s10 + $0x8] sm:$0xff]
    %v210 = vld [vmem:[%s10 + $0x10] sm:$0xff]
    %v211 = vld [vmem:[%s10 + $0x18] sm:$0xff]
    %v212 = vld [vmem:[%s10 + $0x20] sm:$0xff]
    %v213 = vld [vmem:[%s10 + $0x28] sm:$0xff]
    %v214 = vld [vmem:[%s10 + $0x30] sm:$0xff]
    %v215 = vld [vmem:[%s10 + $0x38] sm:$0xff]
    %217 = vset.pattern.permute.xlu0 0
    %218 = vperm.xlu0 %217, %v208
    %v219 = vpop.permute.xlu0 %218
    %222 = vset.pattern.permute.xlu0 0
    %223 = vperm.xlu0 %222, %v209
    %v224 = vpop.permute.xlu0 %223
    %227 = vset.pattern.permute.xlu0 0
    %228 = vperm.xlu0 %227, %v210
    %v229 = vpop.permute.xlu0 %228
    %232 = vset.pattern.permute.xlu0 0
    %233 = vperm.xlu0 %232, %v211
    %v234 = vpop.permute.xlu0 %233
    %237 = vset.pattern.permute.xlu0 0
    %238 = vperm.xlu0 %237, %v212
    %v239 = vpop.permute.xlu0 %238
    %242 = vset.pattern.permute.xlu0 0
    %243 = vperm.xlu0 %242, %v213
    %v244 = vpop.permute.xlu0 %243
    %247 = vset.pattern.permute.xlu0 0
    %248 = vperm.xlu0 %247, %v214
    %v249 = vpop.permute.xlu0 %248
    %252 = vset.pattern.permute.xlu0 0
    %253 = vperm.xlu0 %252, %v215
    %v254 = vpop.permute.xlu0 %253
    %v256 = vadd.f32 %v162, %v219
    %v257 = vadd.f32 %v164, %v219
    %v258 = vadd.f32 %v168, %v224
    %v259 = vadd.f32 %v170, %v224
    %v260 = vadd.f32 %v174, %v229
    %v261 = vadd.f32 %v176, %v229
    %v262 = vadd.f32 %v180, %v234
    %v263 = vadd.f32 %v182, %v234
    %v264 = vadd.f32 %v186, %v239
    %v265 = vadd.f32 %v188, %v239
    %v266 = vadd.f32 %v192, %v244
    %v267 = vadd.f32 %v194, %v244
    %v268 = vadd.f32 %v198, %v249
    %v269 = vadd.f32 %v200, %v249
    %v270 = vadd.f32 %v204, %v254
    %v271 = vadd.f32 %v206, %v254
    %v272 = vadd.f32 %v256, %v258
    %v273 = vrot.slane %v272, 4
    %v274 = vadd.f32 %v272, %v273
    %v275 = vrot.slane %v274, 2
    %v276 = vadd.f32 %v274, %v275
    %v277 = vrot.slane %v276, 1
    %v278 = vadd.f32 %v276, %v277
    %v279 = vadd.f32 %v257, %v259
    %v280 = vrot.slane %v279, 4
    %v281 = vadd.f32 %v279, %v280
    %v282 = vrot.slane %v281, 2
    %v283 = vadd.f32 %v281, %v282
    %v284 = vrot.slane %v283, 1
    %v285 = vadd.f32 %v283, %v284
    %v286 = vadd.f32 %v260, %v262
    %v287 = vrot.slane %v286, 4
    %v288 = vadd.f32 %v286, %v287
    %v289 = vrot.slane %v288, 2
    %v290 = vadd.f32 %v288, %v289
    %v291 = vrot.slane %v290, 1
    %v292 = vadd.f32 %v290, %v291
    %v293 = vadd.f32 %v261, %v263
    %v294 = vrot.slane %v293, 4
    %v295 = vadd.f32 %v293, %v294
    %v296 = vrot.slane %v295, 2
    %v297 = vadd.f32 %v295, %v296
    %v298 = vrot.slane %v297, 1
    %v299 = vadd.f32 %v297, %v298
    %v300 = vadd.f32 %v264, %v266
    %v301 = vrot.slane %v300, 4
    %v302 = vadd.f32 %v300, %v301
    %v303 = vrot.slane %v302, 2
    %v304 = vadd.f32 %v302, %v303
    %v305 = vrot.slane %v304, 1
    %v306 = vadd.f32 %v304, %v305
    %v307 = vadd.f32 %v265, %v267
    %v308 = vrot.slane %v307, 4
    %v309 = vadd.f32 %v307, %v308
    %v310 = vrot.slane %v309, 2
    %v311 = vadd.f32 %v309, %v310
    %v312 = vrot.slane %v311, 1
    %v313 = vadd.f32 %v311, %v312
    %v314 = vadd.f32 %v268, %v270
    %v315 = vrot.slane %v314, 4
    %v316 = vadd.f32 %v314, %v315
    %v317 = vrot.slane %v316, 2
    %v318 = vadd.f32 %v316, %v317
    %v319 = vrot.slane %v318, 1
    %v320 = vadd.f32 %v318, %v319
    %v321 = vadd.f32 %v269, %v271
    %v322 = vrot.slane %v321, 4
    %v323 = vadd.f32 %v321, %v322
    %v324 = vrot.slane %v323, 2
    %v325 = vadd.f32 %v323, %v324
    %v326 = vrot.slane %v325, 1
    %v327 = vadd.f32 %v325, %v326
    %v328 = vrcp.pop 16.0
    %v329 = vmul.f32 %v278, %v328
    %v330 = vmul.f32 %v285, %v328
    %v331 = vmul.f32 %v292, %v328
    %v332 = vmul.f32 %v299, %v328
    %v333 = vmul.f32 %v306, %v328
    %v334 = vmul.f32 %v313, %v328
    %v335 = vmul.f32 %v320, %v328
    %v336 = vmul.f32 %v327, %v328
    %v337 = vsub.f32 %v256, %v329
    %v338 = vsub.f32 %v257, %v330
    %v339 = vsub.f32 %v258, %v329
    %v340 = vsub.f32 %v259, %v330
    %v341 = vsub.f32 %v260, %v331
    %v342 = vsub.f32 %v261, %v332
    %v343 = vsub.f32 %v262, %v331
    %v344 = vsub.f32 %v263, %v332
    %v345 = vsub.f32 %v264, %v333
    %v346 = vsub.f32 %v265, %v334
    %v347 = vsub.f32 %v266, %v333
    %v348 = vsub.f32 %v267, %v334
    %v349 = vsub.f32 %v268, %v335
    %v350 = vsub.f32 %v269, %v336
    %v351 = vsub.f32 %v270, %v335
    %v352 = vsub.f32 %v271, %v336
    %v353 = vmul.f32 %v337, %v337
    %v354 = vmul.f32 %v338, %v338
    %v355 = vmul.f32 %v339, %v339
    %v356 = vmul.f32 %v340, %v340
    %v357 = vmul.f32 %v341, %v341
    %v358 = vmul.f32 %v342, %v342
    %v359 = vmul.f32 %v343, %v343
    %v360 = vmul.f32 %v344, %v344
    %v361 = vmul.f32 %v345, %v345
    %v362 = vmul.f32 %v346, %v346
    %v363 = vmul.f32 %v347, %v347
    %v364 = vmul.f32 %v348, %v348
    %v365 = vmul.f32 %v349, %v349
    %v366 = vmul.f32 %v350, %v350
    %v367 = vmul.f32 %v351, %v351
    %v368 = vmul.f32 %v352, %v352
    %v369 = vadd.f32 %v353, %v355
    %v370 = vrot.slane %v369, 4
    %v371 = vadd.f32 %v369, %v370
    %v372 = vrot.slane %v371, 2
    %v373 = vadd.f32 %v371, %v372
    %v374 = vrot.slane %v373, 1
    %v375 = vadd.f32 %v373, %v374
    %v376 = vadd.f32 %v354, %v356
    %v377 = vrot.slane %v376, 4
    %v378 = vadd.f32 %v376, %v377
    %v379 = vrot.slane %v378, 2
    %v380 = vadd.f32 %v378, %v379
    %v381 = vrot.slane %v380, 1
    %v382 = vadd.f32 %v380, %v381
    %v383 = vadd.f32 %v357, %v359
    %v384 = vrot.slane %v383, 4
    %v385 = vadd.f32 %v383, %v384
    %v386 = vrot.slane %v385, 2
    %v387 = vadd.f32 %v385, %v386
    %v388 = vrot.slane %v387, 1
    %v389 = vadd.f32 %v387, %v388
    %v390 = vadd.f32 %v358, %v360
    %v391 = vrot.slane %v390, 4
    %v392 = vadd.f32 %v390, %v391
    %v393 = vrot.slane %v392, 2
    %v394 = vadd.f32 %v392, %v393
    %v395 = vrot.slane %v394, 1
    %v396 = vadd.f32 %v394, %v395
    %v397 = vadd.f32 %v361, %v363
    %v398 = vrot.slane %v397, 4
    %v399 = vadd.f32 %v397, %v398
    %v400 = vrot.slane %v399, 2
    %v401 = vadd.f32 %v399, %v400
    %v402 = vrot.slane %v401, 1
    %v403 = vadd.f32 %v401, %v402
    %v404 = vadd.f32 %v362, %v364
    %v405 = vrot.slane %v404, 4
    %v406 = vadd.f32 %v404, %v405
    %v407 = vrot.slane %v406, 2
    %v408 = vadd.f32 %v406, %v407
    %v409 = vrot.slane %v408, 1
    %v410 = vadd.f32 %v408, %v409
    %v411 = vadd.f32 %v365, %v367
    %v412 = vrot.slane %v411, 4
    %v413 = vadd.f32 %v411, %v412
    %v414 = vrot.slane %v413, 2
    %v415 = vadd.f32 %v413, %v414
    %v416 = vrot.slane %v415, 1
    %v417 = vadd.f32 %v415, %v416
    %v418 = vadd.f32 %v366, %v368
    %v419 = vrot.slane %v418, 4
    %v420 = vadd.f32 %v418, %v419
    %v421 = vrot.slane %v420, 2
    %v422 = vadd.f32 %v420, %v421
    %v423 = vrot.slane %v422, 1
    %v424 = vadd.f32 %v422, %v423
    %v425 = vmul.f32 %v375, %v328
    %v426 = vmul.f32 %v382, %v328
    %v427 = vmul.f32 %v389, %v328
    %v428 = vmul.f32 %v396, %v328
    %v429 = vmul.f32 %v403, %v328
    %v430 = vmul.f32 %v410, %v328
    %v431 = vmul.f32 %v417, %v328
    %v432 = vmul.f32 %v424, %v328
    %v433 = vadd.f32 %v425, 1e-05
    %v434 = vadd.f32 %v426, 1e-05
    %v435 = vadd.f32 %v427, 1e-05
    %v436 = vadd.f32 %v428, 1e-05
    %v437 = vadd.f32 %v429, 1e-05
    %v438 = vadd.f32 %v430, 1e-05
    %v439 = vadd.f32 %v431, 1e-05
    %v440 = vadd.f32 %v432, 1e-05
    %v441 = vrsqrt.pop %v433
    %v442 = vrsqrt.pop %v434
    %v443 = vrsqrt.pop %v435
    %v444 = vrsqrt.pop %v436
    %v445 = vrsqrt.pop %v437
    %v446 = vrsqrt.pop %v438
    %v447 = vrsqrt.pop %v439
    %v448 = vrsqrt.pop %v440
    %v449 = vmul.f32 %v337, %v441
    %v450 = vmul.f32 %v338, %v442
    %v451 = vmul.f32 %v339, %v441
    %v452 = vmul.f32 %v340, %v442
    %v453 = vmul.f32 %v341, %v443
    %v454 = vmul.f32 %v342, %v444
    %v455 = vmul.f32 %v343, %v443
    %v456 = vmul.f32 %v344, %v444
    %v457 = vmul.f32 %v345, %v445
    %v458 = vmul.f32 %v346, %v446
    %v459 = vmul.f32 %v347, %v445
    %v460 = vmul.f32 %v348, %v446
    %v461 = vmul.f32 %v349, %v447
    %v462 = vmul.f32 %v350, %v448
    %v463 = vmul.f32 %v351, %v447
    %v464 = vmul.f32 %v352, %v448
    %v465 = vld [vmem:[%s11] sm:$0xff]
    %v466 = vld [vmem:[%s11 + $0x8] sm:$0xff]
    %v467 = vld [vmem:[%s11 + $0x10] sm:$0xff]
    %v468 = vld [vmem:[%s11 + $0x18] sm:$0xff]
    %v469 = vld [vmem:[%s11 + $0x20] sm:$0xff]
    %v470 = vld [vmem:[%s11 + $0x28] sm:$0xff]
    %v471 = vld [vmem:[%s11 + $0x30] sm:$0xff]
    %v472 = vld [vmem:[%s11 + $0x38] sm:$0xff]
    %474 = vset.pattern.permute.xlu0 0
    %475 = vperm.xlu0 %474, %v465
    %v476 = vpop.permute.xlu0 %475
    %479 = vset.pattern.permute.xlu0 0
    %480 = vperm.xlu0 %479, %v466
    %v481 = vpop.permute.xlu0 %480
    %484 = vset.pattern.permute.xlu0 0
    %485 = vperm.xlu0 %484, %v467
    %v486 = vpop.permute.xlu0 %485
    %489 = vset.pattern.permute.xlu0 0
    %490 = vperm.xlu0 %489, %v468
    %v491 = vpop.permute.xlu0 %490
    %494 = vset.pattern.permute.xlu0 0
    %495 = vperm.xlu0 %494, %v469
    %v496 = vpop.permute.xlu0 %495
    %499 = vset.pattern.permute.xlu0 0
    %500 = vperm.xlu0 %499, %v470
    %v501 = vpop.permute.xlu0 %500
    %504 = vset.pattern.permute.xlu0 0
    %505 = vperm.xlu0 %504, %v471
    %v506 = vpop.permute.xlu0 %505
    %509 = vset.pattern.permute.xlu0 0
    %510 = vperm.xlu0 %509, %v472
    %v511 = vpop.permute.xlu0 %510
    %v513 = vmul.f32 %v449, %v476
    %v514 = vmul.f32 %v450, %v476
    %v515 = vmul.f32 %v451, %v481
    %v516 = vmul.f32 %v452, %v481
    %v517 = vmul.f32 %v453, %v486
    %v518 = vmul.f32 %v454, %v486
    %v519 = vmul.f32 %v455, %v491
    %v520 = vmul.f32 %v456, %v491
    %v521 = vmul.f32 %v457, %v496
    %v522 = vmul.f32 %v458, %v496
    %v523 = vmul.f32 %v459, %v501
    %v524 = vmul.f32 %v460, %v501
    %v525 = vmul.f32 %v461, %v506
    %v526 = vmul.f32 %v462, %v506
    %v527 = vmul.f32 %v463, %v511
    %v528 = vmul.f32 %v464, %v511
    %v529 = vld [vmem:[%s12] sm:$0xff]
    %v530 = vld [vmem:[%s12 + $0x8] sm:$0xff]
    %v531 = vld [vmem:[%s12 + $0x10] sm:$0xff]
    %v532 = vld [vmem:[%s12 + $0x18] sm:$0xff]
    %v533 = vld [vmem:[%s12 + $0x20] sm:$0xff]
    %v534 = vld [vmem:[%s12 + $0x28] sm:$0xff]
    %v535 = vld [vmem:[%s12 + $0x30] sm:$0xff]
    %v536 = vld [vmem:[%s12 + $0x38] sm:$0xff]
    %538 = vset.pattern.permute.xlu0 0
    %539 = vperm.xlu0 %538, %v529
    %v540 = vpop.permute.xlu0 %539
    %543 = vset.pattern.permute.xlu0 0
    %544 = vperm.xlu0 %543, %v530
    %v545 = vpop.permute.xlu0 %544
    %548 = vset.pattern.permute.xlu0 0
    %549 = vperm.xlu0 %548, %v531
    %v550 = vpop.permute.xlu0 %549
    %553 = vset.pattern.permute.xlu0 0
    %554 = vperm.xlu0 %553, %v532
    %v555 = vpop.permute.xlu0 %554
    %558 = vset.pattern.permute.xlu0 0
    %559 = vperm.xlu0 %558, %v533
    %v560 = vpop.permute.xlu0 %559
    %563 = vset.pattern.permute.xlu0 0
    %564 = vperm.xlu0 %563, %v534
    %v565 = vpop.permute.xlu0 %564
    %568 = vset.pattern.permute.xlu0 0
    %569 = vperm.xlu0 %568, %v535
    %v570 = vpop.permute.xlu0 %569
    %573 = vset.pattern.permute.xlu0 0
    %574 = vperm.xlu0 %573, %v536
    %v575 = vpop.permute.xlu0 %574
    %v577 = vadd.f32 %v513, %v540
    %v578 = vadd.f32 %v514, %v540
    %v579 = vadd.f32 %v515, %v545
    %v580 = vadd.f32 %v516, %v545
    %v581 = vadd.f32 %v517, %v550
    %v582 = vadd.f32 %v518, %v550
    %v583 = vadd.f32 %v519, %v555
    %v584 = vadd.f32 %v520, %v555
    %v585 = vadd.f32 %v521, %v560
    %v586 = vadd.f32 %v522, %v560
    %v587 = vadd.f32 %v523, %v565
    %v588 = vadd.f32 %v524, %v565
    %v589 = vadd.f32 %v525, %v570
    %v590 = vadd.f32 %v526, %v570
    %v591 = vadd.f32 %v527, %v575
    %v592 = vadd.f32 %v528, %v575
    %v593 = vmul.f32 %v577, %v577
    %v594 = vmul.f32 %v578, %v578
    %v595 = vmul.f32 %v579, %v579
    %v596 = vmul.f32 %v580, %v580
    %v597 = vmul.f32 %v581, %v581
    %v598 = vmul.f32 %v582, %v582
    %v599 = vmul.f32 %v583, %v583
    %v600 = vmul.f32 %v584, %v584
    %v601 = vmul.f32 %v585, %v585
    %v602 = vmul.f32 %v586, %v586
    %v603 = vmul.f32 %v587, %v587
    %v604 = vmul.f32 %v588, %v588
    %v605 = vmul.f32 %v589, %v589
    %v606 = vmul.f32 %v590, %v590
    %v607 = vmul.f32 %v591, %v591
    %v608 = vmul.f32 %v592, %v592
    %v609 = vmul.f32 %v577, %v593
    %v610 = vmul.f32 %v578, %v594
    %v611 = vmul.f32 %v579, %v595
    %v612 = vmul.f32 %v580, %v596
    %v613 = vmul.f32 %v581, %v597
    %v614 = vmul.f32 %v582, %v598
    %v615 = vmul.f32 %v583, %v599
    %v616 = vmul.f32 %v584, %v600
    %v617 = vmul.f32 %v585, %v601
    %v618 = vmul.f32 %v586, %v602
    %v619 = vmul.f32 %v587, %v603
    %v620 = vmul.f32 %v588, %v604
    %v621 = vmul.f32 %v589, %v605
    %v622 = vmul.f32 %v590, %v606
    %v623 = vmul.f32 %v591, %v607
    %v624 = vmul.f32 %v592, %v608
    %v625 = vmul.f32 %v609, 0.044715
    %v626 = vmul.f32 %v610, 0.044715
    %v627 = vmul.f32 %v611, 0.044715
    %v628 = vmul.f32 %v612, 0.044715
    %v629 = vmul.f32 %v613, 0.044715
    %v630 = vmul.f32 %v614, 0.044715
    %v631 = vmul.f32 %v615, 0.044715
    %v632 = vmul.f32 %v616, 0.044715
    %v633 = vmul.f32 %v617, 0.044715
    %v634 = vmul.f32 %v618, 0.044715
    %v635 = vmul.f32 %v619, 0.044715
    %v636 = vmul.f32 %v620, 0.044715
    %v637 = vmul.f32 %v621, 0.044715
    %v638 = vmul.f32 %v622, 0.044715
    %v639 = vmul.f32 %v623, 0.044715
    %v640 = vmul.f32 %v624, 0.044715
    %v641 = vadd.f32 %v577, %v625
    %v642 = vadd.f32 %v578, %v626
    %v643 = vadd.f32 %v579, %v627
    %v644 = vadd.f32 %v580, %v628
    %v645 = vadd.f32 %v581, %v629
    %v646 = vadd.f32 %v582, %v630
    %v647 = vadd.f32 %v583, %v631
    %v648 = vadd.f32 %v584, %v632
    %v649 = vadd.f32 %v585, %v633
    %v650 = vadd.f32 %v586, %v634
    %v651 = vadd.f32 %v587, %v635
    %v652 = vadd.f32 %v588, %v636
    %v653 = vadd.f32 %v589, %v637
    %v654 = vadd.f32 %v590, %v638
    %v655 = vadd.f32 %v591, %v639
    %v656 = vadd.f32 %v592, %v640
    %v657 = vmul.f32 %v641, 0.7978846
    %v658 = vmul.f32 %v642, 0.7978846
    %v659 = vmul.f32 %v643, 0.7978846
    %v660 = vmul.f32 %v644, 0.7978846
    %v661 = vmul.f32 %v645, 0.7978846
    %v662 = vmul.f32 %v646, 0.7978846
    %v663 = vmul.f32 %v647, 0.7978846
    %v664 = vmul.f32 %v648, 0.7978846
    %v665 = vmul.f32 %v649, 0.7978846
    %v666 = vmul.f32 %v650, 0.7978846
    %v667 = vmul.f32 %v651, 0.7978846
    %v668 = vmul.f32 %v652, 0.7978846
    %v669 = vmul.f32 %v653, 0.7978846
    %v670 = vmul.f32 %v654, 0.7978846
    %v671 = vmul.f32 %v655, 0.7978846
    %v672 = vmul.f32 %v656, 0.7978846
    %v673 = vtanh.pop %v657
    %v674 = vtanh.pop %v658
    %v675 = vtanh.pop %v659
    %v676 = vtanh.pop %v660
    %v677 = vtanh.pop %v661
    %v678 = vtanh.pop %v662
    %v679 = vtanh.pop %v663
    %v680 = vtanh.pop %v664
    %v681 = vtanh.pop %v665
    %v682 = vtanh.pop %v666
    %v683 = vtanh.pop %v667
    %v684 = vtanh.pop %v668
    %v685 = vtanh.pop %v669
    %v686 = vtanh.pop %v670
    %v687 = vtanh.pop %v671
    %v688 = vtanh.pop %v672
    %v689 = vadd.f32 %v673, 1.0
    %v690 = vadd.f32 %v674, 1.0
    %v691 = vadd.f32 %v675, 1.0
    %v692 = vadd.f32 %v676, 1.0
    %v693 = vadd.f32 %v677, 1.0
    %v694 = vadd.f32 %v678, 1.0
    %v695 = vadd.f32 %v679, 1.0
    %v696 = vadd.f32 %v680, 1.0
    %v697 = vadd.f32 %v681, 1.0
    %v698 = vadd.f32 %v682, 1.0
    %v699 = vadd.f32 %v683, 1.0
    %v700 = vadd.f32 %v684, 1.0
    %v701 = vadd.f32 %v685, 1.0
    %v702 = vadd.f32 %v686, 1.0
    %v703 = vadd.f32 %v687, 1.0
    %v704 = vadd.f32 %v688, 1.0
    %v705 = vmul.f32 %v689, 0.5
    %v706 = vmul.f32 %v690, 0.5
    %v707 = vmul.f32 %v691, 0.5
    %v708 = vmul.f32 %v692, 0.5
    %v709 = vmul.f32 %v693, 0.5
    %v710 = vmul.f32 %v694, 0.5
    %v711 = vmul.f32 %v695, 0.5
    %v712 = vmul.f32 %v696, 0.5
    %v713 = vmul.f32 %v697, 0.5
    %v714 = vmul.f32 %v698, 0.5
    %v715 = vmul.f32 %v699, 0.5
    %v716 = vmul.f32 %v700, 0.5
    %v717 = vmul.f32 %v701, 0.5
    %v718 = vmul.f32 %v702, 0.5
    %v719 = vmul.f32 %v703, 0.5
    %v720 = vmul.f32 %v704, 0.5
    %v721 = vmul.f32 %v577, %v705
    %v722 = vmul.f32 %v578, %v706
    %v723 = vmul.f32 %v579, %v707
    %v724 = vmul.f32 %v580, %v708
    %v725 = vmul.f32 %v581, %v709
    %v726 = vmul.f32 %v582, %v710
    %v727 = vmul.f32 %v583, %v711
    %v728 = vmul.f32 %v584, %v712
    %v729 = vmul.f32 %v585, %v713
    %v730 = vmul.f32 %v586, %v714
    %v731 = vmul.f32 %v587, %v715
    %v732 = vmul.f32 %v588, %v716
    %v733 = vmul.f32 %v589, %v717
    %v734 = vmul.f32 %v590, %v718
    %v735 = vmul.f32 %v591, %v719
    %v736 = vmul.f32 %v592, %v720
    %v737 = vld [vmem:[%s13] sm:$0xff]
    %v738 = vld [vmem:[%s13 + $0x8] sm:$0xff]
    %v739 = vld [vmem:[%s14] sm:$0xff]
    %v740 = vld [vmem:[%s14 + $0x8] sm:$0xff]
    %742 = vset.pattern.permute.xlu0 0
    %743 = vperm.xlu0 %742, %v739
    %v744 = vpop.permute.xlu0 %743
    %747 = vset.pattern.permute.xlu0 0
    %748 = vperm.xlu0 %747, %v740
    %v749 = vpop.permute.xlu0 %748
    %vm751 = vcmask 130048
    %v753 = vsel %vm751, %v737, 0
    %v756 = vsel %vm751, %v738, 0
    %758 = vmatprep.subr.mxu0 %v722
    %759 = vmatpush1.msra.mxu0 %v721
    %760 = vmatprep.subr.mxu0 %v724
    %761 = vmatpush1.msra.mxu0 %v723
    %762 = vmatprep.subr.mxu0 0.0
    %763 = vmatpush1.msra.mxu0 0.0
    %764 = vmatprep.subr.mxu0 0.0
    %765 = vmatpush1.msra.mxu0 0.0
    %766 = vmatprep.subr.mxu0 0.0
    %767 = vmatpush1.msra.mxu0 0.0
    %768 = vmatprep.subr.mxu0 0.0
    %769 = vmatpush1.msra.mxu0 0.0
    %770 = vmatprep.subr.mxu0 0.0
    %771 = vmatpush1.msra.mxu0 0.0
    %772 = vmatprep.subr.mxu0 0.0
    %773 = vmatpush1.msra.mxu0 0.0
    %774 = vmatprep.subr.mxu0 0.0
    %775 = vmatpush1.msra.mxu0 0.0
    %776 = vmatprep.subr.mxu0 0.0
    %777 = vmatpush1.msra.mxu0 0.0
    %778 = vmatprep.subr.mxu0 0.0
    %779 = vmatpush1.msra.mxu0 0.0
    %780 = vmatprep.subr.mxu0 0.0
    %781 = vmatpush1.msra.mxu0 0.0
    %782 = vmatprep.subr.mxu0 0.0
    %783 = vmatpush1.msra.mxu0 0.0
    %784 = vmatprep.subr.mxu0 0.0
    %785 = vmatpush1.msra.mxu0 0.0
    %786 = vmatprep.subr.mxu0 0.0
    %787 = vmatpush1.msra.mxu0 0.0
    %788 = vmatprep.subr.mxu0 0.0
    %789 = vmatpush1.msra.mxu0 0.0
    %790 = vmatprep.subr.mxu0 0.0
    %791 = vmatpush1.msra.mxu0 0.0
    %792 = vmatprep.subr.mxu0 0.0
    %793 = vmatpush1.msra.mxu0 0.0
    %794 = vmatprep.subr.mxu0 0.0
    %795 = vmatpush1.msra.mxu0 0.0
    %796 = vmatprep.subr.mxu0 0.0
    %797 = vmatpush1.msra.mxu0 0.0
    %798 = vmatprep.subr.mxu0 0.0
    %799 = vmatpush1.msra.mxu0 0.0
    %800 = vmatprep.subr.mxu0 0.0
    %801 = vmatpush1.msra.mxu0 0.0
    %802 = vmatprep.subr.mxu0 0.0
    %803 = vmatpush1.msra.mxu0 0.0
    %804 = vmatprep.subr.mxu0 0.0
    %805 = vmatpush1.msra.mxu0 0.0
    %806 = vmatprep.subr.mxu0 0.0
    %807 = vmatpush1.msra.mxu0 0.0
    %808 = vmatprep.subr.mxu0 0.0
    %809 = vmatpush1.msra.mxu0 0.0
    %810 = vmatprep.subr.mxu0 0.0
    %811 = vmatpush1.msra.mxu0 0.0
    %812 = vmatprep.subr.mxu0 0.0
    %813 = vmatpush1.msra.mxu0 0.0
    %814 = vmatprep.subr.mxu0 0.0
    %815 = vmatpush1.msra.mxu0 0.0
    %816 = vmatprep.subr.mxu0 0.0
    %817 = vmatpush1.msra.mxu0 0.0
    %818 = vmatprep.subr.mxu0 0.0
    %819 = vmatpush1.msra.mxu0 0.0
    %820 = vmatprep.subr.mxu0 0.0
    %821 = vmatpush1.msra.mxu0 0.0
    %822 = vmatprep.mubr.f32.mxu0 0.0
    %823 = vmatmul.mubr.f32.gmra.mrb[0].mxu0 %v753
    %v824 = vpop.f32.mrb[0].mxu0
    %v825 = vadd.f32 %v744, %v824
    %v826 = vpop.f32.mrb[0].mxu0
    %v827 = vadd.f32 %v744, %v826
    %828 = vmatprep.mubr.f32.mxu0 0.0
    %829 = vmatmul.mubr.f32.gmra.mrb[0].mxu0 %v756
    %v830 = vpop.f32.mrb[0].mxu0
    %v831 = vadd.f32 %v749, %v830
    %v832 = vpop.f32.mrb[0].mxu0
    %v833 = vadd.f32 %v749, %v832
    %834 = vdwg.mxu0
    %v835 = vadd.f32 %v825, %v831
    %v836 = vrot.slane %v835, 4
    %v837 = vadd.f32 %v835, %v836
    %v838 = vrot.slane %v837, 2
    %v839 = vadd.f32 %v837, %v838
    %v840 = vrot.slane %v839, 1
    %v841 = vadd.f32 %v839, %v840
    %v842 = vadd.f32 %v827, %v833
    %v843 = vrot.slane %v842, 4
    %v844 = vadd.f32 %v842, %v843
    %v845 = vrot.slane %v844, 2
    %v846 = vadd.f32 %v844, %v845
    %v847 = vrot.slane %v846, 1
    %v848 = vadd.f32 %v846, %v847
    %v849 = vmul.f32 %v841, %v328
    %v850 = vmul.f32 %v848, %v328
    %v851 = vsub.f32 %v825, %v849
    %v852 = vsub.f32 %v827, %v850
    %v853 = vsub.f32 %v831, %v849
    %v854 = vsub.f32 %v833, %v850
    %v855 = vmul.f32 %v851, %v851
    %v856 = vmul.f32 %v852, %v852
    %v857 = vmul.f32 %v853, %v853
    %v858 = vmul.f32 %v854, %v854
    %v859 = vadd.f32 %v855, %v857
    %v860 = vrot.slane %v859, 4
    %v861 = vadd.f32 %v859, %v860
    %v862 = vrot.slane %v861, 2
    %v863 = vadd.f32 %v861, %v862
    %v864 = vrot.slane %v863, 1
    %v865 = vadd.f32 %v863, %v864
    %v866 = vadd.f32 %v856, %v858
    %v867 = vrot.slane %v866, 4
    %v868 = vadd.f32 %v866, %v867
    %v869 = vrot.slane %v868, 2
    %v870 = vadd.f32 %v868, %v869
    %v871 = vrot.slane %v870, 1
    %v872 = vadd.f32 %v870, %v871
    %v873 = vmul.f32 %v865, %v328
    %v874 = vmul.f32 %v872, %v328
    %v875 = vadd.f32 %v873, 1e-05
    %v876 = vadd.f32 %v874, 1e-05
    %v877 = vrsqrt.pop %v875
    %v878 = vrsqrt.pop %v876
    %v879 = vmul.f32 %v851, %v877
    %v880 = vmul.f32 %v852, %v878
    %v881 = vmul.f32 %v853, %v877
    %v882 = vmul.f32 %v854, %v878
    %v883 = vld [vmem:[%s15] sm:$0xff]
    %v884 = vld [vmem:[%s15 + $0x8] sm:$0xff]
    %886 = vset.pattern.permute.xlu0 0
    %887 = vperm.xlu0 %886, %v883
    %v888 = vpop.permute.xlu0 %887
    %891 = vset.pattern.permute.xlu0 0
    %892 = vperm.xlu0 %891, %v884
    %v893 = vpop.permute.xlu0 %892
    %v895 = vmul.f32 %v879, %v888
    %v896 = vmul.f32 %v880, %v888
    %v897 = vmul.f32 %v881, %v893
    %v898 = vmul.f32 %v882, %v893
    %v899 = vld [vmem:[%s16] sm:$0xff]
    %v900 = vld [vmem:[%s16 + $0x8] sm:$0xff]
    %902 = vset.pattern.permute.xlu0 0
    %903 = vperm.xlu0 %902, %v899
    %v904 = vpop.permute.xlu0 %903
    %907 = vset.pattern.permute.xlu0 0
    %908 = vperm.xlu0 %907, %v900
    %v909 = vpop.permute.xlu0 %908
    %v911 = vadd.f32 %v895, %v904
    %v912 = vadd.f32 %v896, %v904
    %v913 = vadd.f32 %v897, %v909
    %v914 = vadd.f32 %v898, %v909
    %v915 = vmul.f32 %v911, %v911
    %v916 = vmul.f32 %v912, %v912
    %v917 = vmul.f32 %v913, %v913
    %v918 = vmul.f32 %v914, %v914
    %v919 = vmul.f32 %v911, %v915
    %v920 = vmul.f32 %v912, %v916
    %v921 = vmul.f32 %v913, %v917
    %v922 = vmul.f32 %v914, %v918
    %v923 = vmul.f32 %v919, 0.044715
    %v924 = vmul.f32 %v920, 0.044715
    %v925 = vmul.f32 %v921, 0.044715
    %v926 = vmul.f32 %v922, 0.044715
    %v927 = vadd.f32 %v911, %v923
    %v928 = vadd.f32 %v912, %v924
    %v929 = vadd.f32 %v913, %v925
    %v930 = vadd.f32 %v914, %v926
    %v931 = vmul.f32 %v927, 0.7978846
    %v932 = vmul.f32 %v928, 0.7978846
    %v933 = vmul.f32 %v929, 0.7978846
    %v934 = vmul.f32 %v930, 0.7978846
    %v935 = vtanh.pop %v931
    %v936 = vtanh.pop %v932
    %v937 = vtanh.pop %v933
    %v938 = vtanh.pop %v934
    %v939 = vadd.f32 %v935, 1.0
    %v940 = vadd.f32 %v936, 1.0
    %v941 = vadd.f32 %v937, 1.0
    %v942 = vadd.f32 %v938, 1.0
    %v943 = vmul.f32 %v939, 0.5
    %v944 = vmul.f32 %v940, 0.5
    %v945 = vmul.f32 %v941, 0.5
    %v946 = vmul.f32 %v942, 0.5
    %v947 = vmul.f32 %v911, %v943
    %v948 = vmul.f32 %v912, %v944
    %v949 = vmul.f32 %v913, %v945
    %v950 = vmul.f32 %v914, %v946
    %v951 = vld [vmem:[%s17] sm:$0xff]
    %v952 = vld [vmem:[%s17 + $0x8] sm:$0xff]
    %v953 = vld [vmem:[%s17 + $0x10] sm:$0xff]
    %v954 = vld [vmem:[%s17 + $0x18] sm:$0xff]
    %v956 = vsel %vm751, %v951, 0
    %v959 = vsel %vm751, %v952, 0
    %v962 = vsel %vm751, %v953, 0
    %v965 = vsel %vm751, %v954, 0
    %967 = vmatprep.subr.mxu0 %v948
    %968 = vmatpush1.msra.mxu0 %v947
    %969 = vmatprep.subr.mxu0 %v950
    %970 = vmatpush1.msra.mxu0 %v949
    %971 = vmatprep.subr.mxu0 0.0
    %972 = vmatpush1.msra.mxu0 0.0
    %973 = vmatprep.subr.mxu0 0.0
    %974 = vmatpush1.msra.mxu0 0.0
    %975 = vmatprep.subr.mxu0 0.0
    %976 = vmatpush1.msra.mxu0 0.0
    %977 = vmatprep.subr.mxu0 0.0
    %978 = vmatpush1.msra.mxu0 0.0
    %979 = vmatprep.subr.mxu0 0.0
    %980 = vmatpush1.msra.mxu0 0.0
    %981 = vmatprep.subr.mxu0 0.0
    %982 = vmatpush1.msra.mxu0 0.0
    %983 = vmatprep.subr.mxu0 0.0
    %984 = vmatpush1.msra.mxu0 0.0
    %985 = vmatprep.subr.mxu0 0.0
    %986 = vmatpush1.msra.mxu0 0.0
    %987 = vmatprep.subr.mxu0 0.0
    %988 = vmatpush1.msra.mxu0 0.0
    %989 = vmatprep.subr.mxu0 0.0
    %990 = vmatpush1.msra.mxu0 0.0
    %991 = vmatprep.subr.mxu0 0.0
    %992 = vmatpush1.msra.mxu0 0.0
    %993 = vmatprep.subr.mxu0 0.0
    %994 = vmatpush1.msra.mxu0 0.0
    %995 = vmatprep.subr.mxu0 0.0
    %996 = vmatpush1.msra.mxu0 0.0
    %997 = vmatprep.subr.mxu0 0.0
    %998 = vmatpush1.msra.mxu0 0.0
    %999 = vmatprep.subr.mxu0 0.0
    %1000 = vmatpush1.msra.mxu0 0.0
    %1001 = vmatprep.subr.mxu0 0.0
    %1002 = vmatpush1.msra.mxu0 0.0
    %1003 = vmatprep.subr.mxu0 0.0
    %1004 = vmatpush1.msra.mxu0 0.0
    %1005 = vmatprep.subr.mxu0 0.0
    %1006 = vmatpush1.msra.mxu0 0.0
    %1007 = vmatprep.subr.mxu0 0.0
    %1008 = vmatpush1.msra.mxu0 0.0
    %1009 = vmatprep.subr.mxu0 0.0
    %1010 = vmatpush1.msra.mxu0 0.0
    %1011 = vmatprep.subr.mxu0 0.0
    %1012 = vmatpush1.msra.mxu0 0.0
    %1013 = vmatprep.subr.mxu0 0.0
    %1014 = vmatpush1.msra.mxu0 0.0
    %1015 = vmatprep.subr.mxu0 0.0
    %1016 = vmatpush1.msra.mxu0 0.0
    %1017 = vmatprep.subr.mxu0 0.0
    %1018 = vmatpush1.msra.mxu0 0.0
    %1019 = vmatprep.subr.mxu0 0.0
    %1020 = vmatpush1.msra.mxu0 0.0
    %1021 = vmatprep.subr.mxu0 0.0
    %1022 = vmatpush1.msra.mxu0 0.0
    %1023 = vmatprep.subr.mxu0 0.0
    %1024 = vmatpush1.msra.mxu0 0.0
    %1025 = vmatprep.subr.mxu0 0.0
    %1026 = vmatpush1.msra.mxu0 0.0
    %1027 = vmatprep.subr.mxu0 0.0
    %1028 = vmatpush1.msra.mxu0 0.0
    %1029 = vmatprep.subr.mxu0 0.0
    %1030 = vmatpush1.msra.mxu0 0.0
    %1031 = vmatprep.mubr.f32.mxu0 0.0
    %1032 = vmatmul.mubr.f32.gmra.mrb[0].mxu0 %v956
    %v1033 = vpop.f32.mrb[0].mxu0
    %v1034 = vadd.f32 0.0, %v1033
    %v1035 = vpop.f32.mrb[0].mxu0
    %v1036 = vadd.f32 0.0, %v1035
    %1037 = vmatprep.mubr.f32.mxu0 0.0
    %1038 = vmatmul.mubr.f32.gmra.mrb[0].mxu0 %v959
    %v1039 = vpop.f32.mrb[0].mxu0
    %v1040 = vadd.f32 0.0, %v1039
    %v1041 = vpop.f32.mrb[0].mxu0
    %v1042 = vadd.f32 0.0, %v1041
    %1043 = vmatprep.mubr.f32.mxu0 0.0
    %1044 = vmatmul.mubr.f32.gmra.mrb[0].mxu0 %v962
    %v1045 = vpop.f32.mrb[0].mxu0
    %v1046 = vadd.f32 0.0, %v1045
    %v1047 = vpop.f32.mrb[0].mxu0
    %v1048 = vadd.f32 0.0, %v1047
    %1049 = vmatprep.mubr.f32.mxu0 0.0
    %1050 = vmatmul.mubr.f32.gmra.mrb[0].mxu0 %v965
    %v1051 = vpop.f32.mrb[0].mxu0
    %v1052 = vadd.f32 0.0, %v1051
    %v1053 = vpop.f32.mrb[0].mxu0
    %v1054 = vadd.f32 0.0, %v1053
    %1055 = vdwg.mxu0
    %v1056 = vld [vmem:[%s1] sm:$0xff]
    %v1057 = vld [vmem:[%s1 + $0x8] sm:$0xff]
    %v1058 = vld [vmem:[%s3] sm:$0x3]
    %v1060 = vlaneseq
    %v1061 = vshrl.u32 %v1060, 7
    %v1062 = vsub.s32 0, %v1061
    %v1063 = vrot.slane %v1058, %v1062
    %v1064 = vlaneseq
    %v1065 = vshrl.u32 %v1064, 7
    %v1066 = vsub.s32 1, %v1065
    %v1067 = vrot.slane %v1058, %v1066
    %v1070 = vmul.f32 %v1063, %v1056
    %v1071 = vmul.f32 %v1067, %v1057
    %v1072 = vmul.f32 %v1070, %v1034
    %v1073 = vmul.f32 %v1071, %v1036
    %v1074 = vrot.slane %v1072, 4
    %v1075 = vadd.f32 %v1072, %v1074
    %v1076 = vrot.slane %v1075, 2
    %v1077 = vadd.f32 %v1075, %v1076
    %v1078 = vrot.slane %v1077, 1
    %v1079 = vadd.f32 %v1077, %v1078
    %v1080 = vrot.slane %v1073, 4
    %v1081 = vadd.f32 %v1073, %v1080
    %v1082 = vrot.slane %v1081, 2
    %v1083 = vadd.f32 %v1081, %v1082
    %v1084 = vrot.slane %v1083, 1
    %v1085 = vadd.f32 %v1083, %v1084
    %v1086 = vmul.f32 %v1070, %v1040
    %v1087 = vmul.f32 %v1071, %v1042
    %v1088 = vrot.slane %v1086, 4
    %v1089 = vadd.f32 %v1086, %v1088
    %v1090 = vrot.slane %v1089, 2
    %v1091 = vadd.f32 %v1089, %v1090
    %v1092 = vrot.slane %v1091, 1
    %v1093 = vadd.f32 %v1091, %v1092
    %v1094 = vrot.slane %v1087, 4
    %v1095 = vadd.f32 %v1087, %v1094
    %v1096 = vrot.slane %v1095, 2
    %v1097 = vadd.f32 %v1095, %v1096
    %v1098 = vrot.slane %v1097, 1
    %v1099 = vadd.f32 %v1097, %v1098
    %v1100 = vmul.f32 %v1070, %v1046
    %v1101 = vmul.f32 %v1071, %v1048
    %v1102 = vrot.slane %v1100, 4
    %v1103 = vadd.f32 %v1100, %v1102
    %v1104 = vrot.slane %v1103, 2
    %v1105 = vadd.f32 %v1103, %v1104
    %v1106 = vrot.slane %v1105, 1
    %v1107 = vadd.f32 %v1105, %v1106
    %v1108 = vrot.slane %v1101, 4
    %v1109 = vadd.f32 %v1101, %v1108
    %v1110 = vrot.slane %v1109, 2
    %v1111 = vadd.f32 %v1109, %v1110
    %v1112 = vrot.slane %v1111, 1
    %v1113 = vadd.f32 %v1111, %v1112
    %v1114 = vmul.f32 %v1070, %v1052
    %v1115 = vmul.f32 %v1071, %v1054
    %v1116 = vrot.slane %v1114, 4
    %v1117 = vadd.f32 %v1114, %v1116
    %v1118 = vrot.slane %v1117, 2
    %v1119 = vadd.f32 %v1117, %v1118
    %v1120 = vrot.slane %v1119, 1
    %v1121 = vadd.f32 %v1119, %v1120
    %v1122 = vrot.slane %v1115, 4
    %v1123 = vadd.f32 %v1115, %v1122
    %v1124 = vrot.slane %v1123, 2
    %v1125 = vadd.f32 %v1123, %v1124
    %v1126 = vrot.slane %v1125, 1
    %v1127 = vadd.f32 %v1125, %v1126
    %s1128 = scalar_lea.vmem %s13, 16
    %v1129 = vld [vmem:[%s1128] sm:$0xff]
    %v1130 = vld [vmem:[%s1128 + $0x8] sm:$0xff]
    %s1131 = scalar_lea.vmem %s14, 16
    %v1132 = vld [vmem:[%s1131] sm:$0xff]
    %v1133 = vld [vmem:[%s1131 + $0x8] sm:$0xff]
    %1135 = vset.pattern.permute.xlu0 0
    %1136 = vperm.xlu0 %1135, %v1132
    %v1137 = vpop.permute.xlu0 %1136
    %1140 = vset.pattern.permute.xlu0 0
    %1141 = vperm.xlu0 %1140, %v1133
    %v1142 = vpop.permute.xlu0 %1141
    %v1145 = vsel %vm751, %v1129, 0
    %v1148 = vsel %vm751, %v1130, 0
    %1150 = vmatprep.subr.mxu0 %v726
    %1151 = vmatpush1.msra.mxu0 %v725
    %1152 = vmatprep.subr.mxu0 %v728
    %1153 = vmatpush1.msra.mxu0 %v727
    %1154 = vmatprep.subr.mxu0 0.0
    %1155 = vmatpush1.msra.mxu0 0.0
    %1156 = vmatprep.subr.mxu0 0.0
    %1157 = vmatpush1.msra.mxu0 0.0
    %1158 = vmatprep.subr.mxu0 0.0
    %1159 = vmatpush1.msra.mxu0 0.0
    %1160 = vmatprep.subr.mxu0 0.0
    %1161 = vmatpush1.msra.mxu0 0.0
    %1162 = vmatprep.subr.mxu0 0.0
    %1163 = vmatpush1.msra.mxu0 0.0
    %1164 = vmatprep.subr.mxu0 0.0
    %1165 = vmatpush1.msra.mxu0 0.0
    %1166 = vmatprep.subr.mxu0 0.0
    %1167 = vmatpush1.msra.mxu0 0.0
    %1168 = vmatprep.subr.mxu0 0.0
    %1169 = vmatpush1.msra.mxu0 0.0
    %1170 = vmatprep.subr.mxu0 0.0
    %1171 = vmatpush1.msra.mxu0 0.0
    %1172 = vmatprep.subr.mxu0 0.0
    %1173 = vmatpush1.msra.mxu0 0.0
    %1174 = vmatprep.subr.mxu0 0.0
    %1175 = vmatpush1.msra.mxu0 0.0
    %1176 = vmatprep.subr.mxu0 0.0
    %1177 = vmatpush1.msra.mxu0 0.0
    %1178 = vmatprep.subr.mxu0 0.0
    %1179 = vmatpush1.msra.mxu0 0.0
    %1180 = vmatprep.subr.mxu0 0.0
    %1181 = vmatpush1.msra.mxu0 0.0
    %1182 = vmatprep.subr.mxu0 0.0
    %1183 = vmatpush1.msra.mxu0 0.0
    %1184 = vmatprep.subr.mxu0 0.0
    %1185 = vmatpush1.msra.mxu0 0.0
    %1186 = vmatprep.subr.mxu0 0.0
    %1187 = vmatpush1.msra.mxu0 0.0
    %1188 = vmatprep.subr.mxu0 0.0
    %1189 = vmatpush1.msra.mxu0 0.0
    %1190 = vmatprep.subr.mxu0 0.0
    %1191 = vmatpush1.msra.mxu0 0.0
    %1192 = vmatprep.subr.mxu0 0.0
    %1193 = vmatpush1.msra.mxu0 0.0
    %1194 = vmatprep.subr.mxu0 0.0
    %1195 = vmatpush1.msra.mxu0 0.0
    %1196 = vmatprep.subr.mxu0 0.0
    %1197 = vmatpush1.msra.mxu0 0.0
    %1198 = vmatprep.subr.mxu0 0.0
    %1199 = vmatpush1.msra.mxu0 0.0
    %1200 = vmatprep.subr.mxu0 0.0
    %1201 = vmatpush1.msra.mxu0 0.0
    %1202 = vmatprep.subr.mxu0 0.0
    %1203 = vmatpush1.msra.mxu0 0.0
    %1204 = vmatprep.subr.mxu0 0.0
    %1205 = vmatpush1.msra.mxu0 0.0
    %1206 = vmatprep.subr.mxu0 0.0
    %1207 = vmatpush1.msra.mxu0 0.0
    %1208 = vmatprep.subr.mxu0 0.0
    %1209 = vmatpush1.msra.mxu0 0.0
    %1210 = vmatprep.subr.mxu0 0.0
    %1211 = vmatpush1.msra.mxu0 0.0
    %1212 = vmatprep.subr.mxu0 0.0
    %1213 = vmatpush1.msra.mxu0 0.0
    %1214 = vmatprep.mubr.f32.mxu0 0.0
    %1215 = vmatmul.mubr.f32.gmra.mrb[0].mxu0 %v1145
    %v1216 = vpop.f32.mrb[0].mxu0
    %v1217 = vadd.f32 %v1137, %v1216
    %v1218 = vpop.f32.mrb[0].mxu0
    %v1219 = vadd.f32 %v1137, %v1218
    %1220 = vmatprep.mubr.f32.mxu0 0.0
    %1221 = vmatmul.mubr.f32.gmra.mrb[0].mxu0 %v1148
    %v1222 = vpop.f32.mrb[0].mxu0
    %v1223 = vadd.f32 %v1142, %v1222
    %v1224 = vpop.f32.mrb[0].mxu0
    %v1225 = vadd.f32 %v1142, %v1224
    %1226 = vdwg.mxu0
    %v1227 = vadd.f32 %v1217, %v1223
    %v1228 = vrot.slane %v1227, 4
    %v1229 = vadd.f32 %v1227, %v1228
    %v1230 = vrot.slane %v1229, 2
    %v1231 = vadd.f32 %v1229, %v1230
    %v1232 = vrot.slane %v1231, 1
    %v1233 = vadd.f32 %v1231, %v1232
    %v1234 = vadd.f32 %v1219, %v1225
    %v1235 = vrot.slane %v1234, 4
    %v1236 = vadd.f32 %v1234, %v1235
    %v1237 = vrot.slane %v1236, 2
    %v1238 = vadd.f32 %v1236, %v1237
    %v1239 = vrot.slane %v1238, 1
    %v1240 = vadd.f32 %v1238, %v1239
    %v1241 = vmul.f32 %v1233, %v328
    %v1242 = vmul.f32 %v1240, %v328
    %v1243 = vsub.f32 %v1217, %v1241
    %v1244 = vsub.f32 %v1219, %v1242
    %v1245 = vsub.f32 %v1223, %v1241
    %v1246 = vsub.f32 %v1225, %v1242
    %v1247 = vmul.f32 %v1243, %v1243
    %v1248 = vmul.f32 %v1244, %v1244
    %v1249 = vmul.f32 %v1245, %v1245
    %v1250 = vmul.f32 %v1246, %v1246
    %v1251 = vadd.f32 %v1247, %v1249
    %v1252 = vrot.slane %v1251, 4
    %v1253 = vadd.f32 %v1251, %v1252
    %v1254 = vrot.slane %v1253, 2
    %v1255 = vadd.f32 %v1253, %v1254
    %v1256 = vrot.slane %v1255, 1
    %v1257 = vadd.f32 %v1255, %v1256
    %v1258 = vadd.f32 %v1248, %v1250
    %v1259 = vrot.slane %v1258, 4
    %v1260 = vadd.f32 %v1258, %v1259
    %v1261 = vrot.slane %v1260, 2
    %v1262 = vadd.f32 %v1260, %v1261
    %v1263 = vrot.slane %v1262, 1
    %v1264 = vadd.f32 %v1262, %v1263
    %v1265 = vmul.f32 %v1257, %v328
    %v1266 = vmul.f32 %v1264, %v328
    %v1267 = vadd.f32 %v1265, 1e-05
    %v1268 = vadd.f32 %v1266, 1e-05
    %v1269 = vrsqrt.pop %v1267
    %v1270 = vrsqrt.pop %v1268
    %v1271 = vmul.f32 %v1243, %v1269
    %v1272 = vmul.f32 %v1244, %v1270
    %v1273 = vmul.f32 %v1245, %v1269
    %v1274 = vmul.f32 %v1246, %v1270
    %s1275 = scalar_lea.vmem %s15, 16
    %v1276 = vld [vmem:[%s1275] sm:$0xff]
    %v1277 = vld [vmem:[%s1275 + $0x8] sm:$0xff]
    %1279 = vset.pattern.permute.xlu0 0
    %1280 = vperm.xlu0 %1279, %v1276
    %v1281 = vpop.permute.xlu0 %1280
    %1284 = vset.pattern.permute.xlu0 0
    %1285 = vperm.xlu0 %1284, %v1277
    %v1286 = vpop.permute.xlu0 %1285
    %v1288 = vmul.f32 %v1271, %v1281
    %v1289 = vmul.f32 %v1272, %v1281
    %v1290 = vmul.f32 %v1273, %v1286
    %v1291 = vmul.f32 %v1274, %v1286
    %s1292 = scalar_lea.vmem %s16, 16
    %v1293 = vld [vmem:[%s1292] sm:$0xff]
    %v1294 = vld [vmem:[%s1292 + $0x8] sm:$0xff]
    %1296 = vset.pattern.permute.xlu0 0
    %1297 = vperm.xlu0 %1296, %v1293
    %v1298 = vpop.permute.xlu0 %1297
    %1301 = vset.pattern.permute.xlu0 0
    %1302 = vperm.xlu0 %1301, %v1294
    %v1303 = vpop.permute.xlu0 %1302
    %v1305 = vadd.f32 %v1288, %v1298
    %v1306 = vadd.f32 %v1289, %v1298
    %v1307 = vadd.f32 %v1290, %v1303
    %v1308 = vadd.f32 %v1291, %v1303
    %v1309 = vmul.f32 %v1305, %v1305
    %v1310 = vmul.f32 %v1306, %v1306
    %v1311 = vmul.f32 %v1307, %v1307
    %v1312 = vmul.f32 %v1308, %v1308
    %v1313 = vmul.f32 %v1305, %v1309
    %v1314 = vmul.f32 %v1306, %v1310
    %v1315 = vmul.f32 %v1307, %v1311
    %v1316 = vmul.f32 %v1308, %v1312
    %v1317 = vmul.f32 %v1313, 0.044715
    %v1318 = vmul.f32 %v1314, 0.044715
    %v1319 = vmul.f32 %v1315, 0.044715
    %v1320 = vmul.f32 %v1316, 0.044715
    %v1321 = vadd.f32 %v1305, %v1317
    %v1322 = vadd.f32 %v1306, %v1318
    %v1323 = vadd.f32 %v1307, %v1319
    %v1324 = vadd.f32 %v1308, %v1320
    %v1325 = vmul.f32 %v1321, 0.7978846
    %v1326 = vmul.f32 %v1322, 0.7978846
    %v1327 = vmul.f32 %v1323, 0.7978846
    %v1328 = vmul.f32 %v1324, 0.7978846
    %v1329 = vtanh.pop %v1325
    %v1330 = vtanh.pop %v1326
    %v1331 = vtanh.pop %v1327
    %v1332 = vtanh.pop %v1328
    %v1333 = vadd.f32 %v1329, 1.0
    %v1334 = vadd.f32 %v1330, 1.0
    %v1335 = vadd.f32 %v1331, 1.0
    %v1336 = vadd.f32 %v1332, 1.0
    %v1337 = vmul.f32 %v1333, 0.5
    %v1338 = vmul.f32 %v1334, 0.5
    %v1339 = vmul.f32 %v1335, 0.5
    %v1340 = vmul.f32 %v1336, 0.5
    %v1341 = vmul.f32 %v1305, %v1337
    %v1342 = vmul.f32 %v1306, %v1338
    %v1343 = vmul.f32 %v1307, %v1339
    %v1344 = vmul.f32 %v1308, %v1340
    %v1345 = vld [vmem:[%s17 + $0x20] sm:$0xff]
    %v1346 = vld [vmem:[%s17 + $0x28] sm:$0xff]
    %v1347 = vld [vmem:[%s17 + $0x30] sm:$0xff]
    %v1348 = vld [vmem:[%s17 + $0x38] sm:$0xff]
    %v1350 = vsel %vm751, %v1345, 0
    %v1353 = vsel %vm751, %v1346, 0
    %v1356 = vsel %vm751, %v1347, 0
    %v1359 = vsel %vm751, %v1348, 0
    %1361 = vmatprep.subr.mxu0 %v1342
    %1362 = vmatpush1.msra.mxu0 %v1341
    %1363 = vmatprep.subr.mxu0 %v1344
    %1364 = vmatpush1.msra.mxu0 %v1343
    %1365 = vmatprep.subr.mxu0 0.0
    %1366 = vmatpush1.msra.mxu0 0.0
    %1367 = vmatprep.subr.mxu0 0.0
    %1368 = vmatpush1.msra.mxu0 0.0
    %1369 = vmatprep.subr.mxu0 0.0
    %1370 = vmatpush1.msra.mxu0 0.0
    %1371 = vmatprep.subr.mxu0 0.0
    %1372 = vmatpush1.msra.mxu0 0.0
    %1373 = vmatprep.subr.mxu0 0.0
    %1374 = vmatpush1.msra.mxu0 0.0
    %1375 = vmatprep.subr.mxu0 0.0
    %1376 = vmatpush1.msra.mxu0 0.0
    %1377 = vmatprep.subr.mxu0 0.0
    %1378 = vmatpush1.msra.mxu0 0.0
    %1379 = vmatprep.subr.mxu0 0.0
    %1380 = vmatpush1.msra.mxu0 0.0
    %1381 = vmatprep.subr.mxu0 0.0
    %1382 = vmatpush1.msra.mxu0 0.0
    %1383 = vmatprep.subr.mxu0 0.0
    %1384 = vmatpush1.msra.mxu0 0.0
    %1385 = vmatprep.subr.mxu0 0.0
    %1386 = vmatpush1.msra.mxu0 0.0
    %1387 = vmatprep.subr.mxu0 0.0
    %1388 = vmatpush1.msra.mxu0 0.0
    %1389 = vmatprep.subr.mxu0 0.0
    %1390 = vmatpush1.msra.mxu0 0.0
    %1391 = vmatprep.subr.mxu0 0.0
    %1392 = vmatpush1.msra.mxu0 0.0
    %1393 = vmatprep.subr.mxu0 0.0
    %1394 = vmatpush1.msra.mxu0 0.0
    %1395 = vmatprep.subr.mxu0 0.0
    %1396 = vmatpush1.msra.mxu0 0.0
    %1397 = vmatprep.subr.mxu0 0.0
    %1398 = vmatpush1.msra.mxu0 0.0
    %1399 = vmatprep.subr.mxu0 0.0
    %1400 = vmatpush1.msra.mxu0 0.0
    %1401 = vmatprep.subr.mxu0 0.0
    %1402 = vmatpush1.msra.mxu0 0.0
    %1403 = vmatprep.subr.mxu0 0.0
    %1404 = vmatpush1.msra.mxu0 0.0
    %1405 = vmatprep.subr.mxu0 0.0
    %1406 = vmatpush1.msra.mxu0 0.0
    %1407 = vmatprep.subr.mxu0 0.0
    %1408 = vmatpush1.msra.mxu0 0.0
    %1409 = vmatprep.subr.mxu0 0.0
    %1410 = vmatpush1.msra.mxu0 0.0
    %1411 = vmatprep.subr.mxu0 0.0
    %1412 = vmatpush1.msra.mxu0 0.0
    %1413 = vmatprep.subr.mxu0 0.0
    %1414 = vmatpush1.msra.mxu0 0.0
    %1415 = vmatprep.subr.mxu0 0.0
    %1416 = vmatpush1.msra.mxu0 0.0
    %1417 = vmatprep.subr.mxu0 0.0
    %1418 = vmatpush1.msra.mxu0 0.0
    %1419 = vmatprep.subr.mxu0 0.0
    %1420 = vmatpush1.msra.mxu0 0.0
    %1421 = vmatprep.subr.mxu0 0.0
    %1422 = vmatpush1.msra.mxu0 0.0
    %1423 = vmatprep.subr.mxu0 0.0
    %1424 = vmatpush1.msra.mxu0 0.0
    %1425 = vmatprep.mubr.f32.mxu0 0.0
    %1426 = vmatmul.mubr.f32.gmra.mrb[0].mxu0 %v1350
    %v1427 = vpop.f32.mrb[0].mxu0
    %v1428 = vadd.f32 0.0, %v1427
    %v1429 = vpop.f32.mrb[0].mxu0
    %v1430 = vadd.f32 0.0, %v1429
    %1431 = vmatprep.mubr.f32.mxu0 0.0
    %1432 = vmatmul.mubr.f32.gmra.mrb[0].mxu0 %v1353
    %v1433 = vpop.f32.mrb[0].mxu0
    %v1434 = vadd.f32 0.0, %v1433
    %v1435 = vpop.f32.mrb[0].mxu0
    %v1436 = vadd.f32 0.0, %v1435
    %1437 = vmatprep.mubr.f32.mxu0 0.0
    %1438 = vmatmul.mubr.f32.gmra.mrb[0].mxu0 %v1356
    %v1439 = vpop.f32.mrb[0].mxu0
    %v1440 = vadd.f32 0.0, %v1439
    %v1441 = vpop.f32.mrb[0].mxu0
    %v1442 = vadd.f32 0.0, %v1441
    %1443 = vmatprep.mubr.f32.mxu0 0.0
    %1444 = vmatmul.mubr.f32.gmra.mrb[0].mxu0 %v1359
    %v1445 = vpop.f32.mrb[0].mxu0
    %v1446 = vadd.f32 0.0, %v1445
    %v1447 = vpop.f32.mrb[0].mxu0
    %v1448 = vadd.f32 0.0, %v1447
    %1449 = vdwg.mxu0
    %v1450 = vld [vmem:[%s2] sm:$0xff]
    %v1451 = vld [vmem:[%s2 + $0x8] sm:$0xff]
    %v1452 = vld [vmem:[%s2 + $0x10] sm:$0xff]
    %v1453 = vld [vmem:[%s2 + $0x18] sm:$0xff]
    %v1454 = vld [vmem:[%s2 + $0x20] sm:$0xff]
    %v1455 = vld [vmem:[%s2 + $0x28] sm:$0xff]
    %v1456 = vld [vmem:[%s4] sm:$0x3]
    %v1457 = vld [vmem:[%s4 + $0x2] sm:$0x3]
    %v1458 = vld [vmem:[%s4 + $0x4] sm:$0x3]
    %v1460 = vlaneseq
    %v1461 = vshrl.u32 %v1460, 7
    %v1462 = vsub.s32 0, %v1461
    %v1463 = vrot.slane %v1456, %v1462
    %v1464 = vlaneseq
    %v1465 = vshrl.u32 %v1464, 7
    %v1466 = vsub.s32 1, %v1465
    %v1467 = vrot.slane %v1456, %v1466
    %v1470 = vmul.f32 %v1463, %v1450
    %v1471 = vmul.f32 %v1467, %v1451
    %v1473 = vlaneseq
    %v1474 = vshrl.u32 %v1473, 7
    %v1475 = vsub.s32 0, %v1474
    %v1476 = vrot.slane %v1457, %v1475
    %v1477 = vlaneseq
    %v1478 = vshrl.u32 %v1477, 7
    %v1479 = vsub.s32 1, %v1478
    %v1480 = vrot.slane %v1457, %v1479
    %v1483 = vmul.f32 %v1476, %v1452
    %v1484 = vmul.f32 %v1480, %v1453
    %v1485 = vadd.f32 %v1470, %v1483
    %v1486 = vadd.f32 %v1471, %v1484
    %v1488 = vlaneseq
    %v1489 = vshrl.u32 %v1488, 7
    %v1490 = vsub.s32 0, %v1489
    %v1491 = vrot.slane %v1458, %v1490
    %v1492 = vlaneseq
    %v1493 = vshrl.u32 %v1492, 7
    %v1494 = vsub.s32 1, %v1493
    %v1495 = vrot.slane %v1458, %v1494
    %v1498 = vmul.f32 %v1491, %v1454
    %v1499 = vmul.f32 %v1495, %v1455
    %v1500 = vadd.f32 %v1485, %v1498
    %v1501 = vadd.f32 %v1486, %v1499
    %v1502 = vmul.f32 %v1500, %v1428
    %v1503 = vmul.f32 %v1501, %v1430
    %v1504 = vrot.slane %v1502, 4
    %v1505 = vadd.f32 %v1502, %v1504
    %v1506 = vrot.slane %v1505, 2
    %v1507 = vadd.f32 %v1505, %v1506
    %v1508 = vrot.slane %v1507, 1
    %v1509 = vadd.f32 %v1507, %v1508
    %v1510 = vrot.slane %v1503, 4
    %v1511 = vadd.f32 %v1503, %v1510
    %v1512 = vrot.slane %v1511, 2
    %v1513 = vadd.f32 %v1511, %v1512
    %v1514 = vrot.slane %v1513, 1
    %v1515 = vadd.f32 %v1513, %v1514
    %v1516 = vadd.f32 %v1079, %v1509
    %v1517 = vadd.f32 %v1085, %v1515
    %v1518 = vmul.f32 %v1500, %v1434
    %v1519 = vmul.f32 %v1501, %v1436
    %v1520 = vrot.slane %v1518, 4
    %v1521 = vadd.f32 %v1518, %v1520
    %v1522 = vrot.slane %v1521, 2
    %v1523 = vadd.f32 %v1521, %v1522
    %v1524 = vrot.slane %v1523, 1
    %v1525 = vadd.f32 %v1523, %v1524
    %v1526 = vrot.slane %v1519, 4
    %v1527 = vadd.f32 %v1519, %v1526
    %v1528 = vrot.slane %v1527, 2
    %v1529 = vadd.f32 %v1527, %v1528
    %v1530 = vrot.slane %v1529, 1
    %v1531 = vadd.f32 %v1529, %v1530
    %v1532 = vadd.f32 %v1093, %v1525
    %v1533 = vadd.f32 %v1099, %v1531
    %v1534 = vmul.f32 %v1500, %v1440
    %v1535 = vmul.f32 %v1501, %v1442
    %v1536 = vrot.slane %v1534, 4
    %v1537 = vadd.f32 %v1534, %v1536
    %v1538 = vrot.slane %v1537, 2
    %v1539 = vadd.f32 %v1537, %v1538
    %v1540 = vrot.slane %v1539, 1
    %v1541 = vadd.f32 %v1539, %v1540
    %v1542 = vrot.slane %v1535, 4
    %v1543 = vadd.f32 %v1535, %v1542
    %v1544 = vrot.slane %v1543, 2
    %v1545 = vadd.f32 %v1543, %v1544
    %v1546 = vrot.slane %v1545, 1
    %v1547 = vadd.f32 %v1545, %v1546
    %v1548 = vadd.f32 %v1107, %v1541
    %v1549 = vadd.f32 %v1113, %v1547
    %v1550 = vmul.f32 %v1500, %v1446
    %v1551 = vmul.f32 %v1501, %v1448
    %v1552 = vrot.slane %v1550, 4
    %v1553 = vadd.f32 %v1550, %v1552
    %v1554 = vrot.slane %v1553, 2
    %v1555 = vadd.f32 %v1553, %v1554
    %v1556 = vrot.slane %v1555, 1
    %v1557 = vadd.f32 %v1555, %v1556
    %v1558 = vrot.slane %v1551, 4
    %v1559 = vadd.f32 %v1551, %v1558
    %v1560 = vrot.slane %v1559, 2
    %v1561 = vadd.f32 %v1559, %v1560
    %v1562 = vrot.slane %v1561, 1
    %v1563 = vadd.f32 %v1561, %v1562
    %v1564 = vadd.f32 %v1121, %v1557
    %v1565 = vadd.f32 %v1127, %v1563
    %s1566 = scalar_lea.vmem %s13, 32
    %v1567 = vld [vmem:[%s1566] sm:$0xff]
    %v1568 = vld [vmem:[%s1566 + $0x8] sm:$0xff]
    %s1569 = scalar_lea.vmem %s14, 32
    %v1570 = vld [vmem:[%s1569] sm:$0xff]
    %v1571 = vld [vmem:[%s1569 + $0x8] sm:$0xff]
    %1573 = vset.pattern.permute.xlu0 0
    %1574 = vperm.xlu0 %1573, %v1570
    %v1575 = vpop.permute.xlu0 %1574
    %1578 = vset.pattern.permute.xlu0 0
    %1579 = vperm.xlu0 %1578, %v1571
    %v1580 = vpop.permute.xlu0 %1579
    %v1583 = vsel %vm751, %v1567, 0
    %v1586 = vsel %vm751, %v1568, 0
    %1588 = vmatprep.subr.mxu0 %v730
    %1589 = vmatpush1.msra.mxu0 %v729
    %1590 = vmatprep.subr.mxu0 %v732
    %1591 = vmatpush1.msra.mxu0 %v731
    %1592 = vmatprep.subr.mxu0 0.0
    %1593 = vmatpush1.msra.mxu0 0.0
    %1594 = vmatprep.subr.mxu0 0.0
    %1595 = vmatpush1.msra.mxu0 0.0
    %1596 = vmatprep.subr.mxu0 0.0
    %1597 = vmatpush1.msra.mxu0 0.0
    %1598 = vmatprep.subr.mxu0 0.0
    %1599 = vmatpush1.msra.mxu0 0.0
    %1600 = vmatprep.subr.mxu0 0.0
    %1601 = vmatpush1.msra.mxu0 0.0
    %1602 = vmatprep.subr.mxu0 0.0
    %1603 = vmatpush1.msra.mxu0 0.0
    %1604 = vmatprep.subr.mxu0 0.0
    %1605 = vmatpush1.msra.mxu0 0.0
    %1606 = vmatprep.subr.mxu0 0.0
    %1607 = vmatpush1.msra.mxu0 0.0
    %1608 = vmatprep.subr.mxu0 0.0
    %1609 = vmatpush1.msra.mxu0 0.0
    %1610 = vmatprep.subr.mxu0 0.0
    %1611 = vmatpush1.msra.mxu0 0.0
    %1612 = vmatprep.subr.mxu0 0.0
    %1613 = vmatpush1.msra.mxu0 0.0
    %1614 = vmatprep.subr.mxu0 0.0
    %1615 = vmatpush1.msra.mxu0 0.0
    %1616 = vmatprep.subr.mxu0 0.0
    %1617 = vmatpush1.msra.mxu0 0.0
    %1618 = vmatprep.subr.mxu0 0.0
    %1619 = vmatpush1.msra.mxu0 0.0
    %1620 = vmatprep.subr.mxu0 0.0
    %1621 = vmatpush1.msra.mxu0 0.0
    %1622 = vmatprep.subr.mxu0 0.0
    %1623 = vmatpush1.msra.mxu0 0.0
    %1624 = vmatprep.subr.mxu0 0.0
    %1625 = vmatpush1.msra.mxu0 0.0
    %1626 = vmatprep.subr.mxu0 0.0
    %1627 = vmatpush1.msra.mxu0 0.0
    %1628 = vmatprep.subr.mxu0 0.0
    %1629 = vmatpush1.msra.mxu0 0.0
    %1630 = vmatprep.subr.mxu0 0.0
    %1631 = vmatpush1.msra.mxu0 0.0
    %1632 = vmatprep.subr.mxu0 0.0
    %1633 = vmatpush1.msra.mxu0 0.0
    %1634 = vmatprep.subr.mxu0 0.0
    %1635 = vmatpush1.msra.mxu0 0.0
    %1636 = vmatprep.subr.mxu0 0.0
    %1637 = vmatpush1.msra.mxu0 0.0
    %1638 = vmatprep.subr.mxu0 0.0
    %1639 = vmatpush1.msra.mxu0 0.0
    %1640 = vmatprep.subr.mxu0 0.0
    %1641 = vmatpush1.msra.mxu0 0.0
    %1642 = vmatprep.subr.mxu0 0.0
    %1643 = vmatpush1.msra.mxu0 0.0
    %1644 = vmatprep.subr.mxu0 0.0
    %1645 = vmatpush1.msra.mxu0 0.0
    %1646 = vmatprep.subr.mxu0 0.0
    %1647 = vmatpush1.msra.mxu0 0.0
    %1648 = vmatprep.subr.mxu0 0.0
    %1649 = vmatpush1.msra.mxu0 0.0
    %1650 = vmatprep.subr.mxu0 0.0
    %1651 = vmatpush1.msra.mxu0 0.0
    %1652 = vmatprep.mubr.f32.mxu0 0.0
    %1653 = vmatmul.mubr.f32.gmra.mrb[0].mxu0 %v1583
    %v1654 = vpop.f32.mrb[0].mxu0
    %v1655 = vadd.f32 %v1575, %v1654
    %v1656 = vpop.f32.mrb[0].mxu0
    %v1657 = vadd.f32 %v1575, %v1656
    %1658 = vmatprep.mubr.f32.mxu0 0.0
    %1659 = vmatmul.mubr.f32.gmra.mrb[0].mxu0 %v1586
    %v1660 = vpop.f32.mrb[0].mxu0
    %v1661 = vadd.f32 %v1580, %v1660
    %v1662 = vpop.f32.mrb[0].mxu0
    %v1663 = vadd.f32 %v1580, %v1662
    %1664 = vdwg.mxu0
    %v1665 = vadd.f32 %v1655, %v1661
    %v1666 = vrot.slane %v1665, 4
    %v1667 = vadd.f32 %v1665, %v1666
    %v1668 = vrot.slane %v1667, 2
    %v1669 = vadd.f32 %v1667, %v1668
    %v1670 = vrot.slane %v1669, 1
    %v1671 = vadd.f32 %v1669, %v1670
    %v1672 = vadd.f32 %v1657, %v1663
    %v1673 = vrot.slane %v1672, 4
    %v1674 = vadd.f32 %v1672, %v1673
    %v1675 = vrot.slane %v1674, 2
    %v1676 = vadd.f32 %v1674, %v1675
    %v1677 = vrot.slane %v1676, 1
    %v1678 = vadd.f32 %v1676, %v1677
    %v1679 = vmul.f32 %v1671, %v328
    %v1680 = vmul.f32 %v1678, %v328
    %v1681 = vsub.f32 %v1655, %v1679
    %v1682 = vsub.f32 %v1657, %v1680
    %v1683 = vsub.f32 %v1661, %v1679
    %v1684 = vsub.f32 %v1663, %v1680
    %v1685 = vmul.f32 %v1681, %v1681
    %v1686 = vmul.f32 %v1682, %v1682
    %v1687 = vmul.f32 %v1683, %v1683
    %v1688 = vmul.f32 %v1684, %v1684
    %v1689 = vadd.f32 %v1685, %v1687
    %v1690 = vrot.slane %v1689, 4
    %v1691 = vadd.f32 %v1689, %v1690
    %v1692 = vrot.slane %v1691, 2
    %v1693 = vadd.f32 %v1691, %v1692
    %v1694 = vrot.slane %v1693, 1
    %v1695 = vadd.f32 %v1693, %v1694
    %v1696 = vadd.f32 %v1686, %v1688
    %v1697 = vrot.slane %v1696, 4
    %v1698 = vadd.f32 %v1696, %v1697
    %v1699 = vrot.slane %v1698, 2
    %v1700 = vadd.f32 %v1698, %v1699
    %v1701 = vrot.slane %v1700, 1
    %v1702 = vadd.f32 %v1700, %v1701
    %v1703 = vmul.f32 %v1695, %v328
    %v1704 = vmul.f32 %v1702, %v328
    %v1705 = vadd.f32 %v1703, 1e-05
    %v1706 = vadd.f32 %v1704, 1e-05
    %v1707 = vrsqrt.pop %v1705
    %v1708 = vrsqrt.pop %v1706
    %v1709 = vmul.f32 %v1681, %v1707
    %v1710 = vmul.f32 %v1682, %v1708
    %v1711 = vmul.f32 %v1683, %v1707
    %v1712 = vmul.f32 %v1684, %v1708
    %s1713 = scalar_lea.vmem %s15, 32
    %v1714 = vld [vmem:[%s1713] sm:$0xff]
    %v1715 = vld [vmem:[%s1713 + $0x8] sm:$0xff]
    %1717 = vset.pattern.permute.xlu0 0
    %1718 = vperm.xlu0 %1717, %v1714
    %v1719 = vpop.permute.xlu0 %1718
    %1722 = vset.pattern.permute.xlu0 0
    %1723 = vperm.xlu0 %1722, %v1715
    %v1724 = vpop.permute.xlu0 %1723
    %v1726 = vmul.f32 %v1709, %v1719
    %v1727 = vmul.f32 %v1710, %v1719
    %v1728 = vmul.f32 %v1711, %v1724
    %v1729 = vmul.f32 %v1712, %v1724
    %s1730 = scalar_lea.vmem %s16, 32
    %v1731 = vld [vmem:[%s1730] sm:$0xff]
    %v1732 = vld [vmem:[%s1730 + $0x8] sm:$0xff]
    %1734 = vset.pattern.permute.xlu0 0
    %1735 = vperm.xlu0 %1734, %v1731
    %v1736 = vpop.permute.xlu0 %1735
    %1739 = vset.pattern.permute.xlu0 0
    %1740 = vperm.xlu0 %1739, %v1732
    %v1741 = vpop.permute.xlu0 %1740
    %v1743 = vadd.f32 %v1726, %v1736
    %v1744 = vadd.f32 %v1727, %v1736
    %v1745 = vadd.f32 %v1728, %v1741
    %v1746 = vadd.f32 %v1729, %v1741
    %v1747 = vmul.f32 %v1743, %v1743
    %v1748 = vmul.f32 %v1744, %v1744
    %v1749 = vmul.f32 %v1745, %v1745
    %v1750 = vmul.f32 %v1746, %v1746
    %v1751 = vmul.f32 %v1743, %v1747
    %v1752 = vmul.f32 %v1744, %v1748
    %v1753 = vmul.f32 %v1745, %v1749
    %v1754 = vmul.f32 %v1746, %v1750
    %v1755 = vmul.f32 %v1751, 0.044715
    %v1756 = vmul.f32 %v1752, 0.044715
    %v1757 = vmul.f32 %v1753, 0.044715
    %v1758 = vmul.f32 %v1754, 0.044715
    %v1759 = vadd.f32 %v1743, %v1755
    %v1760 = vadd.f32 %v1744, %v1756
    %v1761 = vadd.f32 %v1745, %v1757
    %v1762 = vadd.f32 %v1746, %v1758
    %v1763 = vmul.f32 %v1759, 0.7978846
    %v1764 = vmul.f32 %v1760, 0.7978846
    %v1765 = vmul.f32 %v1761, 0.7978846
    %v1766 = vmul.f32 %v1762, 0.7978846
    %v1767 = vtanh.pop %v1763
    %v1768 = vtanh.pop %v1764
    %v1769 = vtanh.pop %v1765
    %v1770 = vtanh.pop %v1766
    %v1771 = vadd.f32 %v1767, 1.0
    %v1772 = vadd.f32 %v1768, 1.0
    %v1773 = vadd.f32 %v1769, 1.0
    %v1774 = vadd.f32 %v1770, 1.0
    %v1775 = vmul.f32 %v1771, 0.5
    %v1776 = vmul.f32 %v1772, 0.5
    %v1777 = vmul.f32 %v1773, 0.5
    %v1778 = vmul.f32 %v1774, 0.5
    %v1779 = vmul.f32 %v1743, %v1775
    %v1780 = vmul.f32 %v1744, %v1776
    %v1781 = vmul.f32 %v1745, %v1777
    %v1782 = vmul.f32 %v1746, %v1778
    %v1783 = vld [vmem:[%s17 + $0x40] sm:$0xff]
    %v1784 = vld [vmem:[%s17 + $0x48] sm:$0xff]
    %v1785 = vld [vmem:[%s17 + $0x50] sm:$0xff]
    %v1786 = vld [vmem:[%s17 + $0x58] sm:$0xff]
    %v1788 = vsel %vm751, %v1783, 0
    %v1791 = vsel %vm751, %v1784, 0
    %v1794 = vsel %vm751, %v1785, 0
    %v1797 = vsel %vm751, %v1786, 0
    %1799 = vmatprep.subr.mxu0 %v1780
    %1800 = vmatpush1.msra.mxu0 %v1779
    %1801 = vmatprep.subr.mxu0 %v1782
    %1802 = vmatpush1.msra.mxu0 %v1781
    %1803 = vmatprep.subr.mxu0 0.0
    %1804 = vmatpush1.msra.mxu0 0.0
    %1805 = vmatprep.subr.mxu0 0.0
    %1806 = vmatpush1.msra.mxu0 0.0
    %1807 = vmatprep.subr.mxu0 0.0
    %1808 = vmatpush1.msra.mxu0 0.0
    %1809 = vmatprep.subr.mxu0 0.0
    %1810 = vmatpush1.msra.mxu0 0.0
    %1811 = vmatprep.subr.mxu0 0.0
    %1812 = vmatpush1.msra.mxu0 0.0
    %1813 = vmatprep.subr.mxu0 0.0
    %1814 = vmatpush1.msra.mxu0 0.0
    %1815 = vmatprep.subr.mxu0 0.0
    %1816 = vmatpush1.msra.mxu0 0.0
    %1817 = vmatprep.subr.mxu0 0.0
    %1818 = vmatpush1.msra.mxu0 0.0
    %1819 = vmatprep.subr.mxu0 0.0
    %1820 = vmatpush1.msra.mxu0 0.0
    %1821 = vmatprep.subr.mxu0 0.0
    %1822 = vmatpush1.msra.mxu0 0.0
    %1823 = vmatprep.subr.mxu0 0.0
    %1824 = vmatpush1.msra.mxu0 0.0
    %1825 = vmatprep.subr.mxu0 0.0
    %1826 = vmatpush1.msra.mxu0 0.0
    %1827 = vmatprep.subr.mxu0 0.0
    %1828 = vmatpush1.msra.mxu0 0.0
    %1829 = vmatprep.subr.mxu0 0.0
    %1830 = vmatpush1.msra.mxu0 0.0
    %1831 = vmatprep.subr.mxu0 0.0
    %1832 = vmatpush1.msra.mxu0 0.0
    %1833 = vmatprep.subr.mxu0 0.0
    %1834 = vmatpush1.msra.mxu0 0.0
    %1835 = vmatprep.subr.mxu0 0.0
    %1836 = vmatpush1.msra.mxu0 0.0
    %1837 = vmatprep.subr.mxu0 0.0
    %1838 = vmatpush1.msra.mxu0 0.0
    %1839 = vmatprep.subr.mxu0 0.0
    %1840 = vmatpush1.msra.mxu0 0.0
    %1841 = vmatprep.subr.mxu0 0.0
    %1842 = vmatpush1.msra.mxu0 0.0
    %1843 = vmatprep.subr.mxu0 0.0
    %1844 = vmatpush1.msra.mxu0 0.0
    %1845 = vmatprep.subr.mxu0 0.0
    %1846 = vmatpush1.msra.mxu0 0.0
    %1847 = vmatprep.subr.mxu0 0.0
    %1848 = vmatpush1.msra.mxu0 0.0
    %1849 = vmatprep.subr.mxu0 0.0
    %1850 = vmatpush1.msra.mxu0 0.0
    %1851 = vmatprep.subr.mxu0 0.0
    %1852 = vmatpush1.msra.mxu0 0.0
    %1853 = vmatprep.subr.mxu0 0.0
    %1854 = vmatpush1.msra.mxu0 0.0
    %1855 = vmatprep.subr.mxu0 0.0
    %1856 = vmatpush1.msra.mxu0 0.0
    %1857 = vmatprep.subr.mxu0 0.0
    %1858 = vmatpush1.msra.mxu0 0.0
    %1859 = vmatprep.subr.mxu0 0.0
    %1860 = vmatpush1.msra.mxu0 0.0
    %1861 = vmatprep.subr.mxu0 0.0
    %1862 = vmatpush1.msra.mxu0 0.0
    %1863 = vmatprep.mubr.f32.mxu0 0.0
    %1864 = vmatmul.mubr.f32.gmra.mrb[0].mxu0 %v1788
    %v1865 = vpop.f32.mrb[0].mxu0
    %v1866 = vadd.f32 0.0, %v1865
    %v1867 = vpop.f32.mrb[0].mxu0
    %v1868 = vadd.f32 0.0, %v1867
    %1869 = vmatprep.mubr.f32.mxu0 0.0
    %1870 = vmatmul.mubr.f32.gmra.mrb[0].mxu0 %v1791
    %v1871 = vpop.f32.mrb[0].mxu0
    %v1872 = vadd.f32 0.0, %v1871
    %v1873 = vpop.f32.mrb[0].mxu0
    %v1874 = vadd.f32 0.0, %v1873
    %1875 = vmatprep.mubr.f32.mxu0 0.0
    %1876 = vmatmul.mubr.f32.gmra.mrb[0].mxu0 %v1794
    %v1877 = vpop.f32.mrb[0].mxu0
    %v1878 = vadd.f32 0.0, %v1877
    %v1879 = vpop.f32.mrb[0].mxu0
    %v1880 = vadd.f32 0.0, %v1879
    %1881 = vmatprep.mubr.f32.mxu0 0.0
    %1882 = vmatmul.mubr.f32.gmra.mrb[0].mxu0 %v1797
    %v1883 = vpop.f32.mrb[0].mxu0
    %v1884 = vadd.f32 0.0, %v1883
    %v1885 = vpop.f32.mrb[0].mxu0
    %v1886 = vadd.f32 0.0, %v1885
    %1887 = vdwg.mxu0
    %v1888 = vld [vmem:[%s5] sm:$0x77]
    %v1891 = vunpack.c.l.s4 1966171168
    %v1892 = vunpack.c.0.s8 %v1891
    %v1893 = vlaneseq
    %v1894 = vshrl.u32 %v1893, 7
    %v1895 = vsub.s32 %v1892, %v1894
    %v1896 = vrot.slane %v1888, %v1895
    %v1897 = vcombine.high %v1896, %v1896
    %v1899 = vunpack.c.l.s4 1966171168
    %v1900 = vunpack.c.0.s8 %v1899
    %v1901 = vlaneseq
    %v1902 = vshrl.u32 %v1901, 7
    %v1903 = vsub.s32 %v1900, %v1902
    %v1904 = vrot.slane %v1896, %v1903
    %v1906 = vunpack.c.l.s4 1966171168
    %v1907 = vunpack.c.0.s8 %v1906
    %v1908 = vlaneseq
    %v1909 = vshrl.u32 %v1908, 7
    %v1910 = vsub.s32 %v1907, %v1909
    %v1911 = vrot.slane %v1897, %v1910
    %v1912 = vcombine.high %v1904, %v1904
    %v1913 = vlaneseq
    %v1914 = vshrl.u32 %v1913, 7
    %v1915 = vsub.s32 0, %v1914
    %v1916 = vrot.slane %v1904, %v1915
    %v1917 = vlaneseq
    %v1918 = vshrl.u32 %v1917, 7
    %v1919 = vsub.s32 1, %v1918
    %v1920 = vrot.slane %v1904, %v1919
    %v1921 = vlaneseq
    %v1922 = vshrl.u32 %v1921, 7
    %v1923 = vsub.s32 0, %v1922
    %v1924 = vrot.slane %v1911, %v1923
    %v1925 = vlaneseq
    %v1926 = vshrl.u32 %v1925, 7
    %v1927 = vsub.s32 1, %v1926
    %v1928 = vrot.slane %v1911, %v1927
    %v1929 = vlaneseq
    %v1930 = vshrl.u32 %v1929, 7
    %v1931 = vsub.s32 0, %v1930
    %v1932 = vrot.slane %v1912, %v1931
    %v1933 = vlaneseq
    %v1934 = vshrl.u32 %v1933, 7
    %v1935 = vsub.s32 1, %v1934
    %v1936 = vrot.slane %v1912, %v1935
    %v1943 = vmul.f32 %v1916, %v1056
    %v1944 = vmul.f32 %v1920, %v1057
    %v1945 = vmul.f32 %v1924, %v1056
    %v1946 = vmul.f32 %v1928, %v1057
    %v1947 = vmul.f32 %v1932, %v1056
    %v1948 = vmul.f32 %v1936, %v1057
    %v1949 = vmul.f32 %v1943, %v1866
    %v1950 = vmul.f32 %v1944, %v1868
    %v1951 = vmul.f32 %v1945, %v1866
    %v1952 = vmul.f32 %v1946, %v1868
    %v1953 = vmul.f32 %v1947, %v1866
    %v1954 = vmul.f32 %v1948, %v1868
    %v1955 = vrot.slane %v1949, 4
    %v1956 = vadd.f32 %v1949, %v1955
    %v1957 = vrot.slane %v1956, 2
    %v1958 = vadd.f32 %v1956, %v1957
    %v1959 = vrot.slane %v1958, 1
    %v1960 = vadd.f32 %v1958, %v1959
    %v1961 = vrot.slane %v1950, 4
    %v1962 = vadd.f32 %v1950, %v1961
    %v1963 = vrot.slane %v1962, 2
    %v1964 = vadd.f32 %v1962, %v1963
    %v1965 = vrot.slane %v1964, 1
    %v1966 = vadd.f32 %v1964, %v1965
    %v1967 = vrot.slane %v1951, 4
    %v1968 = vadd.f32 %v1951, %v1967
    %v1969 = vrot.slane %v1968, 2
    %v1970 = vadd.f32 %v1968, %v1969
    %v1971 = vrot.slane %v1970, 1
    %v1972 = vadd.f32 %v1970, %v1971
    %v1973 = vrot.slane %v1952, 4
    %v1974 = vadd.f32 %v1952, %v1973
    %v1975 = vrot.slane %v1974, 2
    %v1976 = vadd.f32 %v1974, %v1975
    %v1977 = vrot.slane %v1976, 1
    %v1978 = vadd.f32 %v1976, %v1977
    %v1979 = vrot.slane %v1953, 4
    %v1980 = vadd.f32 %v1953, %v1979
    %v1981 = vrot.slane %v1980, 2
    %v1982 = vadd.f32 %v1980, %v1981
    %v1983 = vrot.slane %v1982, 1
    %v1984 = vadd.f32 %v1982, %v1983
    %v1985 = vrot.slane %v1954, 4
    %v1986 = vadd.f32 %v1954, %v1985
    %v1987 = vrot.slane %v1986, 2
    %v1988 = vadd.f32 %v1986, %v1987
    %v1989 = vrot.slane %v1988, 1
    %v1990 = vadd.f32 %v1988, %v1989
    %v1991 = vmul.f32 %v1943, %v1872
    %v1992 = vmul.f32 %v1944, %v1874
    %v1993 = vmul.f32 %v1945, %v1872
    %v1994 = vmul.f32 %v1946, %v1874
    %v1995 = vmul.f32 %v1947, %v1872
    %v1996 = vmul.f32 %v1948, %v1874
    %v1997 = vrot.slane %v1991, 4
    %v1998 = vadd.f32 %v1991, %v1997
    %v1999 = vrot.slane %v1998, 2
    %v2000 = vadd.f32 %v1998, %v1999
    %v2001 = vrot.slane %v2000, 1
    %v2002 = vadd.f32 %v2000, %v2001
    %v2003 = vrot.slane %v1992, 4
    %v2004 = vadd.f32 %v1992, %v2003
    %v2005 = vrot.slane %v2004, 2
    %v2006 = vadd.f32 %v2004, %v2005
    %v2007 = vrot.slane %v2006, 1
    %v2008 = vadd.f32 %v2006, %v2007
    %v2009 = vrot.slane %v1993, 4
    %v2010 = vadd.f32 %v1993, %v2009
    %v2011 = vrot.slane %v2010, 2
    %v2012 = vadd.f32 %v2010, %v2011
    %v2013 = vrot.slane %v2012, 1
    %v2014 = vadd.f32 %v2012, %v2013
    %v2015 = vrot.slane %v1994, 4
    %v2016 = vadd.f32 %v1994, %v2015
    %v2017 = vrot.slane %v2016, 2
    %v2018 = vadd.f32 %v2016, %v2017
    %v2019 = vrot.slane %v2018, 1
    %v2020 = vadd.f32 %v2018, %v2019
    %v2021 = vrot.slane %v1995, 4
    %v2022 = vadd.f32 %v1995, %v2021
    %v2023 = vrot.slane %v2022, 2
    %v2024 = vadd.f32 %v2022, %v2023
    %v2025 = vrot.slane %v2024, 1
    %v2026 = vadd.f32 %v2024, %v2025
    %v2027 = vrot.slane %v1996, 4
    %v2028 = vadd.f32 %v1996, %v2027
    %v2029 = vrot.slane %v2028, 2
    %v2030 = vadd.f32 %v2028, %v2029
    %v2031 = vrot.slane %v2030, 1
    %v2032 = vadd.f32 %v2030, %v2031
    %v2033 = vmul.f32 %v1943, %v1878
    %v2034 = vmul.f32 %v1944, %v1880
    %v2035 = vmul.f32 %v1945, %v1878
    %v2036 = vmul.f32 %v1946, %v1880
    %v2037 = vmul.f32 %v1947, %v1878
    %v2038 = vmul.f32 %v1948, %v1880
    %v2039 = vrot.slane %v2033, 4
    %v2040 = vadd.f32 %v2033, %v2039
    %v2041 = vrot.slane %v2040, 2
    %v2042 = vadd.f32 %v2040, %v2041
    %v2043 = vrot.slane %v2042, 1
    %v2044 = vadd.f32 %v2042, %v2043
    %v2045 = vrot.slane %v2034, 4
    %v2046 = vadd.f32 %v2034, %v2045
    %v2047 = vrot.slane %v2046, 2
    %v2048 = vadd.f32 %v2046, %v2047
    %v2049 = vrot.slane %v2048, 1
    %v2050 = vadd.f32 %v2048, %v2049
    %v2051 = vrot.slane %v2035, 4
    %v2052 = vadd.f32 %v2035, %v2051
    %v2053 = vrot.slane %v2052, 2
    %v2054 = vadd.f32 %v2052, %v2053
    %v2055 = vrot.slane %v2054, 1
    %v2056 = vadd.f32 %v2054, %v2055
    %v2057 = vrot.slane %v2036, 4
    %v2058 = vadd.f32 %v2036, %v2057
    %v2059 = vrot.slane %v2058, 2
    %v2060 = vadd.f32 %v2058, %v2059
    %v2061 = vrot.slane %v2060, 1
    %v2062 = vadd.f32 %v2060, %v2061
    %v2063 = vrot.slane %v2037, 4
    %v2064 = vadd.f32 %v2037, %v2063
    %v2065 = vrot.slane %v2064, 2
    %v2066 = vadd.f32 %v2064, %v2065
    %v2067 = vrot.slane %v2066, 1
    %v2068 = vadd.f32 %v2066, %v2067
    %v2069 = vrot.slane %v2038, 4
    %v2070 = vadd.f32 %v2038, %v2069
    %v2071 = vrot.slane %v2070, 2
    %v2072 = vadd.f32 %v2070, %v2071
    %v2073 = vrot.slane %v2072, 1
    %v2074 = vadd.f32 %v2072, %v2073
    %v2075 = vmul.f32 %v1943, %v1884
    %v2076 = vmul.f32 %v1944, %v1886
    %v2077 = vmul.f32 %v1945, %v1884
    %v2078 = vmul.f32 %v1946, %v1886
    %v2079 = vmul.f32 %v1947, %v1884
    %v2080 = vmul.f32 %v1948, %v1886
    %v2081 = vrot.slane %v2075, 4
    %v2082 = vadd.f32 %v2075, %v2081
    %v2083 = vrot.slane %v2082, 2
    %v2084 = vadd.f32 %v2082, %v2083
    %v2085 = vrot.slane %v2084, 1
    %v2086 = vadd.f32 %v2084, %v2085
    %v2087 = vrot.slane %v2076, 4
    %v2088 = vadd.f32 %v2076, %v2087
    %v2089 = vrot.slane %v2088, 2
    %v2090 = vadd.f32 %v2088, %v2089
    %v2091 = vrot.slane %v2090, 1
    %v2092 = vadd.f32 %v2090, %v2091
    %v2093 = vrot.slane %v2077, 4
    %v2094 = vadd.f32 %v2077, %v2093
    %v2095 = vrot.slane %v2094, 2
    %v2096 = vadd.f32 %v2094, %v2095
    %v2097 = vrot.slane %v2096, 1
    %v2098 = vadd.f32 %v2096, %v2097
    %v2099 = vrot.slane %v2078, 4
    %v2100 = vadd.f32 %v2078, %v2099
    %v2101 = vrot.slane %v2100, 2
    %v2102 = vadd.f32 %v2100, %v2101
    %v2103 = vrot.slane %v2102, 1
    %v2104 = vadd.f32 %v2102, %v2103
    %v2105 = vrot.slane %v2079, 4
    %v2106 = vadd.f32 %v2079, %v2105
    %v2107 = vrot.slane %v2106, 2
    %v2108 = vadd.f32 %v2106, %v2107
    %v2109 = vrot.slane %v2108, 1
    %v2110 = vadd.f32 %v2108, %v2109
    %v2111 = vrot.slane %v2080, 4
    %v2112 = vadd.f32 %v2080, %v2111
    %v2113 = vrot.slane %v2112, 2
    %v2114 = vadd.f32 %v2112, %v2113
    %v2115 = vrot.slane %v2114, 1
    %v2116 = vadd.f32 %v2114, %v2115
    %s2117 = scalar_lea.vmem %s13, 48
    %v2118 = vld [vmem:[%s2117] sm:$0xff]
    %v2119 = vld [vmem:[%s2117 + $0x8] sm:$0xff]
    %s2120 = scalar_lea.vmem %s14, 48
    %v2121 = vld [vmem:[%s2120] sm:$0xff]
    %v2122 = vld [vmem:[%s2120 + $0x8] sm:$0xff]
    %2124 = vset.pattern.permute.xlu0 0
    %2125 = vperm.xlu0 %2124, %v2121
    %v2126 = vpop.permute.xlu0 %2125
    %2129 = vset.pattern.permute.xlu0 0
    %2130 = vperm.xlu0 %2129, %v2122
    %v2131 = vpop.permute.xlu0 %2130
    %v2134 = vsel %vm751, %v2118, 0
    %v2137 = vsel %vm751, %v2119, 0
    %2139 = vmatprep.subr.mxu0 %v734
    %2140 = vmatpush1.msra.mxu0 %v733
    %2141 = vmatprep.subr.mxu0 %v736
    %2142 = vmatpush1.msra.mxu0 %v735
    %2143 = vmatprep.subr.mxu0 0.0
    %2144 = vmatpush1.msra.mxu0 0.0
    %2145 = vmatprep.subr.mxu0 0.0
    %2146 = vmatpush1.msra.mxu0 0.0
    %2147 = vmatprep.subr.mxu0 0.0
    %2148 = vmatpush1.msra.mxu0 0.0
    %2149 = vmatprep.subr.mxu0 0.0
    %2150 = vmatpush1.msra.mxu0 0.0
    %2151 = vmatprep.subr.mxu0 0.0
    %2152 = vmatpush1.msra.mxu0 0.0
    %2153 = vmatprep.subr.mxu0 0.0
    %2154 = vmatpush1.msra.mxu0 0.0
    %2155 = vmatprep.subr.mxu0 0.0
    %2156 = vmatpush1.msra.mxu0 0.0
    %2157 = vmatprep.subr.mxu0 0.0
    %2158 = vmatpush1.msra.mxu0 0.0
    %2159 = vmatprep.subr.mxu0 0.0
    %2160 = vmatpush1.msra.mxu0 0.0
    %2161 = vmatprep.subr.mxu0 0.0
    %2162 = vmatpush1.msra.mxu0 0.0
    %2163 = vmatprep.subr.mxu0 0.0
    %2164 = vmatpush1.msra.mxu0 0.0
    %2165 = vmatprep.subr.mxu0 0.0
    %2166 = vmatpush1.msra.mxu0 0.0
    %2167 = vmatprep.subr.mxu0 0.0
    %2168 = vmatpush1.msra.mxu0 0.0
    %2169 = vmatprep.subr.mxu0 0.0
    %2170 = vmatpush1.msra.mxu0 0.0
    %2171 = vmatprep.subr.mxu0 0.0
    %2172 = vmatpush1.msra.mxu0 0.0
    %2173 = vmatprep.subr.mxu0 0.0
    %2174 = vmatpush1.msra.mxu0 0.0
    %2175 = vmatprep.subr.mxu0 0.0
    %2176 = vmatpush1.msra.mxu0 0.0
    %2177 = vmatprep.subr.mxu0 0.0
    %2178 = vmatpush1.msra.mxu0 0.0
    %2179 = vmatprep.subr.mxu0 0.0
    %2180 = vmatpush1.msra.mxu0 0.0
    %2181 = vmatprep.subr.mxu0 0.0
    %2182 = vmatpush1.msra.mxu0 0.0
    %2183 = vmatprep.subr.mxu0 0.0
    %2184 = vmatpush1.msra.mxu0 0.0
    %2185 = vmatprep.subr.mxu0 0.0
    %2186 = vmatpush1.msra.mxu0 0.0
    %2187 = vmatprep.subr.mxu0 0.0
    %2188 = vmatpush1.msra.mxu0 0.0
    %2189 = vmatprep.subr.mxu0 0.0
    %2190 = vmatpush1.msra.mxu0 0.0
    %2191 = vmatprep.subr.mxu0 0.0
    %2192 = vmatpush1.msra.mxu0 0.0
    %2193 = vmatprep.subr.mxu0 0.0
    %2194 = vmatpush1.msra.mxu0 0.0
    %2195 = vmatprep.subr.mxu0 0.0
    %2196 = vmatpush1.msra.mxu0 0.0
    %2197 = vmatprep.subr.mxu0 0.0
    %2198 = vmatpush1.msra.mxu0 0.0
    %2199 = vmatprep.subr.mxu0 0.0
    %2200 = vmatpush1.msra.mxu0 0.0
    %2201 = vmatprep.subr.mxu0 0.0
    %2202 = vmatpush1.msra.mxu0 0.0
    %2203 = vmatprep.mubr.f32.mxu0 0.0
    %2204 = vmatmul.mubr.f32.gmra.mrb[0].mxu0 %v2134
    %v2205 = vpop.f32.mrb[0].mxu0
    %v2206 = vadd.f32 %v2126, %v2205
    %v2207 = vpop.f32.mrb[0].mxu0
    %v2208 = vadd.f32 %v2126, %v2207
    %2209 = vmatprep.mubr.f32.mxu0 0.0
    %2210 = vmatmul.mubr.f32.gmra.mrb[0].mxu0 %v2137
    %v2211 = vpop.f32.mrb[0].mxu0
    %v2212 = vadd.f32 %v2131, %v2211
    %v2213 = vpop.f32.mrb[0].mxu0
    %v2214 = vadd.f32 %v2131, %v2213
    %2215 = vdwg.mxu0
    %v2216 = vadd.f32 %v2206, %v2212
    %v2217 = vrot.slane %v2216, 4
    %v2218 = vadd.f32 %v2216, %v2217
    %v2219 = vrot.slane %v2218, 2
    %v2220 = vadd.f32 %v2218, %v2219
    %v2221 = vrot.slane %v2220, 1
    %v2222 = vadd.f32 %v2220, %v2221
    %v2223 = vadd.f32 %v2208, %v2214
    %v2224 = vrot.slane %v2223, 4
    %v2225 = vadd.f32 %v2223, %v2224
    %v2226 = vrot.slane %v2225, 2
    %v2227 = vadd.f32 %v2225, %v2226
    %v2228 = vrot.slane %v2227, 1
    %v2229 = vadd.f32 %v2227, %v2228
    %v2230 = vmul.f32 %v2222, %v328
    %v2231 = vmul.f32 %v2229, %v328
    %v2232 = vsub.f32 %v2206, %v2230
    %v2233 = vsub.f32 %v2208, %v2231
    %v2234 = vsub.f32 %v2212, %v2230
    %v2235 = vsub.f32 %v2214, %v2231
    %v2236 = vmul.f32 %v2232, %v2232
    %v2237 = vmul.f32 %v2233, %v2233
    %v2238 = vmul.f32 %v2234, %v2234
    %v2239 = vmul.f32 %v2235, %v2235
    %v2240 = vadd.f32 %v2236, %v2238
    %v2241 = vrot.slane %v2240, 4
    %v2242 = vadd.f32 %v2240, %v2241
    %v2243 = vrot.slane %v2242, 2
    %v2244 = vadd.f32 %v2242, %v2243
    %v2245 = vrot.slane %v2244, 1
    %v2246 = vadd.f32 %v2244, %v2245
    %v2247 = vadd.f32 %v2237, %v2239
    %v2248 = vrot.slane %v2247, 4
    %v2249 = vadd.f32 %v2247, %v2248
    %v2250 = vrot.slane %v2249, 2
    %v2251 = vadd.f32 %v2249, %v2250
    %v2252 = vrot.slane %v2251, 1
    %v2253 = vadd.f32 %v2251, %v2252
    %v2254 = vmul.f32 %v2246, %v328
    %v2255 = vmul.f32 %v2253, %v328
    %v2256 = vadd.f32 %v2254, 1e-05
    %v2257 = vadd.f32 %v2255, 1e-05
    %v2258 = vrsqrt.pop %v2256
    %v2259 = vrsqrt.pop %v2257
    %v2260 = vmul.f32 %v2232, %v2258
    %v2261 = vmul.f32 %v2233, %v2259
    %v2262 = vmul.f32 %v2234, %v2258
    %v2263 = vmul.f32 %v2235, %v2259
    %s2264 = scalar_lea.vmem %s15, 48
    %v2265 = vld [vmem:[%s2264] sm:$0xff]
    %v2266 = vld [vmem:[%s2264 + $0x8] sm:$0xff]
    %2268 = vset.pattern.permute.xlu0 0
    %2269 = vperm.xlu0 %2268, %v2265
    %v2270 = vpop.permute.xlu0 %2269
    %2273 = vset.pattern.permute.xlu0 0
    %2274 = vperm.xlu0 %2273, %v2266
    %v2275 = vpop.permute.xlu0 %2274
    %v2277 = vmul.f32 %v2260, %v2270
    %v2278 = vmul.f32 %v2261, %v2270
    %v2279 = vmul.f32 %v2262, %v2275
    %v2280 = vmul.f32 %v2263, %v2275
    %s2281 = scalar_lea.vmem %s16, 48
    %v2282 = vld [vmem:[%s2281] sm:$0xff]
    %v2283 = vld [vmem:[%s2281 + $0x8] sm:$0xff]
    %2285 = vset.pattern.permute.xlu0 0
    %2286 = vperm.xlu0 %2285, %v2282
    %v2287 = vpop.permute.xlu0 %2286
    %2290 = vset.pattern.permute.xlu0 0
    %2291 = vperm.xlu0 %2290, %v2283
    %v2292 = vpop.permute.xlu0 %2291
    %v2294 = vadd.f32 %v2277, %v2287
    %v2295 = vadd.f32 %v2278, %v2287
    %v2296 = vadd.f32 %v2279, %v2292
    %v2297 = vadd.f32 %v2280, %v2292
    %v2298 = vmul.f32 %v2294, %v2294
    %v2299 = vmul.f32 %v2295, %v2295
    %v2300 = vmul.f32 %v2296, %v2296
    %v2301 = vmul.f32 %v2297, %v2297
    %v2302 = vmul.f32 %v2294, %v2298
    %v2303 = vmul.f32 %v2295, %v2299
    %v2304 = vmul.f32 %v2296, %v2300
    %v2305 = vmul.f32 %v2297, %v2301
    %v2306 = vmul.f32 %v2302, 0.044715
    %v2307 = vmul.f32 %v2303, 0.044715
    %v2308 = vmul.f32 %v2304, 0.044715
    %v2309 = vmul.f32 %v2305, 0.044715
    %v2310 = vadd.f32 %v2294, %v2306
    %v2311 = vadd.f32 %v2295, %v2307
    %v2312 = vadd.f32 %v2296, %v2308
    %v2313 = vadd.f32 %v2297, %v2309
    %v2314 = vmul.f32 %v2310, 0.7978846
    %v2315 = vmul.f32 %v2311, 0.7978846
    %v2316 = vmul.f32 %v2312, 0.7978846
    %v2317 = vmul.f32 %v2313, 0.7978846
    %v2318 = vtanh.pop %v2314
    %v2319 = vtanh.pop %v2315
    %v2320 = vtanh.pop %v2316
    %v2321 = vtanh.pop %v2317
    %v2322 = vadd.f32 %v2318, 1.0
    %v2323 = vadd.f32 %v2319, 1.0
    %v2324 = vadd.f32 %v2320, 1.0
    %v2325 = vadd.f32 %v2321, 1.0
    %v2326 = vmul.f32 %v2322, 0.5
    %v2327 = vmul.f32 %v2323, 0.5
    %v2328 = vmul.f32 %v2324, 0.5
    %v2329 = vmul.f32 %v2325, 0.5
    %v2330 = vmul.f32 %v2294, %v2326
    %v2331 = vmul.f32 %v2295, %v2327
    %v2332 = vmul.f32 %v2296, %v2328
    %v2333 = vmul.f32 %v2297, %v2329
    %v2334 = vld [vmem:[%s17 + $0x60] sm:$0xff]
    %v2335 = vld [vmem:[%s17 + $0x68] sm:$0xff]
    %v2336 = vld [vmem:[%s17 + $0x70] sm:$0xff]
    %v2337 = vld [vmem:[%s17 + $0x78] sm:$0xff]
    %v2338 = vld [vmem:[%s17 + $0x80] sm:$0xff]
    %v2339 = vld [vmem:[%s17 + $0x88] sm:$0xff]
    %v2340 = vld [vmem:[%s17 + $0x90] sm:$0xff]
    %v2341 = vld [vmem:[%s17 + $0x98] sm:$0xff]
    %v2342 = vld [vmem:[%s17 + $0xa0] sm:$0xff]
    %v2343 = vld [vmem:[%s17 + $0xa8] sm:$0xff]
    %v2344 = vld [vmem:[%s17 + $0xb0] sm:$0xff]
    %v2345 = vld [vmem:[%s17 + $0xb8] sm:$0xff]
    %v2347 = vsel %vm751, %v2334, 0
    %v2350 = vsel %vm751, %v2335, 0
    %v2353 = vsel %vm751, %v2336, 0
    %v2356 = vsel %vm751, %v2337, 0
    %v2359 = vsel %vm751, %v2338, 0
    %v2362 = vsel %vm751, %v2339, 0
    %v2365 = vsel %vm751, %v2340, 0
    %v2368 = vsel %vm751, %v2341, 0
    %v2371 = vsel %vm751, %v2342, 0
    %v2374 = vsel %vm751, %v2343, 0
    %v2377 = vsel %vm751, %v2344, 0
    %v2380 = vsel %vm751, %v2345, 0
    %2382 = vmatprep.subr.mxu0 %v2331
    %2383 = vmatpush1.msra.mxu0 %v2330
    %2384 = vmatprep.subr.mxu0 %v2333
    %2385 = vmatpush1.msra.mxu0 %v2332
    %2386 = vmatprep.subr.mxu0 0.0
    %2387 = vmatpush1.msra.mxu0 0.0
    %2388 = vmatprep.subr.mxu0 0.0
    %2389 = vmatpush1.msra.mxu0 0.0
    %2390 = vmatprep.subr.mxu0 0.0
    %2391 = vmatpush1.msra.mxu0 0.0
    %2392 = vmatprep.subr.mxu0 0.0
    %2393 = vmatpush1.msra.mxu0 0.0
    %2394 = vmatprep.subr.mxu0 0.0
    %2395 = vmatpush1.msra.mxu0 0.0
    %2396 = vmatprep.subr.mxu0 0.0
    %2397 = vmatpush1.msra.mxu0 0.0
    %2398 = vmatprep.subr.mxu0 0.0
    %2399 = vmatpush1.msra.mxu0 0.0
    %2400 = vmatprep.subr.mxu0 0.0
    %2401 = vmatpush1.msra.mxu0 0.0
    %2402 = vmatprep.subr.mxu0 0.0
    %2403 = vmatpush1.msra.mxu0 0.0
    %2404 = vmatprep.subr.mxu0 0.0
    %2405 = vmatpush1.msra.mxu0 0.0
    %2406 = vmatprep.subr.mxu0 0.0
    %2407 = vmatpush1.msra.mxu0 0.0
    %2408 = vmatprep.subr.mxu0 0.0
    %2409 = vmatpush1.msra.mxu0 0.0
    %2410 = vmatprep.subr.mxu0 0.0
    %2411 = vmatpush1.msra.mxu0 0.0
    %2412 = vmatprep.subr.mxu0 0.0
    %2413 = vmatpush1.msra.mxu0 0.0
    %2414 = vmatprep.subr.mxu0 0.0
    %2415 = vmatpush1.msra.mxu0 0.0
    %2416 = vmatprep.subr.mxu0 0.0
    %2417 = vmatpush1.msra.mxu0 0.0
    %2418 = vmatprep.subr.mxu0 0.0
    %2419 = vmatpush1.msra.mxu0 0.0
    %2420 = vmatprep.subr.mxu0 0.0
    %2421 = vmatpush1.msra.mxu0 0.0
    %2422 = vmatprep.subr.mxu0 0.0
    %2423 = vmatpush1.msra.mxu0 0.0
    %2424 = vmatprep.subr.mxu0 0.0
    %2425 = vmatpush1.msra.mxu0 0.0
    %2426 = vmatprep.subr.mxu0 0.0
    %2427 = vmatpush1.msra.mxu0 0.0
    %2428 = vmatprep.subr.mxu0 0.0
    %2429 = vmatpush1.msra.mxu0 0.0
    %2430 = vmatprep.subr.mxu0 0.0
    %2431 = vmatpush1.msra.mxu0 0.0
    %2432 = vmatprep.subr.mxu0 0.0
    %2433 = vmatpush1.msra.mxu0 0.0
    %2434 = vmatprep.subr.mxu0 0.0
    %2435 = vmatpush1.msra.mxu0 0.0
    %2436 = vmatprep.subr.mxu0 0.0
    %2437 = vmatpush1.msra.mxu0 0.0
    %2438 = vmatprep.subr.mxu0 0.0
    %2439 = vmatpush1.msra.mxu0 0.0
    %2440 = vmatprep.subr.mxu0 0.0
    %2441 = vmatpush1.msra.mxu0 0.0
    %2442 = vmatprep.subr.mxu0 0.0
    %2443 = vmatpush1.msra.mxu0 0.0
    %2444 = vmatprep.subr.mxu0 0.0
    %2445 = vmatpush1.msra.mxu0 0.0
    %2446 = vmatprep.mubr.f32.mxu0 0.0
    %2447 = vmatmul.mubr.f32.gmra.mrb[0].mxu0 %v2347
    %v2448 = vpop.f32.mrb[0].mxu0
    %v2449 = vadd.f32 0.0, %v2448
    %v2450 = vpop.f32.mrb[0].mxu0
    %v2451 = vadd.f32 0.0, %v2450
    %2452 = vmatprep.mubr.f32.mxu0 0.0
    %2453 = vmatmul.mubr.f32.gmra.mrb[0].mxu0 %v2350
    %v2454 = vpop.f32.mrb[0].mxu0
    %v2455 = vadd.f32 0.0, %v2454
    %v2456 = vpop.f32.mrb[0].mxu0
    %v2457 = vadd.f32 0.0, %v2456
    %2458 = vmatprep.mubr.f32.mxu0 0.0
    %2459 = vmatmul.mubr.f32.gmra.mrb[0].mxu0 %v2353
    %v2460 = vpop.f32.mrb[0].mxu0
    %v2461 = vadd.f32 0.0, %v2460
    %v2462 = vpop.f32.mrb[0].mxu0
    %v2463 = vadd.f32 0.0, %v2462
    %2464 = vmatprep.mubr.f32.mxu0 0.0
    %2465 = vmatmul.mubr.f32.gmra.mrb[0].mxu0 %v2356
    %v2466 = vpop.f32.mrb[0].mxu0
    %v2467 = vadd.f32 0.0, %v2466
    %v2468 = vpop.f32.mrb[0].mxu0
    %v2469 = vadd.f32 0.0, %v2468
    %2470 = vmatprep.mubr.f32.mxu0 0.0
    %2471 = vmatmul.mubr.f32.gmra.mrb[0].mxu0 %v2359
    %v2472 = vpop.f32.mrb[0].mxu0
    %v2473 = vadd.f32 0.0, %v2472
    %v2474 = vpop.f32.mrb[0].mxu0
    %v2475 = vadd.f32 0.0, %v2474
    %2476 = vmatprep.mubr.f32.mxu0 0.0
    %2477 = vmatmul.mubr.f32.gmra.mrb[0].mxu0 %v2362
    %v2478 = vpop.f32.mrb[0].mxu0
    %v2479 = vadd.f32 0.0, %v2478
    %v2480 = vpop.f32.mrb[0].mxu0
    %v2481 = vadd.f32 0.0, %v2480
    %2482 = vmatprep.mubr.f32.mxu0 0.0
    %2483 = vmatmul.mubr.f32.gmra.mrb[0].mxu0 %v2365
    %v2484 = vpop.f32.mrb[0].mxu0
    %v2485 = vadd.f32 0.0, %v2484
    %v2486 = vpop.f32.mrb[0].mxu0
    %v2487 = vadd.f32 0.0, %v2486
    %2488 = vmatprep.mubr.f32.mxu0 0.0
    %2489 = vmatmul.mubr.f32.gmra.mrb[0].mxu0 %v2368
    %v2490 = vpop.f32.mrb[0].mxu0
    %v2491 = vadd.f32 0.0, %v2490
    %v2492 = vpop.f32.mrb[0].mxu0
    %v2493 = vadd.f32 0.0, %v2492
    %2494 = vmatprep.mubr.f32.mxu0 0.0
    %2495 = vmatmul.mubr.f32.gmra.mrb[0].mxu0 %v2371
    %v2496 = vpop.f32.mrb[0].mxu0
    %v2497 = vadd.f32 0.0, %v2496
    %v2498 = vpop.f32.mrb[0].mxu0
    %v2499 = vadd.f32 0.0, %v2498
    %2500 = vmatprep.mubr.f32.mxu0 0.0
    %2501 = vmatmul.mubr.f32.gmra.mrb[0].mxu0 %v2374
    %v2502 = vpop.f32.mrb[0].mxu0
    %v2503 = vadd.f32 0.0, %v2502
    %v2504 = vpop.f32.mrb[0].mxu0
    %v2505 = vadd.f32 0.0, %v2504
    %2506 = vmatprep.mubr.f32.mxu0 0.0
    %2507 = vmatmul.mubr.f32.gmra.mrb[0].mxu0 %v2377
    %v2508 = vpop.f32.mrb[0].mxu0
    %v2509 = vadd.f32 0.0, %v2508
    %v2510 = vpop.f32.mrb[0].mxu0
    %v2511 = vadd.f32 0.0, %v2510
    %2512 = vmatprep.mubr.f32.mxu0 0.0
    %2513 = vmatmul.mubr.f32.gmra.mrb[0].mxu0 %v2380
    %v2514 = vpop.f32.mrb[0].mxu0
    %v2515 = vadd.f32 0.0, %v2514
    %v2516 = vpop.f32.mrb[0].mxu0
    %v2517 = vadd.f32 0.0, %v2516
    %2518 = vdwg.mxu0
    %v2519 = vld [vmem:[%s6] sm:$0xff]
    %v2520 = vld [vmem:[%s6 + $0x8] sm:$0xff]
    %v2521 = vld [vmem:[%s6 + $0x10] sm:$0x1]
    %v2522 = vld [vmem:[%s6 + $0x18] sm:$0x1]
    %v2523 = vld [vmem:[%s6 + $0x20] sm:$0xff]
    %v2524 = vld [vmem:[%s6 + $0x28] sm:$0xff]
    %v2525 = vld [vmem:[%s6 + $0x30] sm:$0x1]
    %v2526 = vld [vmem:[%s6 + $0x38] sm:$0x1]
    %v2527 = vld [vmem:[%s6 + $0x40] sm:$0xff]
    %v2528 = vld [vmem:[%s6 + $0x48] sm:$0xff]
    %v2529 = vld [vmem:[%s6 + $0x50] sm:$0x1]
    %v2530 = vld [vmem:[%s6 + $0x58] sm:$0x1]
    %v2535 = vcombine.low %v2519, %v2520
    %v2536 = vcombine.high %v2519, %v2520
    %v2538 = vunpack.c.l.s4 1966171168
    %v2539 = vunpack.c.0.s8 %v2538
    %v2540 = vlaneseq
    %v2541 = vshrl.u32 %v2540, 7
    %v2542 = vsub.s32 %v2539, %v2541
    %v2543 = vrot.slane %v2535, %v2542
    %v2545 = vunpack.c.l.s4 1966171168
    %v2546 = vunpack.c.0.s8 %v2545
    %v2547 = vlaneseq
    %v2548 = vshrl.u32 %v2547, 7
    %v2549 = vsub.s32 %v2546, %v2548
    %v2550 = vrot.slane %v2536, %v2549
    %v2551 = vcombine.high %v2543, %v2543
    %v2552 = vcombine.high %v2550, %v2550
    %v2554 = vunpack.c.l.s4 1966171168
    %v2555 = vunpack.c.0.s8 %v2554
    %v2556 = vlaneseq
    %v2557 = vshrl.u32 %v2556, 7
    %v2558 = vsub.s32 %v2555, %v2557
    %v2559 = vrot.slane %v2543, %v2558
    %v2561 = vunpack.c.l.s4 1966171168
    %v2562 = vunpack.c.0.s8 %v2561
    %v2563 = vlaneseq
    %v2564 = vshrl.u32 %v2563, 7
    %v2565 = vsub.s32 %v2562, %v2564
    %v2566 = vrot.slane %v2550, %v2565
    %v2568 = vunpack.c.l.s4 1966171168
    %v2569 = vunpack.c.0.s8 %v2568
    %v2570 = vlaneseq
    %v2571 = vshrl.u32 %v2570, 7
    %v2572 = vsub.s32 %v2569, %v2571
    %v2573 = vrot.slane %v2551, %v2572
    %v2575 = vunpack.c.l.s4 1966171168
    %v2576 = vunpack.c.0.s8 %v2575
    %v2577 = vlaneseq
    %v2578 = vshrl.u32 %v2577, 7
    %v2579 = vsub.s32 %v2576, %v2578
    %v2580 = vrot.slane %v2552, %v2579
    %v2581 = vcombine.high %v2559, %v2559
    %v2582 = vcombine.high %v2566, %v2566
    %v2583 = vcombine.high %v2573, %v2573
    %v2584 = vcombine.high %v2580, %v2580
    %v2585 = vcombine.low %v2521, %v2522
    %v2587 = vunpack.c.l.s4 1966171168
    %v2588 = vunpack.c.0.s8 %v2587
    %v2589 = vlaneseq
    %v2590 = vshrl.u32 %v2589, 7
    %v2591 = vsub.s32 %v2588, %v2590
    %v2592 = vrot.slane %v2585, %v2591
    %v2594 = vunpack.c.l.s4 1966171168
    %v2595 = vunpack.c.0.s8 %v2594
    %v2596 = vlaneseq
    %v2597 = vshrl.u32 %v2596, 7
    %v2598 = vsub.s32 %v2595, %v2597
    %v2599 = vrot.slane %v2592, %v2598
    %v2600 = vlaneseq
    %v2601 = vshrl.u32 %v2600, 7
    %v2602 = vsub.s32 0, %v2601
    %v2603 = vrot.slane %v2559, %v2602
    %v2604 = vlaneseq
    %v2605 = vshrl.u32 %v2604, 7
    %v2606 = vsub.s32 1, %v2605
    %v2607 = vrot.slane %v2559, %v2606
    %v2608 = vlaneseq
    %v2609 = vshrl.u32 %v2608, 7
    %v2610 = vsub.s32 0, %v2609
    %v2611 = vrot.slane %v2573, %v2610
    %v2612 = vlaneseq
    %v2613 = vshrl.u32 %v2612, 7
    %v2614 = vsub.s32 1, %v2613
    %v2615 = vrot.slane %v2573, %v2614
    %v2616 = vlaneseq
    %v2617 = vshrl.u32 %v2616, 7
    %v2618 = vsub.s32 0, %v2617
    %v2619 = vrot.slane %v2581, %v2618
    %v2620 = vlaneseq
    %v2621 = vshrl.u32 %v2620, 7
    %v2622 = vsub.s32 1, %v2621
    %v2623 = vrot.slane %v2581, %v2622
    %v2624 = vlaneseq
    %v2625 = vshrl.u32 %v2624, 7
    %v2626 = vsub.s32 0, %v2625
    %v2627 = vrot.slane %v2583, %v2626
    %v2628 = vlaneseq
    %v2629 = vshrl.u32 %v2628, 7
    %v2630 = vsub.s32 1, %v2629
    %v2631 = vrot.slane %v2583, %v2630
    %v2632 = vlaneseq
    %v2633 = vshrl.u32 %v2632, 7
    %v2634 = vsub.s32 0, %v2633
    %v2635 = vrot.slane %v2566, %v2634
    %v2636 = vlaneseq
    %v2637 = vshrl.u32 %v2636, 7
    %v2638 = vsub.s32 1, %v2637
    %v2639 = vrot.slane %v2566, %v2638
    %v2640 = vlaneseq
    %v2641 = vshrl.u32 %v2640, 7
    %v2642 = vsub.s32 0, %v2641
    %v2643 = vrot.slane %v2580, %v2642
    %v2644 = vlaneseq
    %v2645 = vshrl.u32 %v2644, 7
    %v2646 = vsub.s32 1, %v2645
    %v2647 = vrot.slane %v2580, %v2646
    %v2648 = vlaneseq
    %v2649 = vshrl.u32 %v2648, 7
    %v2650 = vsub.s32 0, %v2649
    %v2651 = vrot.slane %v2582, %v2650
    %v2652 = vlaneseq
    %v2653 = vshrl.u32 %v2652, 7
    %v2654 = vsub.s32 1, %v2653
    %v2655 = vrot.slane %v2582, %v2654
    %v2656 = vlaneseq
    %v2657 = vshrl.u32 %v2656, 7
    %v2658 = vsub.s32 0, %v2657
    %v2659 = vrot.slane %v2584, %v2658
    %v2660 = vlaneseq
    %v2661 = vshrl.u32 %v2660, 7
    %v2662 = vsub.s32 1, %v2661
    %v2663 = vrot.slane %v2584, %v2662
    %v2664 = vlaneseq
    %v2665 = vshrl.u32 %v2664, 7
    %v2666 = vsub.s32 0, %v2665
    %v2667 = vrot.slane %v2599, %v2666
    %v2668 = vlaneseq
    %v2669 = vshrl.u32 %v2668, 7
    %v2670 = vsub.s32 1, %v2669
    %v2671 = vrot.slane %v2599, %v2670
    %v2690 = vmul.f32 %v2603, %v1450
    %v2691 = vmul.f32 %v2607, %v1451
    %v2692 = vmul.f32 %v2611, %v1450
    %v2693 = vmul.f32 %v2615, %v1451
    %v2694 = vmul.f32 %v2619, %v1450
    %v2695 = vmul.f32 %v2623, %v1451
    %v2696 = vmul.f32 %v2627, %v1450
    %v2697 = vmul.f32 %v2631, %v1451
    %v2698 = vmul.f32 %v2635, %v1450
    %v2699 = vmul.f32 %v2639, %v1451
    %v2700 = vmul.f32 %v2643, %v1450
    %v2701 = vmul.f32 %v2647, %v1451
    %v2702 = vmul.f32 %v2651, %v1450
    %v2703 = vmul.f32 %v2655, %v1451
    %v2704 = vmul.f32 %v2659, %v1450
    %v2705 = vmul.f32 %v2663, %v1451
    %v2706 = vmul.f32 %v2667, %v1450
    %v2707 = vmul.f32 %v2671, %v1451
    %v2712 = vcombine.low %v2523, %v2524
    %v2713 = vcombine.high %v2523, %v2524
    %v2715 = vunpack.c.l.s4 1966171168
    %v2716 = vunpack.c.0.s8 %v2715
    %v2717 = vlaneseq
    %v2718 = vshrl.u32 %v2717, 7
    %v2719 = vsub.s32 %v2716, %v2718
    %v2720 = vrot.slane %v2712, %v2719
    %v2722 = vunpack.c.l.s4 1966171168
    %v2723 = vunpack.c.0.s8 %v2722
    %v2724 = vlaneseq
    %v2725 = vshrl.u32 %v2724, 7
    %v2726 = vsub.s32 %v2723, %v2725
    %v2727 = vrot.slane %v2713, %v2726
    %v2728 = vcombine.high %v2720, %v2720
    %v2729 = vcombine.high %v2727, %v2727
    %v2731 = vunpack.c.l.s4 1966171168
    %v2732 = vunpack.c.0.s8 %v2731
    %v2733 = vlaneseq
    %v2734 = vshrl.u32 %v2733, 7
    %v2735 = vsub.s32 %v2732, %v2734
    %v2736 = vrot.slane %v2720, %v2735
    %v2738 = vunpack.c.l.s4 1966171168
    %v2739 = vunpack.c.0.s8 %v2738
    %v2740 = vlaneseq
    %v2741 = vshrl.u32 %v2740, 7
    %v2742 = vsub.s32 %v2739, %v2741
    %v2743 = vrot.slane %v2727, %v2742
    %v2745 = vunpack.c.l.s4 1966171168
    %v2746 = vunpack.c.0.s8 %v2745
    %v2747 = vlaneseq
    %v2748 = vshrl.u32 %v2747, 7
    %v2749 = vsub.s32 %v2746, %v2748
    %v2750 = vrot.slane %v2728, %v2749
    %v2752 = vunpack.c.l.s4 1966171168
    %v2753 = vunpack.c.0.s8 %v2752
    %v2754 = vlaneseq
    %v2755 = vshrl.u32 %v2754, 7
    %v2756 = vsub.s32 %v2753, %v2755
    %v2757 = vrot.slane %v2729, %v2756
    %v2758 = vcombine.high %v2736, %v2736
    %v2759 = vcombine.high %v2743, %v2743
    %v2760 = vcombine.high %v2750, %v2750
    %v2761 = vcombine.high %v2757, %v2757
    %v2762 = vcombine.low %v2525, %v2526
    %v2764 = vunpack.c.l.s4 1966171168
    %v2765 = vunpack.c.0.s8 %v2764
    %v2766 = vlaneseq
    %v2767 = vshrl.u32 %v2766, 7
    %v2768 = vsub.s32 %v2765, %v2767
    %v2769 = vrot.slane %v2762, %v2768
    %v2771 = vunpack.c.l.s4 1966171168
    %v2772 = vunpack.c.0.s8 %v2771
    %v2773 = vlaneseq
    %v2774 = vshrl.u32 %v2773, 7
    %v2775 = vsub.s32 %v2772, %v2774
    %v2776 = vrot.slane %v2769, %v2775
    %v2777 = vlaneseq
    %v2778 = vshrl.u32 %v2777, 7
    %v2779 = vsub.s32 0, %v2778
    %v2780 = vrot.slane %v2736, %v2779
    %v2781 = vlaneseq
    %v2782 = vshrl.u32 %v2781, 7
    %v2783 = vsub.s32 1, %v2782
    %v2784 = vrot.slane %v2736, %v2783
    %v2785 = vlaneseq
    %v2786 = vshrl.u32 %v2785, 7
    %v2787 = vsub.s32 0, %v2786
    %v2788 = vrot.slane %v2750, %v2787
    %v2789 = vlaneseq
    %v2790 = vshrl.u32 %v2789, 7
    %v2791 = vsub.s32 1, %v2790
    %v2792 = vrot.slane %v2750, %v2791
    %v2793 = vlaneseq
    %v2794 = vshrl.u32 %v2793, 7
    %v2795 = vsub.s32 0, %v2794
    %v2796 = vrot.slane %v2758, %v2795
    %v2797 = vlaneseq
    %v2798 = vshrl.u32 %v2797, 7
    %v2799 = vsub.s32 1, %v2798
    %v2800 = vrot.slane %v2758, %v2799
    %v2801 = vlaneseq
    %v2802 = vshrl.u32 %v2801, 7
    %v2803 = vsub.s32 0, %v2802
    %v2804 = vrot.slane %v2760, %v2803
    %v2805 = vlaneseq
    %v2806 = vshrl.u32 %v2805, 7
    %v2807 = vsub.s32 1, %v2806
    %v2808 = vrot.slane %v2760, %v2807
    %v2809 = vlaneseq
    %v2810 = vshrl.u32 %v2809, 7
    %v2811 = vsub.s32 0, %v2810
    %v2812 = vrot.slane %v2743, %v2811
    %v2813 = vlaneseq
    %v2814 = vshrl.u32 %v2813, 7
    %v2815 = vsub.s32 1, %v2814
    %v2816 = vrot.slane %v2743, %v2815
    %v2817 = vlaneseq
    %v2818 = vshrl.u32 %v2817, 7
    %v2819 = vsub.s32 0, %v2818
    %v2820 = vrot.slane %v2757, %v2819
    %v2821 = vlaneseq
    %v2822 = vshrl.u32 %v2821, 7
    %v2823 = vsub.s32 1, %v2822
    %v2824 = vrot.slane %v2757, %v2823
    %v2825 = vlaneseq
    %v2826 = vshrl.u32 %v2825, 7
    %v2827 = vsub.s32 0, %v2826
    %v2828 = vrot.slane %v2759, %v2827
    %v2829 = vlaneseq
    %v2830 = vshrl.u32 %v2829, 7
    %v2831 = vsub.s32 1, %v2830
    %v2832 = vrot.slane %v2759, %v2831
    %v2833 = vlaneseq
    %v2834 = vshrl.u32 %v2833, 7
    %v2835 = vsub.s32 0, %v2834
    %v2836 = vrot.slane %v2761, %v2835
    %v2837 = vlaneseq
    %v2838 = vshrl.u32 %v2837, 7
    %v2839 = vsub.s32 1, %v2838
    %v2840 = vrot.slane %v2761, %v2839
    %v2841 = vlaneseq
    %v2842 = vshrl.u32 %v2841, 7
    %v2843 = vsub.s32 0, %v2842
    %v2844 = vrot.slane %v2776, %v2843
    %v2845 = vlaneseq
    %v2846 = vshrl.u32 %v2845, 7
    %v2847 = vsub.s32 1, %v2846
    %v2848 = vrot.slane %v2776, %v2847
    %v2867 = vmul.f32 %v2780, %v1452
    %v2868 = vmul.f32 %v2784, %v1453
    %v2869 = vmul.f32 %v2788, %v1452
    %v2870 = vmul.f32 %v2792, %v1453
    %v2871 = vmul.f32 %v2796, %v1452
    %v2872 = vmul.f32 %v2800, %v1453
    %v2873 = vmul.f32 %v2804, %v1452
    %v2874 = vmul.f32 %v2808, %v1453
    %v2875 = vmul.f32 %v2812, %v1452
    %v2876 = vmul.f32 %v2816, %v1453
    %v2877 = vmul.f32 %v2820, %v1452
    %v2878 = vmul.f32 %v2824, %v1453
    %v2879 = vmul.f32 %v2828, %v1452
    %v2880 = vmul.f32 %v2832, %v1453
    %v2881 = vmul.f32 %v2836, %v1452
    %v2882 = vmul.f32 %v2840, %v1453
    %v2883 = vmul.f32 %v2844, %v1452
    %v2884 = vmul.f32 %v2848, %v1453
    %v2885 = vadd.f32 %v2690, %v2867
    %v2886 = vadd.f32 %v2691, %v2868
    %v2887 = vadd.f32 %v2692, %v2869
    %v2888 = vadd.f32 %v2693, %v2870
    %v2889 = vadd.f32 %v2694, %v2871
    %v2890 = vadd.f32 %v2695, %v2872
    %v2891 = vadd.f32 %v2696, %v2873
    %v2892 = vadd.f32 %v2697, %v2874
    %v2893 = vadd.f32 %v2698, %v2875
    %v2894 = vadd.f32 %v2699, %v2876
    %v2895 = vadd.f32 %v2700, %v2877
    %v2896 = vadd.f32 %v2701, %v2878
    %v2897 = vadd.f32 %v2702, %v2879
    %v2898 = vadd.f32 %v2703, %v2880
    %v2899 = vadd.f32 %v2704, %v2881
    %v2900 = vadd.f32 %v2705, %v2882
    %v2901 = vadd.f32 %v2706, %v2883
    %v2902 = vadd.f32 %v2707, %v2884
    %v2907 = vcombine.low %v2527, %v2528
    %v2908 = vcombine.high %v2527, %v2528
    %v2910 = vunpack.c.l.s4 1966171168
    %v2911 = vunpack.c.0.s8 %v2910
    %v2912 = vlaneseq
    %v2913 = vshrl.u32 %v2912, 7
    %v2914 = vsub.s32 %v2911, %v2913
    %v2915 = vrot.slane %v2907, %v2914
    %v2917 = vunpack.c.l.s4 1966171168
    %v2918 = vunpack.c.0.s8 %v2917
    %v2919 = vlaneseq
    %v2920 = vshrl.u32 %v2919, 7
    %v2921 = vsub.s32 %v2918, %v2920
    %v2922 = vrot.slane %v2908, %v2921
    %v2923 = vcombine.high %v2915, %v2915
    %v2924 = vcombine.high %v2922, %v2922
    %v2926 = vunpack.c.l.s4 1966171168
    %v2927 = vunpack.c.0.s8 %v2926
    %v2928 = vlaneseq
    %v2929 = vshrl.u32 %v2928, 7
    %v2930 = vsub.s32 %v2927, %v2929
    %v2931 = vrot.slane %v2915, %v2930
    %v2933 = vunpack.c.l.s4 1966171168
    %v2934 = vunpack.c.0.s8 %v2933
    %v2935 = vlaneseq
    %v2936 = vshrl.u32 %v2935, 7
    %v2937 = vsub.s32 %v2934, %v2936
    %v2938 = vrot.slane %v2922, %v2937
    %v2940 = vunpack.c.l.s4 1966171168
    %v2941 = vunpack.c.0.s8 %v2940
    %v2942 = vlaneseq
    %v2943 = vshrl.u32 %v2942, 7
    %v2944 = vsub.s32 %v2941, %v2943
    %v2945 = vrot.slane %v2923, %v2944
    %v2947 = vunpack.c.l.s4 1966171168
    %v2948 = vunpack.c.0.s8 %v2947
    %v2949 = vlaneseq
    %v2950 = vshrl.u32 %v2949, 7
    %v2951 = vsub.s32 %v2948, %v2950
    %v2952 = vrot.slane %v2924, %v2951
    %v2953 = vcombine.high %v2931, %v2931
    %v2954 = vcombine.high %v2938, %v2938
    %v2955 = vcombine.high %v2945, %v2945
    %v2956 = vcombine.high %v2952, %v2952
    %v2957 = vcombine.low %v2529, %v2530
    %v2959 = vunpack.c.l.s4 1966171168
    %v2960 = vunpack.c.0.s8 %v2959
    %v2961 = vlaneseq
    %v2962 = vshrl.u32 %v2961, 7
    %v2963 = vsub.s32 %v2960, %v2962
    %v2964 = vrot.slane %v2957, %v2963
    %v2966 = vunpack.c.l.s4 1966171168
    %v2967 = vunpack.c.0.s8 %v2966
    %v2968 = vlaneseq
    %v2969 = vshrl.u32 %v2968, 7
    %v2970 = vsub.s32 %v2967, %v2969
    %v2971 = vrot.slane %v2964, %v2970
    %v2972 = vlaneseq
    %v2973 = vshrl.u32 %v2972, 7
    %v2974 = vsub.s32 0, %v2973
    %v2975 = vrot.slane %v2931, %v2974
    %v2976 = vlaneseq
    %v2977 = vshrl.u32 %v2976, 7
    %v2978 = vsub.s32 1, %v2977
    %v2979 = vrot.slane %v2931, %v2978
    %v2980 = vlaneseq
    %v2981 = vshrl.u32 %v2980, 7
    %v2982 = vsub.s32 0, %v2981
    %v2983 = vrot.slane %v2945, %v2982
    %v2984 = vlaneseq
    %v2985 = vshrl.u32 %v2984, 7
    %v2986 = vsub.s32 1, %v2985
    %v2987 = vrot.slane %v2945, %v2986
    %v2988 = vlaneseq
    %v2989 = vshrl.u32 %v2988, 7
    %v2990 = vsub.s32 0, %v2989
    %v2991 = vrot.slane %v2953, %v2990
    %v2992 = vlaneseq
    %v2993 = vshrl.u32 %v2992, 7
    %v2994 = vsub.s32 1, %v2993
    %v2995 = vrot.slane %v2953, %v2994
    %v2996 = vlaneseq
    %v2997 = vshrl.u32 %v2996, 7
    %v2998 = vsub.s32 0, %v2997
    %v2999 = vrot.slane %v2955, %v2998
    %v3000 = vlaneseq
    %v3001 = vshrl.u32 %v3000, 7
    %v3002 = vsub.s32 1, %v3001
    %v3003 = vrot.slane %v2955, %v3002
    %v3004 = vlaneseq
    %v3005 = vshrl.u32 %v3004, 7
    %v3006 = vsub.s32 0, %v3005
    %v3007 = vrot.slane %v2938, %v3006
    %v3008 = vlaneseq
    %v3009 = vshrl.u32 %v3008, 7
    %v3010 = vsub.s32 1, %v3009
    %v3011 = vrot.slane %v2938, %v3010
    %v3012 = vlaneseq
    %v3013 = vshrl.u32 %v3012, 7
    %v3014 = vsub.s32 0, %v3013
    %v3015 = vrot.slane %v2952, %v3014
    %v3016 = vlaneseq
    %v3017 = vshrl.u32 %v3016, 7
    %v3018 = vsub.s32 1, %v3017
    %v3019 = vrot.slane %v2952, %v3018
    %v3020 = vlaneseq
    %v3021 = vshrl.u32 %v3020, 7
    %v3022 = vsub.s32 0, %v3021
    %v3023 = vrot.slane %v2954, %v3022
    %v3024 = vlaneseq
    %v3025 = vshrl.u32 %v3024, 7
    %v3026 = vsub.s32 1, %v3025
    %v3027 = vrot.slane %v2954, %v3026
    %v3028 = vlaneseq
    %v3029 = vshrl.u32 %v3028, 7
    %v3030 = vsub.s32 0, %v3029
    %v3031 = vrot.slane %v2956, %v3030
    %v3032 = vlaneseq
    %v3033 = vshrl.u32 %v3032, 7
    %v3034 = vsub.s32 1, %v3033
    %v3035 = vrot.slane %v2956, %v3034
    %v3036 = vlaneseq
    %v3037 = vshrl.u32 %v3036, 7
    %v3038 = vsub.s32 0, %v3037
    %v3039 = vrot.slane %v2971, %v3038
    %v3040 = vlaneseq
    %v3041 = vshrl.u32 %v3040, 7
    %v3042 = vsub.s32 1, %v3041
    %v3043 = vrot.slane %v2971, %v3042
    %v3062 = vmul.f32 %v2975, %v1454
    %v3063 = vmul.f32 %v2979, %v1455
    %v3064 = vmul.f32 %v2983, %v1454
    %v3065 = vmul.f32 %v2987, %v1455
    %v3066 = vmul.f32 %v2991, %v1454
    %v3067 = vmul.f32 %v2995, %v1455
    %v3068 = vmul.f32 %v2999, %v1454
    %v3069 = vmul.f32 %v3003, %v1455
    %v3070 = vmul.f32 %v3007, %v1454
    %v3071 = vmul.f32 %v3011, %v1455
    %v3072 = vmul.f32 %v3015, %v1454
    %v3073 = vmul.f32 %v3019, %v1455
    %v3074 = vmul.f32 %v3023, %v1454
    %v3075 = vmul.f32 %v3027, %v1455
    %v3076 = vmul.f32 %v3031, %v1454
    %v3077 = vmul.f32 %v3035, %v1455
    %v3078 = vmul.f32 %v3039, %v1454
    %v3079 = vmul.f32 %v3043, %v1455
    %v3080 = vadd.f32 %v2885, %v3062
    %v3081 = vadd.f32 %v2886, %v3063
    %v3082 = vadd.f32 %v2887, %v3064
    %v3083 = vadd.f32 %v2888, %v3065
    %v3084 = vadd.f32 %v2889, %v3066
    %v3085 = vadd.f32 %v2890, %v3067
    %v3086 = vadd.f32 %v2891, %v3068
    %v3087 = vadd.f32 %v2892, %v3069
    %v3088 = vadd.f32 %v2893, %v3070
    %v3089 = vadd.f32 %v2894, %v3071
    %v3090 = vadd.f32 %v2895, %v3072
    %v3091 = vadd.f32 %v2896, %v3073
    %v3092 = vadd.f32 %v2897, %v3074
    %v3093 = vadd.f32 %v2898, %v3075
    %v3094 = vadd.f32 %v2899, %v3076
    %v3095 = vadd.f32 %v2900, %v3077
    %v3096 = vadd.f32 %v2901, %v3078
    %v3097 = vadd.f32 %v2902, %v3079
    %v3098 = vmul.f32 %v3080, %v2449
    %v3099 = vmul.f32 %v3081, %v2451
    %v3100 = vmul.f32 %v3082, %v2455
    %v3101 = vmul.f32 %v3083, %v2457
    %v3102 = vmul.f32 %v3084, %v2461
    %v3103 = vmul.f32 %v3085, %v2463
    %v3104 = vmul.f32 %v3086, %v2449
    %v3105 = vmul.f32 %v3087, %v2451
    %v3106 = vmul.f32 %v3088, %v2455
    %v3107 = vmul.f32 %v3089, %v2457
    %v3108 = vmul.f32 %v3090, %v2461
    %v3109 = vmul.f32 %v3091, %v2463
    %v3110 = vmul.f32 %v3092, %v2449
    %v3111 = vmul.f32 %v3093, %v2451
    %v3112 = vmul.f32 %v3094, %v2455
    %v3113 = vmul.f32 %v3095, %v2457
    %v3114 = vmul.f32 %v3096, %v2461
    %v3115 = vmul.f32 %v3097, %v2463
    %v3116 = vadd.f32 %v3098, %v3100
    %v3117 = vadd.f32 %v3116, %v3102
    %v3118 = vrot.slane %v3117, 4
    %v3119 = vadd.f32 %v3117, %v3118
    %v3120 = vrot.slane %v3119, 2
    %v3121 = vadd.f32 %v3119, %v3120
    %v3122 = vrot.slane %v3121, 1
    %v3123 = vadd.f32 %v3121, %v3122
    %v3124 = vadd.f32 %v3099, %v3101
    %v3125 = vadd.f32 %v3124, %v3103
    %v3126 = vrot.slane %v3125, 4
    %v3127 = vadd.f32 %v3125, %v3126
    %v3128 = vrot.slane %v3127, 2
    %v3129 = vadd.f32 %v3127, %v3128
    %v3130 = vrot.slane %v3129, 1
    %v3131 = vadd.f32 %v3129, %v3130
    %v3132 = vadd.f32 %v3104, %v3106
    %v3133 = vadd.f32 %v3132, %v3108
    %v3134 = vrot.slane %v3133, 4
    %v3135 = vadd.f32 %v3133, %v3134
    %v3136 = vrot.slane %v3135, 2
    %v3137 = vadd.f32 %v3135, %v3136
    %v3138 = vrot.slane %v3137, 1
    %v3139 = vadd.f32 %v3137, %v3138
    %v3140 = vadd.f32 %v3105, %v3107
    %v3141 = vadd.f32 %v3140, %v3109
    %v3142 = vrot.slane %v3141, 4
    %v3143 = vadd.f32 %v3141, %v3142
    %v3144 = vrot.slane %v3143, 2
    %v3145 = vadd.f32 %v3143, %v3144
    %v3146 = vrot.slane %v3145, 1
    %v3147 = vadd.f32 %v3145, %v3146
    %v3148 = vadd.f32 %v3110, %v3112
    %v3149 = vadd.f32 %v3148, %v3114
    %v3150 = vrot.slane %v3149, 4
    %v3151 = vadd.f32 %v3149, %v3150
    %v3152 = vrot.slane %v3151, 2
    %v3153 = vadd.f32 %v3151, %v3152
    %v3154 = vrot.slane %v3153, 1
    %v3155 = vadd.f32 %v3153, %v3154
    %v3156 = vadd.f32 %v3111, %v3113
    %v3157 = vadd.f32 %v3156, %v3115
    %v3158 = vrot.slane %v3157, 4
    %v3159 = vadd.f32 %v3157, %v3158
    %v3160 = vrot.slane %v3159, 2
    %v3161 = vadd.f32 %v3159, %v3160
    %v3162 = vrot.slane %v3161, 1
    %v3163 = vadd.f32 %v3161, %v3162
    %v3164 = vadd.f32 %v1960, %v3123
    %v3165 = vadd.f32 %v1966, %v3131
    %v3166 = vadd.f32 %v1972, %v3139
    %v3167 = vadd.f32 %v1978, %v3147
    %v3168 = vadd.f32 %v1984, %v3155
    %v3169 = vadd.f32 %v1990, %v3163
    %v3170 = vmul.f32 %v3080, %v2467
    %v3171 = vmul.f32 %v3081, %v2469
    %v3172 = vmul.f32 %v3082, %v2473
    %v3173 = vmul.f32 %v3083, %v2475
    %v3174 = vmul.f32 %v3084, %v2479
    %v3175 = vmul.f32 %v3085, %v2481
    %v3176 = vmul.f32 %v3086, %v2467
    %v3177 = vmul.f32 %v3087, %v2469
    %v3178 = vmul.f32 %v3088, %v2473
    %v3179 = vmul.f32 %v3089, %v2475
    %v3180 = vmul.f32 %v3090, %v2479
    %v3181 = vmul.f32 %v3091, %v2481
    %v3182 = vmul.f32 %v3092, %v2467
    %v3183 = vmul.f32 %v3093, %v2469
    %v3184 = vmul.f32 %v3094, %v2473
    %v3185 = vmul.f32 %v3095, %v2475
    %v3186 = vmul.f32 %v3096, %v2479
    %v3187 = vmul.f32 %v3097, %v2481
    %v3188 = vadd.f32 %v3170, %v3172
    %v3189 = vadd.f32 %v3188, %v3174
    %v3190 = vrot.slane %v3189, 4
    %v3191 = vadd.f32 %v3189, %v3190
    %v3192 = vrot.slane %v3191, 2
    %v3193 = vadd.f32 %v3191, %v3192
    %v3194 = vrot.slane %v3193, 1
    %v3195 = vadd.f32 %v3193, %v3194
    %v3196 = vadd.f32 %v3171, %v3173
    %v3197 = vadd.f32 %v3196, %v3175
    %v3198 = vrot.slane %v3197, 4
    %v3199 = vadd.f32 %v3197, %v3198
    %v3200 = vrot.slane %v3199, 2
    %v3201 = vadd.f32 %v3199, %v3200
    %v3202 = vrot.slane %v3201, 1
    %v3203 = vadd.f32 %v3201, %v3202
    %v3204 = vadd.f32 %v3176, %v3178
    %v3205 = vadd.f32 %v3204, %v3180
    %v3206 = vrot.slane %v3205, 4
    %v3207 = vadd.f32 %v3205, %v3206
    %v3208 = vrot.slane %v3207, 2
    %v3209 = vadd.f32 %v3207, %v3208
    %v3210 = vrot.slane %v3209, 1
    %v3211 = vadd.f32 %v3209, %v3210
    %v3212 = vadd.f32 %v3177, %v3179
    %v3213 = vadd.f32 %v3212, %v3181
    %v3214 = vrot.slane %v3213, 4
    %v3215 = vadd.f32 %v3213, %v3214
    %v3216 = vrot.slane %v3215, 2
    %v3217 = vadd.f32 %v3215, %v3216
    %v3218 = vrot.slane %v3217, 1
    %v3219 = vadd.f32 %v3217, %v3218
    %v3220 = vadd.f32 %v3182, %v3184
    %v3221 = vadd.f32 %v3220, %v3186
    %v3222 = vrot.slane %v3221, 4
    %v3223 = vadd.f32 %v3221, %v3222
    %v3224 = vrot.slane %v3223, 2
    %v3225 = vadd.f32 %v3223, %v3224
    %v3226 = vrot.slane %v3225, 1
    %v3227 = vadd.f32 %v3225, %v3226
    %v3228 = vadd.f32 %v3183, %v3185
    %v3229 = vadd.f32 %v3228, %v3187
    %v3230 = vrot.slane %v3229, 4
    %v3231 = vadd.f32 %v3229, %v3230
    %v3232 = vrot.slane %v3231, 2
    %v3233 = vadd.f32 %v3231, %v3232
    %v3234 = vrot.slane %v3233, 1
    %v3235 = vadd.f32 %v3233, %v3234
    %v3236 = vadd.f32 %v2002, %v3195
    %v3237 = vadd.f32 %v2008, %v3203
    %v3238 = vadd.f32 %v2014, %v3211
    %v3239 = vadd.f32 %v2020, %v3219
    %v3240 = vadd.f32 %v2026, %v3227
    %v3241 = vadd.f32 %v2032, %v3235
    %v3242 = vmul.f32 %v3080, %v2485
    %v3243 = vmul.f32 %v3081, %v2487
    %v3244 = vmul.f32 %v3082, %v2491
    %v3245 = vmul.f32 %v3083, %v2493
    %v3246 = vmul.f32 %v3084, %v2497
    %v3247 = vmul.f32 %v3085, %v2499
    %v3248 = vmul.f32 %v3086, %v2485
    %v3249 = vmul.f32 %v3087, %v2487
    %v3250 = vmul.f32 %v3088, %v2491
    %v3251 = vmul.f32 %v3089, %v2493
    %v3252 = vmul.f32 %v3090, %v2497
    %v3253 = vmul.f32 %v3091, %v2499
    %v3254 = vmul.f32 %v3092, %v2485
    %v3255 = vmul.f32 %v3093, %v2487
    %v3256 = vmul.f32 %v3094, %v2491
    %v3257 = vmul.f32 %v3095, %v2493
    %v3258 = vmul.f32 %v3096, %v2497
    %v3259 = vmul.f32 %v3097, %v2499
    %v3260 = vadd.f32 %v3242, %v3244
    %v3261 = vadd.f32 %v3260, %v3246
    %v3262 = vrot.slane %v3261, 4
    %v3263 = vadd.f32 %v3261, %v3262
    %v3264 = vrot.slane %v3263, 2
    %v3265 = vadd.f32 %v3263, %v3264
    %v3266 = vrot.slane %v3265, 1
    %v3267 = vadd.f32 %v3265, %v3266
    %v3268 = vadd.f32 %v3243, %v3245
    %v3269 = vadd.f32 %v3268, %v3247
    %v3270 = vrot.slane %v3269, 4
    %v3271 = vadd.f32 %v3269, %v3270
    %v3272 = vrot.slane %v3271, 2
    %v3273 = vadd.f32 %v3271, %v3272
    %v3274 = vrot.slane %v3273, 1
    %v3275 = vadd.f32 %v3273, %v3274
    %v3276 = vadd.f32 %v3248, %v3250
    %v3277 = vadd.f32 %v3276, %v3252
    %v3278 = vrot.slane %v3277, 4
    %v3279 = vadd.f32 %v3277, %v3278
    %v3280 = vrot.slane %v3279, 2
    %v3281 = vadd.f32 %v3279, %v3280
    %v3282 = vrot.slane %v3281, 1
    %v3283 = vadd.f32 %v3281, %v3282
    %v3284 = vadd.f32 %v3249, %v3251
    %v3285 = vadd.f32 %v3284, %v3253
    %v3286 = vrot.slane %v3285, 4
    %v3287 = vadd.f32 %v3285, %v3286
    %v3288 = vrot.slane %v3287, 2
    %v3289 = vadd.f32 %v3287, %v3288
    %v3290 = vrot.slane %v3289, 1
    %v3291 = vadd.f32 %v3289, %v3290
    %v3292 = vadd.f32 %v3254, %v3256
    %v3293 = vadd.f32 %v3292, %v3258
    %v3294 = vrot.slane %v3293, 4
    %v3295 = vadd.f32 %v3293, %v3294
    %v3296 = vrot.slane %v3295, 2
    %v3297 = vadd.f32 %v3295, %v3296
    %v3298 = vrot.slane %v3297, 1
    %v3299 = vadd.f32 %v3297, %v3298
    %v3300 = vadd.f32 %v3255, %v3257
    %v3301 = vadd.f32 %v3300, %v3259
    %v3302 = vrot.slane %v3301, 4
    %v3303 = vadd.f32 %v3301, %v3302
    %v3304 = vrot.slane %v3303, 2
    %v3305 = vadd.f32 %v3303, %v3304
    %v3306 = vrot.slane %v3305, 1
    %v3307 = vadd.f32 %v3305, %v3306
    %v3308 = vadd.f32 %v2044, %v3267
    %v3309 = vadd.f32 %v2050, %v3275
    %v3310 = vadd.f32 %v2056, %v3283
    %v3311 = vadd.f32 %v2062, %v3291
    %v3312 = vadd.f32 %v2068, %v3299
    %v3313 = vadd.f32 %v2074, %v3307
    %v3314 = vmul.f32 %v3080, %v2503
    %v3315 = vmul.f32 %v3081, %v2505
    %v3316 = vmul.f32 %v3082, %v2509
    %v3317 = vmul.f32 %v3083, %v2511
    %v3318 = vmul.f32 %v3084, %v2515
    %v3319 = vmul.f32 %v3085, %v2517
    %v3320 = vmul.f32 %v3086, %v2503
    %v3321 = vmul.f32 %v3087, %v2505
    %v3322 = vmul.f32 %v3088, %v2509
    %v3323 = vmul.f32 %v3089, %v2511
    %v3324 = vmul.f32 %v3090, %v2515
    %v3325 = vmul.f32 %v3091, %v2517
    %v3326 = vmul.f32 %v3092, %v2503
    %v3327 = vmul.f32 %v3093, %v2505
    %v3328 = vmul.f32 %v3094, %v2509
    %v3329 = vmul.f32 %v3095, %v2511
    %v3330 = vmul.f32 %v3096, %v2515
    %v3331 = vmul.f32 %v3097, %v2517
    %v3332 = vadd.f32 %v3314, %v3316
    %v3333 = vadd.f32 %v3332, %v3318
    %v3334 = vrot.slane %v3333, 4
    %v3335 = vadd.f32 %v3333, %v3334
    %v3336 = vrot.slane %v3335, 2
    %v3337 = vadd.f32 %v3335, %v3336
    %v3338 = vrot.slane %v3337, 1
    %v3339 = vadd.f32 %v3337, %v3338
    %v3340 = vadd.f32 %v3315, %v3317
    %v3341 = vadd.f32 %v3340, %v3319
    %v3342 = vrot.slane %v3341, 4
    %v3343 = vadd.f32 %v3341, %v3342
    %v3344 = vrot.slane %v3343, 2
    %v3345 = vadd.f32 %v3343, %v3344
    %v3346 = vrot.slane %v3345, 1
    %v3347 = vadd.f32 %v3345, %v3346
    %v3348 = vadd.f32 %v3320, %v3322
    %v3349 = vadd.f32 %v3348, %v3324
    %v3350 = vrot.slane %v3349, 4
    %v3351 = vadd.f32 %v3349, %v3350
    %v3352 = vrot.slane %v3351, 2
    %v3353 = vadd.f32 %v3351, %v3352
    %v3354 = vrot.slane %v3353, 1
    %v3355 = vadd.f32 %v3353, %v3354
    %v3356 = vadd.f32 %v3321, %v3323
    %v3357 = vadd.f32 %v3356, %v3325
    %v3358 = vrot.slane %v3357, 4
    %v3359 = vadd.f32 %v3357, %v3358
    %v3360 = vrot.slane %v3359, 2
    %v3361 = vadd.f32 %v3359, %v3360
    %v3362 = vrot.slane %v3361, 1
    %v3363 = vadd.f32 %v3361, %v3362
    %v3364 = vadd.f32 %v3326, %v3328
    %v3365 = vadd.f32 %v3364, %v3330
    %v3366 = vrot.slane %v3365, 4
    %v3367 = vadd.f32 %v3365, %v3366
    %v3368 = vrot.slane %v3367, 2
    %v3369 = vadd.f32 %v3367, %v3368
    %v3370 = vrot.slane %v3369, 1
    %v3371 = vadd.f32 %v3369, %v3370
    %v3372 = vadd.f32 %v3327, %v3329
    %v3373 = vadd.f32 %v3372, %v3331
    %v3374 = vrot.slane %v3373, 4
    %v3375 = vadd.f32 %v3373, %v3374
    %v3376 = vrot.slane %v3375, 2
    %v3377 = vadd.f32 %v3375, %v3376
    %v3378 = vrot.slane %v3377, 1
    %v3379 = vadd.f32 %v3377, %v3378
    %v3380 = vadd.f32 %v2086, %v3339
    %v3381 = vadd.f32 %v2092, %v3347
    %v3382 = vadd.f32 %v2098, %v3355
    %v3383 = vadd.f32 %v2104, %v3363
    %v3384 = vadd.f32 %v2110, %v3371
    %v3385 = vadd.f32 %v2116, %v3379
    %vm3392 = vcmask 1045509
    %v3393 = vsel %vm3392, %v3166, %v3164
    %vm3394 = vcmask 1046534
    %v3395 = vsel %vm3394, %v3168, %v3393
    %v3396 = vsel %vm3392, %v3167, %v3165
    %v3397 = vsel %vm3394, %v3169, %v3396
    %vm3406 = vcmask 1041409
    %v3407 = vsel %vm3406, %v3240, %v3238
    %v3408 = vsel %vm3406, %v3241, %v3239
    %vm3419 = vcmask 1043459
    %v3420 = vsel %vm3419, %v3310, %v3308
    %vm3421 = vcmask 1044484
    %v3422 = vsel %vm3421, %v3312, %v3420
    %v3423 = vsel %vm3419, %v3311, %v3309
    %v3424 = vsel %vm3421, %v3313, %v3423
    %v3433 = vsel %vm3394, %v3382, %v3380
    %vm3434 = vcmask 1047559
    %v3435 = vsel %vm3434, %v3384, %v3433
    %v3436 = vsel %vm3394, %v3383, %v3381
    %v3437 = vsel %vm3434, %v3385, %v3436
    %vm3440 = vcmask 1040384
    %v3441 = vsel %vm3440, %v1516, %v1532
    %v3442 = vsel %vm3440, %v1517, %v1533
    %vm3443 = vcmask 1041408
    %v3444 = vsel %vm3443, %v3441, %v1548
    %v3445 = vsel %vm3443, %v3442, %v1549
    %vm3446 = vcmask 1042432
    %v3447 = vsel %vm3446, %v3444, %v1564
    %v3448 = vsel %vm3446, %v3445, %v1565
    %vm3449 = vcmask 1043456
    %v3450 = vsel %vm3449, %v3447, %v3395
    %v3451 = vsel %vm3449, %v3448, %v3397
    %vm3452 = vcmask 1046528
    %v3453 = vsel %vm3452, %v3450, %v3236
    %v3454 = vsel %vm3452, %v3451, %v3237
    %v3455 = vsel %vm3443, %v3407, %v3422
    %v3456 = vsel %vm3443, %v3408, %v3424
    %vm3457 = vcmask 1044480
    %v3458 = vsel %vm3457, %v3455, %v3435
    %v3459 = vsel %vm3457, %v3456, %v3437
    %v3460 = vld [vmem:[%s7] sm:$0x3]
    %v3462 = vlaneseq
    %v3463 = vshrl.u32 %v3462, 7
    %v3464 = vsub.s32 0, %v3463
    %v3465 = vrot.slane %v3460, %v3464
    %v3466 = vlaneseq
    %v3467 = vshrl.u32 %v3466, 7
    %v3468 = vsub.s32 1, %v3467
    %v3469 = vrot.slane %v3460, %v3468
    %v3472 = vmul.f32 %v3453, %v3465
    %v3473 = vmul.f32 %v3454, %v3469
    %v3474 = vmul.f32 %v3458, %v3465
    %v3475 = vmul.f32 %v3459, %v3469
    %v3476 = vld [vmem:[%s8] sm:$0xff]
    %v3477 = vld [vmem:[%s8 + $0x8] sm:$0xff]
    %v3478 = vld [vmem:[%s8 + $0x10] sm:$0xff]
    %v3479 = vld [vmem:[%s8 + $0x18] sm:$0xff]
    %v3480 = vld [vmem:[%s8 + $0x20] sm:$0xff]
    %v3481 = vld [vmem:[%s8 + $0x28] sm:$0xff]
    %v3482 = vld [vmem:[%s8 + $0x30] sm:$0xff]
    %v3483 = vld [vmem:[%s8 + $0x38] sm:$0xff]
    %v3484 = vld [vmem:[%s8 + $0x40] sm:$0xff]
    %v3485 = vld [vmem:[%s8 + $0x48] sm:$0xff]
    %v3486 = vld [vmem:[%s8 + $0x50] sm:$0xff]
    %v3487 = vld [vmem:[%s8 + $0x58] sm:$0xff]
    %v3488 = vld [vmem:[%s8 + $0x60] sm:$0xff]
    %v3489 = vld [vmem:[%s8 + $0x68] sm:$0xff]
    %v3490 = vld [vmem:[%s8 + $0x70] sm:$0xff]
    %v3491 = vld [vmem:[%s8 + $0x78] sm:$0xff]
    %v3492 = vld [vmem:[%s8 + $0x80] sm:$0xff]
    %v3493 = vld [vmem:[%s8 + $0x88] sm:$0xff]
    %v3494 = vld [vmem:[%s8 + $0x90] sm:$0xff]
    %v3495 = vld [vmem:[%s8 + $0x98] sm:$0xff]
    %v3496 = vld [vmem:[%s8 + $0xa0] sm:$0xff]
    %v3497 = vld [vmem:[%s8 + $0xa8] sm:$0xff]
    %v3498 = vld [vmem:[%s8 + $0xb0] sm:$0xff]
    %v3499 = vld [vmem:[%s8 + $0xb8] sm:$0xff]
    %v3500 = vld [vmem:[%s8 + $0xc0] sm:$0xff]
    %v3501 = vld [vmem:[%s8 + $0xc8] sm:$0xff]
    %v3502 = vld [vmem:[%s8 + $0xd0] sm:$0xff]
    %v3503 = vld [vmem:[%s8 + $0xd8] sm:$0xff]
    %v3504 = vld [vmem:[%s8 + $0xe0] sm:$0xff]
    %v3505 = vld [vmem:[%s8 + $0xe8] sm:$0xff]
    %v3506 = vld [vmem:[%s8 + $0xf0] sm:$0xff]
    %v3507 = vld [vmem:[%s8 + $0xf8] sm:$0xff]
    %3508 = vmatprep.subr.mxu0 0.0
    %3509 = vmatpush1.msra.mxu0 %v3476
    %3510 = vmatprep.subr.mxu0 0.0
    %3511 = vmatpush1.msra.mxu0 %v3477
    %3512 = vmatprep.subr.mxu0 0.0
    %3513 = vmatpush1.msra.mxu0 %v3478
    %3514 = vmatprep.subr.mxu0 0.0
    %3515 = vmatpush1.msra.mxu0 %v3479
    %3516 = vmatprep.subr.mxu0 0.0
    %3517 = vmatpush1.msra.mxu0 %v3480
    %3518 = vmatprep.subr.mxu0 0.0
    %3519 = vmatpush1.msra.mxu0 %v3481
    %3520 = vmatprep.subr.mxu0 0.0
    %3521 = vmatpush1.msra.mxu0 %v3482
    %3522 = vmatprep.subr.mxu0 0.0
    %3523 = vmatpush1.msra.mxu0 %v3483
    %3524 = vmatprep.subr.mxu0 0.0
    %3525 = vmatpush1.msra.mxu0 %v3484
    %3526 = vmatprep.subr.mxu0 0.0
    %3527 = vmatpush1.msra.mxu0 %v3485
    %3528 = vmatprep.subr.mxu0 0.0
    %3529 = vmatpush1.msra.mxu0 %v3486
    %3530 = vmatprep.subr.mxu0 0.0
    %3531 = vmatpush1.msra.mxu0 %v3487
    %3532 = vmatprep.subr.mxu0 0.0
    %3533 = vmatpush1.msra.mxu0 %v3488
    %3534 = vmatprep.subr.mxu0 0.0
    %3535 = vmatpush1.msra.mxu0 %v3489
    %3536 = vmatprep.subr.mxu0 0.0
    %3537 = vmatpush1.msra.mxu0 %v3490
    %3538 = vmatprep.subr.mxu0 0.0
    %3539 = vmatpush1.msra.mxu0 %v3491
    %3540 = vmatprep.subr.mxu0 0.0
    %3541 = vmatpush1.msra.mxu0 %v3492
    %3542 = vmatprep.subr.mxu0 0.0
    %3543 = vmatpush1.msra.mxu0 %v3493
    %3544 = vmatprep.subr.mxu0 0.0
    %3545 = vmatpush1.msra.mxu0 %v3494
    %3546 = vmatprep.subr.mxu0 0.0
    %3547 = vmatpush1.msra.mxu0 %v3495
    %3548 = vmatprep.subr.mxu0 0.0
    %3549 = vmatpush1.msra.mxu0 %v3496
    %3550 = vmatprep.subr.mxu0 0.0
    %3551 = vmatpush1.msra.mxu0 %v3497
    %3552 = vmatprep.subr.mxu0 0.0
    %3553 = vmatpush1.msra.mxu0 %v3498
    %3554 = vmatprep.subr.mxu0 0.0
    %3555 = vmatpush1.msra.mxu0 %v3499
    %3556 = vmatprep.subr.mxu0 0.0
    %3557 = vmatpush1.msra.mxu0 %v3500
    %3558 = vmatprep.subr.mxu0 0.0
    %3559 = vmatpush1.msra.mxu0 %v3501
    %3560 = vmatprep.subr.mxu0 0.0
    %3561 = vmatpush1.msra.mxu0 %v3502
    %3562 = vmatprep.subr.mxu0 0.0
    %3563 = vmatpush1.msra.mxu0 %v3503
    %3564 = vmatprep.subr.mxu0 0.0
    %3565 = vmatpush1.msra.mxu0 %v3504
    %3566 = vmatprep.subr.mxu0 0.0
    %3567 = vmatpush1.msra.mxu0 %v3505
    %3568 = vmatprep.subr.mxu0 0.0
    %3569 = vmatpush1.msra.mxu0 %v3506
    %3570 = vmatprep.subr.mxu0 0.0
    %3571 = vmatpush1.msra.mxu0 %v3507
    %3572 = vmatprep.mubr.f32.mxu0 %v3473
    %3573 = vmatmul.mubr.f32.gmra.mrb[0].mxu0 %v3472
    %v3574 = vpop.f32.mrb[0].mxu0
    %v3575 = vadd.f32 0.0, %v3574
    %v3576 = vpop.f32.mrb[0].mxu0
    %3577 = vmatprep.mubr.f32.mxu0 %v3475
    %3578 = vmatmul.mubr.f32.gmra.mrb[0].mxu0 %v3474
    %v3579 = vpop.f32.mrb[0].mxu0
    %v3580 = vadd.f32 0.0, %v3579
    %v3581 = vpop.f32.mrb[0].mxu0
    %3582 = vdwg.mxu0
    %vm3583 = vcmask 261120
    %3584 = vst.msk [vmem:[#allocation2] sm:$0xff] %vm3583, %v3575
    %3585 = vst.msk [vmem:[#allocation2 + $0x8] sm:$0xff] %vm3583, %v3580
    // Predicated region
    $region74: #{tpu_custom_call.1} parent=1 // pred_check
      _
    $region75: #{tpu_custom_call.1} parent=1 // pred_check_branch
      %3587 = sbr.rel (0) target = $region77
    $region76: #{tpu_custom_call.1} parent=1 // pred_region
      %s3589 = ssub.s32 256, 256
      %3590 = vsyncadd [#allocation3], %s3589
      %s3591 = sshll.u32 [#allocation2], 4
      %s3592 = int_to_ptr.vmem [resolvable:$true] %s3591
      %3597 = dma.vmem_to_hbm [thread:$0]  %s3592, 256, %s18, [#allocation3], 128, 128, 8
    $region77: #{tpu_custom_call.1} parent=1 // pred_fallthru
      _
    // Predicated region
    $region78: #{tpu_custom_call.1} parent=1 // pred_check
      _
    $region79: #{tpu_custom_call.1} parent=1 // pred_check_branch
      %3599 = sbr.rel (0) target = $region81
    $region80: #{tpu_custom_call.1} parent=1 // pred_region
      %3600 = dma.done [#allocation3], 256
    $region81: #{tpu_custom_call.1} parent=1 // pred_fallthru
      _
    %3601 = vsyncpa [#allocation3], 1

</llo_original>
